<compile_context>
chip_gen: v5e
topology: v5e:2x2
jax: 0.10.0
libtpu: 0.0.40
codegen_flags: <defaults>
</compile_context>

<pallas_src>
import functools
import math

import jax
import jax.numpy as jnp
from jax.experimental import pallas as pl
from jax.experimental.pallas import tpu as pltpu


# ------------------------------ fused kernel ------------------------------- #

def _decoder_kernel(
    trg_ref, src_ref,
    ft_w, ft_b, fc1_w, fc1_b, fc2_w, fc2_b,
    sa_wqkv, sa_bqkv, sa_fcw, sa_fcb,
    ea_wq, ea_bq, ea_wkv, ea_bkv, ea_fcw, ea_fcb,
    ln_g, ln_b, pf1_w, pf1_b, pf2_w, pf2_b,
    out_ref,
    *, n_layers, n_heads, inv_scale,
):
    trg = trg_ref[0]                       # (Nt, A)
    src = src_ref[0]                       # (Ls, D)

    # ft: Linear(atom_dim -> hid_dim)
    x = jnp.dot(trg, ft_w[...], preferred_element_type=jnp.float32) + ft_b[...]
    D = x.shape[-1]
    dh = D // n_heads

    def layer_norm(v, g, b):
        mu = jnp.mean(v, axis=-1, keepdims=True)
        var = jnp.mean((v - mu) ** 2, axis=-1, keepdims=True)
        return (v - mu) * jax.lax.rsqrt(var + 1e-5) * g + b

    def mha(q_all, k_all, v_all, w_o, b_o):
        # q_all: (Lq, D), k_all/v_all: (Lk, D); heads split via lane slices.
        lq = q_all.shape[0]
        acc = jnp.zeros((lq, D), jnp.float32)
        for h in range(n_heads):
            lo, hi = h * dh, (h + 1) * dh
            qh = q_all[:, lo:hi] * inv_scale           # fold 1/scale into q
            kh = k_all[:, lo:hi]
            vh = v_all[:, lo:hi]
            # energy = qh @ kh^T   (contraction on the feature dim of both)
            e = jax.lax.dot_general(qh, kh, (((1,), (1,)), ((), ())),
                                    preferred_element_type=jnp.float32)
            e = e - jnp.max(e, axis=-1, keepdims=True)
            p = jnp.exp(e)
            attn = p * pl.reciprocal(jnp.sum(p, axis=-1, keepdims=True),
                                     approx=True)
            oh = jnp.dot(attn, vh, preferred_element_type=jnp.float32)
            # fuse output projection per head: concat_h(o_h) @ W_o == Σ_h o_h @ W_o[h]
            acc = acc + jnp.dot(oh, w_o[lo:hi, :],
                                preferred_element_type=jnp.float32)
        return acc + b_o

    for l in range(n_layers):
        g = ln_g[l]
        bb = ln_b[l]

        # ---- self-attention sublayer (fused QKV projection) ----
        qkv = jnp.dot(x, sa_wqkv[l], preferred_element_type=jnp.float32) + sa_bqkv[l]
        a = mha(qkv[:, 0:D], qkv[:, D:2 * D], qkv[:, 2 * D:3 * D],
                sa_fcw[l], sa_fcb[l])
        x = layer_norm(x + a, g, bb)

        # ---- encoder (cross) attention sublayer (fused KV projection) ----
        q = jnp.dot(x, ea_wq[l], preferred_element_type=jnp.float32) + ea_bq[l]
        kv = jnp.dot(src, ea_wkv[l], preferred_element_type=jnp.float32) + ea_bkv[l]
        a = mha(q, kv[:, 0:D], kv[:, D:2 * D], ea_fcw[l], ea_fcb[l])
        x = layer_norm(x + a, g, bb)

        # ---- positionwise feedforward (conv1x1 -> relu -> conv1x1) ----
        h = jnp.dot(x, pf1_w[l], preferred_element_type=jnp.float32) + pf1_b[l]
        h = jnp.maximum(h, 0.0)
        h = jnp.dot(h, pf2_w[l], preferred_element_type=jnp.float32) + pf2_b[l]
        x = layer_norm(x + h, g, bb)

    # ---- "use norm to determine which atom is significant" pooling ----
    nrm = jnp.sqrt(jnp.sum(x * x, axis=-1, keepdims=True))      # (Nt, 1)
    m = jnp.max(nrm, axis=0, keepdims=True)
    e = jnp.exp(nrm - m)
    w = e * pl.reciprocal(jnp.sum(e, axis=0, keepdims=True), approx=True)
    pooled = jnp.sum(x * w, axis=0, keepdims=True)               # (1, D)

    # ---- fused classification head: fc_1 -> relu -> fc_2 ----
    h = jnp.dot(pooled, fc1_w[...], preferred_element_type=jnp.float32) + fc1_b[...]
    h = jnp.maximum(h, 0.0)
    out = jnp.dot(h, fc2_w[...], preferred_element_type=jnp.float32) + fc2_b[...]
    out_ref[0] = out                                             # (1, 2)


# ------------------------------ JAX wrapper -------------------------------- #

def _whole_spec(arr):
    zeros = (0,) * arr.ndim
    return pl.BlockSpec(arr.shape, lambda b: zeros)


def decoder_forward(params, trg, src, n_heads):
    B, Nt, A = trg.shape
    _, Ls, D = src.shape
    n_layers = params["sa_wqkv"].shape[0]
    inv_scale = 1.0 / math.sqrt(D // n_heads)

    inputs = [
        trg, src,
        params["ft_w"], params["ft_b"], params["fc1_w"], params["fc1_b"],
        params["fc2_w"], params["fc2_b"],
        params["sa_wqkv"], params["sa_bqkv"], params["sa_fcw"], params["sa_fcb"],
        params["ea_wq"], params["ea_bq"], params["ea_wkv"], params["ea_bkv"],
        params["ea_fcw"], params["ea_fcb"],
        params["ln_g"], params["ln_b"],
        params["pf1_w"], params["pf1_b"], params["pf2_w"], params["pf2_b"],
    ]

    in_specs = [
        pl.BlockSpec((1, Nt, A), lambda b: (b, 0, 0)),
        pl.BlockSpec((1, Ls, D), lambda b: (b, 0, 0)),
    ] + [_whole_spec(a) for a in inputs[2:]]

    out = pl.pallas_call(
        functools.partial(_decoder_kernel, n_layers=n_layers,
                          n_heads=n_heads, inv_scale=inv_scale),
        grid=(B,),
        in_specs=in_specs,
        out_specs=pl.BlockSpec((1, 1, 2), lambda b: (b, 0, 0)),
        out_shape=jax.ShapeDtypeStruct((B, 1, 2), jnp.float32),
        compiler_params=pltpu.CompilerParams(
            dimension_semantics=("parallel",)),
    )(*inputs)
    return out.reshape(B, 2)


# --------------------------- pure-JAX reference ----------------------------- #

def decoder_reference(params, trg, src, n_heads):
    """Batched pure-JAX mirror of the PyTorch forward (for correctness check)."""
    D = src.shape[-1]
    dh = D // n_heads
    scale = math.sqrt(dh)
    n_layers = params["sa_wqkv"].shape[0]

    def layer_norm(v, g, b):
        mu = jnp.mean(v, -1, keepdims=True)
        var = jnp.mean((v - mu) ** 2, -1, keepdims=True)
        return (v - mu) / jnp.sqrt(var + 1e-5) * g + b

    def mha(q, k, v, wo, bo):
        B, Lq, _ = q.shape
        Lk = k.shape[1]
        qh = q.reshape(B, Lq, n_heads, dh).transpose(0, 2, 1, 3)
        kh = k.reshape(B, Lk, n_heads, dh).transpose(0, 2, 1, 3)
        vh = v.reshape(B, Lk, n_heads, dh).transpose(0, 2, 1, 3)
        e = jnp.einsum('bhqd,bhkd->bhqk', qh, kh) / scale
        p = jax.nn.softmax(e, axis=-1)
        o = jnp.einsum('bhqk,bhkd->bhqd', p, vh)
        o = o.transpose(0, 2, 1, 3).reshape(B, Lq, D)
        return jnp.einsum('bqd,de->bqe', o, wo) + bo

    x = jnp.einsum('bna,ah->bnh', trg, params["ft_w"]) + params["ft_b"]
    for l in range(n_layers):
        g, b = params["ln_g"][l], params["ln_b"][l]
        qkv = x @ params["sa_wqkv"][l] + params["sa_bqkv"][l]
        a = mha(qkv[..., :D], qkv[..., D:2 * D], qkv[..., 2 * D:],
                params["sa_fcw"][l], params["sa_fcb"][l])
        x = layer_norm(x + a, g, b)
        q = x @ params["ea_wq"][l] + params["ea_bq"][l]
        kv = src @ params["ea_wkv"][l] + params["ea_bkv"][l]
        a = mha(q, kv[..., :D], kv[..., D:],
                params["ea_fcw"][l], params["ea_fcb"][l])
        x = layer_norm(x + a, g, b)
        h = jnp.maximum(x @ params["pf1_w"][l] + params["pf1_b"][l], 0.0)
        h = h @ params["pf2_w"][l] + params["pf2_b"][l]
        x = layer_norm(x + h, g, b)

    nrm = jnp.sqrt(jnp.sum(x * x, axis=-1))                 # (B, Nt)
    w = jax.nn.softmax(nrm, axis=-1)
    pooled = jnp.einsum('bn,bnd->bd', w, x)
    h = jnp.maximum(pooled @ params["fc1_w"] + params["fc1_b"], 0.0)
    return h @ params["fc2_w"] + params["fc2_b"]


# ------------------------------ parameter init ------------------------------ #

def _dense_init(key, fan_in, fan_out):
    kw, kb = jax.random.split(key)
    w = jax.random.normal(kw, (fan_in, fan_out), jnp.float32) / math.sqrt(fan_in)
    b = jax.random.normal(kb, (1, fan_out), jnp.float32) * 0.01
    return w, b


def init_params(key, atom_dim, hid_dim, n_layers, pf_dim):
    keys = jax.random.split(key, 3 + n_layers)
    p = {}
    p["ft_w"], p["ft_b"] = _dense_init(keys[0], atom_dim, hid_dim)
    p["fc1_w"], p["fc1_b"] = _dense_init(keys[1], hid_dim, 256)
    p["fc2_w"], p["fc2_b"] = _dense_init(keys[2], 256, 2)

    names = ["sa_wqkv", "sa_bqkv", "sa_fcw", "sa_fcb",
             "ea_wq", "ea_bq", "ea_wkv", "ea_bkv", "ea_fcw", "ea_fcb",
             "ln_g", "ln_b", "pf1_w", "pf1_b", "pf2_w", "pf2_b"]
    acc = {k: [] for k in names}

    for li in range(n_layers):
        lk = jax.random.split(keys[3 + li], 10)
        # self-attention (Q, K, V projections fused into one matmul)
        wq, bq = _dense_init(lk[0], hid_dim, hid_dim)
        wk, bk = _dense_init(lk[1], hid_dim, hid_dim)
        wv, bv = _dense_init(lk[2], hid_dim, hid_dim)
        fw, fb = _dense_init(lk[3], hid_dim, hid_dim)
        acc["sa_wqkv"].append(jnp.concatenate([wq, wk, wv], axis=1))
        acc["sa_bqkv"].append(jnp.concatenate([bq, bk, bv], axis=1))
        acc["sa_fcw"].append(fw)
        acc["sa_fcb"].append(fb)
        # cross-attention (K, V projections fused)
        wq, bq = _dense_init(lk[4], hid_dim, hid_dim)
        wk, bk = _dense_init(lk[5], hid_dim, hid_dim)
        wv, bv = _dense_init(lk[6], hid_dim, hid_dim)
        fw, fb = _dense_init(lk[7], hid_dim, hid_dim)
        acc["ea_wq"].append(wq)
        acc["ea_bq"].append(bq)
        acc["ea_wkv"].append(jnp.concatenate([wk, wv], axis=1))
        acc["ea_bkv"].append(jnp.concatenate([bk, bv], axis=1))
        acc["ea_fcw"].append(fw)
        acc["ea_fcb"].append(fb)
        # single LayerNorm instance reused for all three sublayers (as in ref)
        acc["ln_g"].append(jnp.ones((1, hid_dim), jnp.float32))
        acc["ln_b"].append(jnp.zeros((1, hid_dim), jnp.float32))
        # positionwise feedforward (conv1x1 == linear)
        w1, b1 = _dense_init(lk[8], hid_dim, pf_dim)
        w2, b2 = _dense_init(lk[9], pf_dim, hid_dim)
        acc["pf1_w"].append(w1)
        acc["pf1_b"].append(b1)
        acc["pf2_w"].append(w2)
        acc["pf2_b"].append(b2)

    for k in names:
        p[k] = jnp.stack(acc[k], axis=0)
    return p


# ----------------------------------- main ----------------------------------- #

if __name__ == "__main__":
    atom_dim, hid_dim = 16, 32
    n_layers, n_heads, pf_dim = 2, 4, 64
    B, n_atoms, src_len = 2, 8, 10

    key = jax.random.PRNGKey(0)
    k_trg, k_src, k_par = jax.random.split(key, 3)

    trg = jax.random.normal(k_trg, (B, n_atoms, atom_dim), jnp.float32)   # compound atoms
    src = jax.random.normal(k_src, (B, src_len, hid_dim), jnp.float32)    # encoder output

    params = init_params(k_par, atom_dim, hid_dim, n_layers, pf_dim)

    fwd = jax.jit(functools.partial(decoder_forward, n_heads=n_heads))
    out = jax.block_until_ready(fwd(params, trg, src))
    assert out.shape == (B, 2) and out.dtype == jnp.float32
    assert bool(jnp.all(jnp.isfinite(out)))

    # Correctness check vs. pure-JAX reference (tolerance accounts for the
    # approximate EUP reciprocal used in the kernel's softmax denominators).
    ref = jax.block_until_ready(decoder_reference(params, trg, src, n_heads))
    assert bool(jnp.allclose(out, ref, rtol=2e-2, atol=2e-2)), (out, ref)

    print("KERNEL_OK")
</pallas_src>

<mosaic_0001>
module attributes {stable_mosaic.version = 11 : i64} {
  func.func @_decoder_kernel(%arg0: i32, %arg1: memref<1x8x16xf32, #tpu.memory_space<vmem>>, %arg2: memref<1x10x32xf32, #tpu.memory_space<vmem>>, %arg3: memref<16x32xf32, #tpu.memory_space<vmem>>, %arg4: memref<1x32xf32, #tpu.memory_space<vmem>>, %arg5: memref<32x256xf32, #tpu.memory_space<vmem>>, %arg6: memref<1x256xf32, #tpu.memory_space<vmem>>, %arg7: memref<256x2xf32, #tpu.memory_space<vmem>>, %arg8: memref<1x2xf32, #tpu.memory_space<vmem>>, %arg9: memref<2x32x96xf32, #tpu.memory_space<vmem>>, %arg10: memref<2x1x96xf32, #tpu.memory_space<vmem>>, %arg11: memref<2x32x32xf32, #tpu.memory_space<vmem>>, %arg12: memref<2x1x32xf32, #tpu.memory_space<vmem>>, %arg13: memref<2x32x32xf32, #tpu.memory_space<vmem>>, %arg14: memref<2x1x32xf32, #tpu.memory_space<vmem>>, %arg15: memref<2x32x64xf32, #tpu.memory_space<vmem>>, %arg16: memref<2x1x64xf32, #tpu.memory_space<vmem>>, %arg17: memref<2x32x32xf32, #tpu.memory_space<vmem>>, %arg18: memref<2x1x32xf32, #tpu.memory_space<vmem>>, %arg19: memref<2x1x32xf32, #tpu.memory_space<vmem>>, %arg20: memref<2x1x32xf32, #tpu.memory_space<vmem>>, %arg21: memref<2x32x64xf32, #tpu.memory_space<vmem>>, %arg22: memref<2x1x64xf32, #tpu.memory_space<vmem>>, %arg23: memref<2x64x32xf32, #tpu.memory_space<vmem>>, %arg24: memref<2x1x32xf32, #tpu.memory_space<vmem>>, %arg25: memref<1x1x2xf32, #tpu.memory_space<vmem>>) attributes {dimension_semantics = [#tpu.dimension_semantics<parallel>], iteration_bounds = array<i64: 2>, scalar_prefetch = 0 : i64, scratch_operands = 0 : i64, tpu.core_type = #tpu.core_type<tc>, window_params = [{transform_indices = @transform_0, window_bounds = array<i64: 1, 8, 16>}, {transform_indices = @transform_1, window_bounds = array<i64: 1, 10, 32>}, {pipeline_mode = #tpu.pipeline_mode<synchronous>, transform_indices = @transform_2, window_bounds = array<i64: 16, 32>}, {pipeline_mode = #tpu.pipeline_mode<synchronous>, transform_indices = @transform_3, window_bounds = array<i64: 1, 32>}, {pipeline_mode = #tpu.pipeline_mode<synchronous>, transform_indices = @transform_4, window_bounds = array<i64: 32, 256>}, {pipeline_mode = #tpu.pipeline_mode<synchronous>, transform_indices = @transform_5, window_bounds = array<i64: 1, 256>}, {pipeline_mode = #tpu.pipeline_mode<synchronous>, transform_indices = @transform_6, window_bounds = array<i64: 256, 2>}, {pipeline_mode = #tpu.pipeline_mode<synchronous>, transform_indices = @transform_7, window_bounds = array<i64: 1, 2>}, {pipeline_mode = #tpu.pipeline_mode<synchronous>, transform_indices = @transform_8, window_bounds = array<i64: 2, 32, 96>}, {pipeline_mode = #tpu.pipeline_mode<synchronous>, transform_indices = @transform_9, window_bounds = array<i64: 2, 1, 96>}, {pipeline_mode = #tpu.pipeline_mode<synchronous>, transform_indices = @transform_10, window_bounds = array<i64: 2, 32, 32>}, {pipeline_mode = #tpu.pipeline_mode<synchronous>, transform_indices = @transform_11, window_bounds = array<i64: 2, 1, 32>}, {pipeline_mode = #tpu.pipeline_mode<synchronous>, transform_indices = @transform_12, window_bounds = array<i64: 2, 32, 32>}, {pipeline_mode = #tpu.pipeline_mode<synchronous>, transform_indices = @transform_13, window_bounds = array<i64: 2, 1, 32>}, {pipeline_mode = #tpu.pipeline_mode<synchronous>, transform_indices = @transform_14, window_bounds = array<i64: 2, 32, 64>}, {pipeline_mode = #tpu.pipeline_mode<synchronous>, transform_indices = @transform_15, window_bounds = array<i64: 2, 1, 64>}, {pipeline_mode = #tpu.pipeline_mode<synchronous>, transform_indices = @transform_16, window_bounds = array<i64: 2, 32, 32>}, {pipeline_mode = #tpu.pipeline_mode<synchronous>, transform_indices = @transform_17, window_bounds = array<i64: 2, 1, 32>}, {pipeline_mode = #tpu.pipeline_mode<synchronous>, transform_indices = @transform_18, window_bounds = array<i64: 2, 1, 32>}, {pipeline_mode = #tpu.pipeline_mode<synchronous>, transform_indices = @transform_19, window_bounds = array<i64: 2, 1, 32>}, {pipeline_mode = #tpu.pipeline_mode<synchronous>, transform_indices = @transform_20, window_bounds = array<i64: 2, 32, 64>}, {pipeline_mode = #tpu.pipeline_mode<synchronous>, transform_indices = @transform_21, window_bounds = array<i64: 2, 1, 64>}, {pipeline_mode = #tpu.pipeline_mode<synchronous>, transform_indices = @transform_22, window_bounds = array<i64: 2, 64, 32>}, {pipeline_mode = #tpu.pipeline_mode<synchronous>, transform_indices = @transform_23, window_bounds = array<i64: 2, 1, 32>}, {transform_indices = @transform_24, window_bounds = array<i64: 1, 1, 2>}]} {
    %c0 = arith.constant 0 : index
    %c0_0 = arith.constant 0 : index
    %c0_1 = arith.constant 0 : index
    %0 = vector.load %arg1[%c0, %c0_0, %c0_1] : memref<1x8x16xf32, #tpu.memory_space<vmem>>, vector<1x8x16xf32>
    %1 = vector.shape_cast %0 : vector<1x8x16xf32> to vector<8x16xf32>
    %c0_2 = arith.constant 0 : index
    %c0_3 = arith.constant 0 : index
    %c0_4 = arith.constant 0 : index
    %2 = vector.load %arg2[%c0_2, %c0_3, %c0_4] : memref<1x10x32xf32, #tpu.memory_space<vmem>>, vector<1x10x32xf32>
    %3 = vector.shape_cast %2 : vector<1x10x32xf32> to vector<10x32xf32>
    %c0_5 = arith.constant 0 : index
    %c0_6 = arith.constant 0 : index
    %4 = vector.load %arg3[%c0_5, %c0_6] : memref<16x32xf32, #tpu.memory_space<vmem>>, vector<16x32xf32>
    %cst = arith.constant dense<0.000000e+00> : vector<8x32xf32>
    %5 = tpu.matmul %1, %4, %cst {dimension_numbers = #tpu.dot_dimension_numbers<[1], [0], [0], [1], [0, 0, 1, 1], [], []>} : vector<8x16xf32>, vector<16x32xf32>, vector<8x32xf32> -> vector<8x32xf32>
    %c0_7 = arith.constant 0 : index
    %c0_8 = arith.constant 0 : index
    %6 = vector.load %arg4[%c0_7, %c0_8] : memref<1x32xf32, #tpu.memory_space<vmem>>, vector<1x32xf32>
    %7 = vector.broadcast %6 : vector<1x32xf32> to vector<8x32xf32>
    %8 = arith.addf %5, %7 : vector<8x32xf32>
    %c0_9 = arith.constant 0 : index
    %c0_10 = arith.constant 0 : index
    %c0_11 = arith.constant 0 : index
    %9 = vector.load %arg19[%c0_9, %c0_10, %c0_11] : memref<2x1x32xf32, #tpu.memory_space<vmem>>, vector<1x1x32xf32>
    %10 = vector.shape_cast %9 : vector<1x1x32xf32> to vector<1x32xf32>
    %c0_12 = arith.constant 0 : index
    %c0_13 = arith.constant 0 : index
    %c0_14 = arith.constant 0 : index
    %11 = vector.load %arg20[%c0_12, %c0_13, %c0_14] : memref<2x1x32xf32, #tpu.memory_space<vmem>>, vector<1x1x32xf32>
    %12 = vector.shape_cast %11 : vector<1x1x32xf32> to vector<1x32xf32>
    %c0_15 = arith.constant 0 : index
    %c0_16 = arith.constant 0 : index
    %c0_17 = arith.constant 0 : index
    %13 = vector.load %arg9[%c0_15, %c0_16, %c0_17] : memref<2x32x96xf32, #tpu.memory_space<vmem>>, vector<1x32x96xf32>
    %14 = vector.shape_cast %13 : vector<1x32x96xf32> to vector<32x96xf32>
    %cst_18 = arith.constant dense<0.000000e+00> : vector<8x96xf32>
    %15 = tpu.matmul %8, %14, %cst_18 {dimension_numbers = #tpu.dot_dimension_numbers<[1], [0], [0], [1], [0, 0, 1, 1], [], []>} : vector<8x32xf32>, vector<32x96xf32>, vector<8x96xf32> -> vector<8x96xf32>
    %c0_19 = arith.constant 0 : index
    %c0_20 = arith.constant 0 : index
    %c0_21 = arith.constant 0 : index
    %16 = vector.load %arg10[%c0_19, %c0_20, %c0_21] : memref<2x1x96xf32, #tpu.memory_space<vmem>>, vector<1x1x96xf32>
    %17 = vector.shape_cast %16 : vector<1x1x96xf32> to vector<1x96xf32>
    %18 = vector.broadcast %17 : vector<1x96xf32> to vector<8x96xf32>
    %19 = arith.addf %15, %18 : vector<8x96xf32>
    %20 = vector.extract_strided_slice %19 {offsets = [0, 0], sizes = [8, 32], strides = [1, 1]} : vector<8x96xf32> to vector<8x32xf32>
    %21 = vector.extract_strided_slice %19 {offsets = [0, 32], sizes = [8, 32], strides = [1, 1]} : vector<8x96xf32> to vector<8x32xf32>
    %22 = vector.extract_strided_slice %19 {offsets = [0, 64], sizes = [8, 32], strides = [1, 1]} : vector<8x96xf32> to vector<8x32xf32>
    %c0_22 = arith.constant 0 : index
    %c0_23 = arith.constant 0 : index
    %c0_24 = arith.constant 0 : index
    %23 = vector.load %arg11[%c0_22, %c0_23, %c0_24] : memref<2x32x32xf32, #tpu.memory_space<vmem>>, vector<1x32x32xf32>
    %24 = vector.shape_cast %23 : vector<1x32x32xf32> to vector<32x32xf32>
    %c0_25 = arith.constant 0 : index
    %c0_26 = arith.constant 0 : index
    %c0_27 = arith.constant 0 : index
    %25 = vector.load %arg12[%c0_25, %c0_26, %c0_27] : memref<2x1x32xf32, #tpu.memory_space<vmem>>, vector<1x1x32xf32>
    %26 = vector.shape_cast %25 : vector<1x1x32xf32> to vector<1x32xf32>
    %cst_28 = arith.constant 0.000000e+00 : f32
    %27 = vector.broadcast %cst_28 : f32 to vector<8x32xf32>
    %28 = vector.extract_strided_slice %20 {offsets = [0, 0], sizes = [8, 8], strides = [1, 1]} : vector<8x32xf32> to vector<8x8xf32>
    %cst_29 = arith.constant 0.353553385 : f32
    %29 = vector.broadcast %cst_29 : f32 to vector<8x8xf32>
    %30 = arith.mulf %28, %29 : vector<8x8xf32>
    %31 = vector.extract_strided_slice %21 {offsets = [0, 0], sizes = [8, 8], strides = [1, 1]} : vector<8x32xf32> to vector<8x8xf32>
    %32 = vector.extract_strided_slice %22 {offsets = [0, 0], sizes = [8, 8], strides = [1, 1]} : vector<8x32xf32> to vector<8x8xf32>
    %cst_30 = arith.constant dense<0.000000e+00> : vector<8x8xf32>
    %33 = tpu.matmul %30, %31, %cst_30 {dimension_numbers = #tpu.dot_dimension_numbers<[1], [1], [0], [0], [0, 0, 1, 0], [], []>} : vector<8x8xf32>, vector<8x8xf32>, vector<8x8xf32> -> vector<8x8xf32>
    %cst_31 = arith.constant dense<0xFF800000> : vector<8xf32>
    %34 = vector.multi_reduction <maximumf>, %33, %cst_31 [1] : vector<8x8xf32> to vector<8xf32>
    %35 = vector.shape_cast %34 : vector<8xf32> to vector<8x1xf32>
    %36 = vector.broadcast %35 : vector<8x1xf32> to vector<8x8xf32>
    %37 = arith.subf %33, %36 : vector<8x8xf32>
    %38 = math.exp %37 : vector<8x8xf32>
    %cst_32 = arith.constant dense<0.000000e+00> : vector<8xf32>
    %39 = vector.multi_reduction <add>, %38, %cst_32 [1] : vector<8x8xf32> to vector<8xf32>
    %40 = vector.shape_cast %39 : vector<8xf32> to vector<8x1xf32>
    %41 = tpu.reciprocal %40 {approx = true} : vector<8x1xf32> -> vector<8x1xf32>
    %42 = vector.broadcast %41 : vector<8x1xf32> to vector<8x8xf32>
    %43 = arith.mulf %38, %42 : vector<8x8xf32>
    %cst_33 = arith.constant dense<0.000000e+00> : vector<8x8xf32>
    %44 = tpu.matmul %43, %32, %cst_33 {dimension_numbers = #tpu.dot_dimension_numbers<[1], [0], [0], [1], [0, 0, 1, 1], [], []>} : vector<8x8xf32>, vector<8x8xf32>, vector<8x8xf32> -> vector<8x8xf32>
    %45 = vector.extract_strided_slice %24 {offsets = [0, 0], sizes = [8, 32], strides = [1, 1]} : vector<32x32xf32> to vector<8x32xf32>
    %cst_34 = arith.constant dense<0.000000e+00> : vector<8x32xf32>
    %46 = tpu.matmul %44, %45, %cst_34 {dimension_numbers = #tpu.dot_dimension_numbers<[1], [0], [0], [1], [0, 0, 1, 1], [], []>} : vector<8x8xf32>, vector<8x32xf32>, vector<8x32xf32> -> vector<8x32xf32>
    %47 = arith.addf %27, %46 : vector<8x32xf32>
    %48 = vector.extract_strided_slice %20 {offsets = [0, 8], sizes = [8, 8], strides = [1, 1]} : vector<8x32xf32> to vector<8x8xf32>
    %cst_35 = arith.constant 0.353553385 : f32
    %49 = vector.broadcast %cst_35 : f32 to vector<8x8xf32>
    %50 = arith.mulf %48, %49 : vector<8x8xf32>
    %51 = vector.extract_strided_slice %21 {offsets = [0, 8], sizes = [8, 8], strides = [1, 1]} : vector<8x32xf32> to vector<8x8xf32>
    %52 = vector.extract_strided_slice %22 {offsets = [0, 8], sizes = [8, 8], strides = [1, 1]} : vector<8x32xf32> to vector<8x8xf32>
    %cst_36 = arith.constant dense<0.000000e+00> : vector<8x8xf32>
    %53 = tpu.matmul %50, %51, %cst_36 {dimension_numbers = #tpu.dot_dimension_numbers<[1], [1], [0], [0], [0, 0, 1, 0], [], []>} : vector<8x8xf32>, vector<8x8xf32>, vector<8x8xf32> -> vector<8x8xf32>
    %cst_37 = arith.constant dense<0xFF800000> : vector<8xf32>
    %54 = vector.multi_reduction <maximumf>, %53, %cst_37 [1] : vector<8x8xf32> to vector<8xf32>
    %55 = vector.shape_cast %54 : vector<8xf32> to vector<8x1xf32>
    %56 = vector.broadcast %55 : vector<8x1xf32> to vector<8x8xf32>
    %57 = arith.subf %53, %56 : vector<8x8xf32>
    %58 = math.exp %57 : vector<8x8xf32>
    %cst_38 = arith.constant dense<0.000000e+00> : vector<8xf32>
    %59 = vector.multi_reduction <add>, %58, %cst_38 [1] : vector<8x8xf32> to vector<8xf32>
    %60 = vector.shape_cast %59 : vector<8xf32> to vector<8x1xf32>
    %61 = tpu.reciprocal %60 {approx = true} : vector<8x1xf32> -> vector<8x1xf32>
    %62 = vector.broadcast %61 : vector<8x1xf32> to vector<8x8xf32>
    %63 = arith.mulf %58, %62 : vector<8x8xf32>
    %cst_39 = arith.constant dense<0.000000e+00> : vector<8x8xf32>
    %64 = tpu.matmul %63, %52, %cst_39 {dimension_numbers = #tpu.dot_dimension_numbers<[1], [0], [0], [1], [0, 0, 1, 1], [], []>} : vector<8x8xf32>, vector<8x8xf32>, vector<8x8xf32> -> vector<8x8xf32>
    %65 = vector.extract_strided_slice %24 {offsets = [8, 0], sizes = [8, 32], strides = [1, 1]} : vector<32x32xf32> to vector<8x32xf32>
    %cst_40 = arith.constant dense<0.000000e+00> : vector<8x32xf32>
    %66 = tpu.matmul %64, %65, %cst_40 {dimension_numbers = #tpu.dot_dimension_numbers<[1], [0], [0], [1], [0, 0, 1, 1], [], []>} : vector<8x8xf32>, vector<8x32xf32>, vector<8x32xf32> -> vector<8x32xf32>
    %67 = arith.addf %47, %66 : vector<8x32xf32>
    %68 = vector.extract_strided_slice %20 {offsets = [0, 16], sizes = [8, 8], strides = [1, 1]} : vector<8x32xf32> to vector<8x8xf32>
    %cst_41 = arith.constant 0.353553385 : f32
    %69 = vector.broadcast %cst_41 : f32 to vector<8x8xf32>
    %70 = arith.mulf %68, %69 : vector<8x8xf32>
    %71 = vector.extract_strided_slice %21 {offsets = [0, 16], sizes = [8, 8], strides = [1, 1]} : vector<8x32xf32> to vector<8x8xf32>
    %72 = vector.extract_strided_slice %22 {offsets = [0, 16], sizes = [8, 8], strides = [1, 1]} : vector<8x32xf32> to vector<8x8xf32>
    %cst_42 = arith.constant dense<0.000000e+00> : vector<8x8xf32>
    %73 = tpu.matmul %70, %71, %cst_42 {dimension_numbers = #tpu.dot_dimension_numbers<[1], [1], [0], [0], [0, 0, 1, 0], [], []>} : vector<8x8xf32>, vector<8x8xf32>, vector<8x8xf32> -> vector<8x8xf32>
    %cst_43 = arith.constant dense<0xFF800000> : vector<8xf32>
    %74 = vector.multi_reduction <maximumf>, %73, %cst_43 [1] : vector<8x8xf32> to vector<8xf32>
    %75 = vector.shape_cast %74 : vector<8xf32> to vector<8x1xf32>
    %76 = vector.broadcast %75 : vector<8x1xf32> to vector<8x8xf32>
    %77 = arith.subf %73, %76 : vector<8x8xf32>
    %78 = math.exp %77 : vector<8x8xf32>
    %cst_44 = arith.constant dense<0.000000e+00> : vector<8xf32>
    %79 = vector.multi_reduction <add>, %78, %cst_44 [1] : vector<8x8xf32> to vector<8xf32>
    %80 = vector.shape_cast %79 : vector<8xf32> to vector<8x1xf32>
    %81 = tpu.reciprocal %80 {approx = true} : vector<8x1xf32> -> vector<8x1xf32>
    %82 = vector.broadcast %81 : vector<8x1xf32> to vector<8x8xf32>
    %83 = arith.mulf %78, %82 : vector<8x8xf32>
    %cst_45 = arith.constant dense<0.000000e+00> : vector<8x8xf32>
    %84 = tpu.matmul %83, %72, %cst_45 {dimension_numbers = #tpu.dot_dimension_numbers<[1], [0], [0], [1], [0, 0, 1, 1], [], []>} : vector<8x8xf32>, vector<8x8xf32>, vector<8x8xf32> -> vector<8x8xf32>
    %85 = vector.extract_strided_slice %24 {offsets = [16, 0], sizes = [8, 32], strides = [1, 1]} : vector<32x32xf32> to vector<8x32xf32>
    %cst_46 = arith.constant dense<0.000000e+00> : vector<8x32xf32>
    %86 = tpu.matmul %84, %85, %cst_46 {dimension_numbers = #tpu.dot_dimension_numbers<[1], [0], [0], [1], [0, 0, 1, 1], [], []>} : vector<8x8xf32>, vector<8x32xf32>, vector<8x32xf32> -> vector<8x32xf32>
    %87 = arith.addf %67, %86 : vector<8x32xf32>
    %88 = vector.extract_strided_slice %20 {offsets = [0, 24], sizes = [8, 8], strides = [1, 1]} : vector<8x32xf32> to vector<8x8xf32>
    %cst_47 = arith.constant 0.353553385 : f32
    %89 = vector.broadcast %cst_47 : f32 to vector<8x8xf32>
    %90 = arith.mulf %88, %89 : vector<8x8xf32>
    %91 = vector.extract_strided_slice %21 {offsets = [0, 24], sizes = [8, 8], strides = [1, 1]} : vector<8x32xf32> to vector<8x8xf32>
    %92 = vector.extract_strided_slice %22 {offsets = [0, 24], sizes = [8, 8], strides = [1, 1]} : vector<8x32xf32> to vector<8x8xf32>
    %cst_48 = arith.constant dense<0.000000e+00> : vector<8x8xf32>
    %93 = tpu.matmul %90, %91, %cst_48 {dimension_numbers = #tpu.dot_dimension_numbers<[1], [1], [0], [0], [0, 0, 1, 0], [], []>} : vector<8x8xf32>, vector<8x8xf32>, vector<8x8xf32> -> vector<8x8xf32>
    %cst_49 = arith.constant dense<0xFF800000> : vector<8xf32>
    %94 = vector.multi_reduction <maximumf>, %93, %cst_49 [1] : vector<8x8xf32> to vector<8xf32>
    %95 = vector.shape_cast %94 : vector<8xf32> to vector<8x1xf32>
    %96 = vector.broadcast %95 : vector<8x1xf32> to vector<8x8xf32>
    %97 = arith.subf %93, %96 : vector<8x8xf32>
    %98 = math.exp %97 : vector<8x8xf32>
    %cst_50 = arith.constant dense<0.000000e+00> : vector<8xf32>
    %99 = vector.multi_reduction <add>, %98, %cst_50 [1] : vector<8x8xf32> to vector<8xf32>
    %100 = vector.shape_cast %99 : vector<8xf32> to vector<8x1xf32>
    %101 = tpu.reciprocal %100 {approx = true} : vector<8x1xf32> -> vector<8x1xf32>
    %102 = vector.broadcast %101 : vector<8x1xf32> to vector<8x8xf32>
    %103 = arith.mulf %98, %102 : vector<8x8xf32>
    %cst_51 = arith.constant dense<0.000000e+00> : vector<8x8xf32>
    %104 = tpu.matmul %103, %92, %cst_51 {dimension_numbers = #tpu.dot_dimension_numbers<[1], [0], [0], [1], [0, 0, 1, 1], [], []>} : vector<8x8xf32>, vector<8x8xf32>, vector<8x8xf32> -> vector<8x8xf32>
    %105 = vector.extract_strided_slice %24 {offsets = [24, 0], sizes = [8, 32], strides = [1, 1]} : vector<32x32xf32> to vector<8x32xf32>
    %cst_52 = arith.constant dense<0.000000e+00> : vector<8x32xf32>
    %106 = tpu.matmul %104, %105, %cst_52 {dimension_numbers = #tpu.dot_dimension_numbers<[1], [0], [0], [1], [0, 0, 1, 1], [], []>} : vector<8x8xf32>, vector<8x32xf32>, vector<8x32xf32> -> vector<8x32xf32>
    %107 = arith.addf %87, %106 : vector<8x32xf32>
    %108 = vector.broadcast %26 : vector<1x32xf32> to vector<8x32xf32>
    %109 = arith.addf %107, %108 : vector<8x32xf32>
    %110 = arith.addf %8, %109 : vector<8x32xf32>
    %cst_53 = arith.constant dense<0.000000e+00> : vector<8xf32>
    %111 = vector.multi_reduction <add>, %110, %cst_53 [1] : vector<8x32xf32> to vector<8xf32>
    %112 = vector.shape_cast %111 : vector<8xf32> to vector<8x1xf32>
    %cst_54 = arith.constant 3.200000e+01 : f32
    %113 = vector.broadcast %cst_54 : f32 to vector<8x1xf32>
    %114 = arith.divf %112, %113 : vector<8x1xf32>
    %115 = vector.broadcast %114 : vector<8x1xf32> to vector<8x32xf32>
    %116 = arith.subf %110, %115 : vector<8x32xf32>
    %117 = arith.mulf %116, %116 : vector<8x32xf32>
    %cst_55 = arith.constant dense<0.000000e+00> : vector<8xf32>
    %118 = vector.multi_reduction <add>, %117, %cst_55 [1] : vector<8x32xf32> to vector<8xf32>
    %119 = vector.shape_cast %118 : vector<8xf32> to vector<8x1xf32>
    %cst_56 = arith.constant 3.200000e+01 : f32
    %120 = vector.broadcast %cst_56 : f32 to vector<8x1xf32>
    %121 = arith.divf %119, %120 : vector<8x1xf32>
    %122 = vector.broadcast %114 : vector<8x1xf32> to vector<8x32xf32>
    %123 = arith.subf %110, %122 : vector<8x32xf32>
    %cst_57 = arith.constant 9.99999974E-6 : f32
    %124 = vector.broadcast %cst_57 : f32 to vector<8x1xf32>
    %125 = arith.addf %121, %124 : vector<8x1xf32>
    %126 = math.rsqrt %125 : vector<8x1xf32>
    %127 = vector.broadcast %126 : vector<8x1xf32> to vector<8x32xf32>
    %128 = arith.mulf %123, %127 : vector<8x32xf32>
    %129 = vector.broadcast %10 : vector<1x32xf32> to vector<8x32xf32>
    %130 = arith.mulf %128, %129 : vector<8x32xf32>
    %131 = vector.broadcast %12 : vector<1x32xf32> to vector<8x32xf32>
    %132 = arith.addf %130, %131 : vector<8x32xf32>
    %c0_58 = arith.constant 0 : index
    %c0_59 = arith.constant 0 : index
    %c0_60 = arith.constant 0 : index
    %133 = vector.load %arg13[%c0_58, %c0_59, %c0_60] : memref<2x32x32xf32, #tpu.memory_space<vmem>>, vector<1x32x32xf32>
    %134 = vector.shape_cast %133 : vector<1x32x32xf32> to vector<32x32xf32>
    %cst_61 = arith.constant dense<0.000000e+00> : vector<8x32xf32>
    %135 = tpu.matmul %132, %134, %cst_61 {dimension_numbers = #tpu.dot_dimension_numbers<[1], [0], [0], [1], [0, 0, 1, 1], [], []>} : vector<8x32xf32>, vector<32x32xf32>, vector<8x32xf32> -> vector<8x32xf32>
    %c0_62 = arith.constant 0 : index
    %c0_63 = arith.constant 0 : index
    %c0_64 = arith.constant 0 : index
    %136 = vector.load %arg14[%c0_62, %c0_63, %c0_64] : memref<2x1x32xf32, #tpu.memory_space<vmem>>, vector<1x1x32xf32>
    %137 = vector.shape_cast %136 : vector<1x1x32xf32> to vector<1x32xf32>
    %138 = vector.broadcast %137 : vector<1x32xf32> to vector<8x32xf32>
    %139 = arith.addf %135, %138 : vector<8x32xf32>
    %c0_65 = arith.constant 0 : index
    %c0_66 = arith.constant 0 : index
    %c0_67 = arith.constant 0 : index
    %140 = vector.load %arg15[%c0_65, %c0_66, %c0_67] : memref<2x32x64xf32, #tpu.memory_space<vmem>>, vector<1x32x64xf32>
    %141 = vector.shape_cast %140 : vector<1x32x64xf32> to vector<32x64xf32>
    %cst_68 = arith.constant dense<0.000000e+00> : vector<10x64xf32>
    %142 = tpu.matmul %3, %141, %cst_68 {dimension_numbers = #tpu.dot_dimension_numbers<[1], [0], [0], [1], [0, 0, 1, 1], [], []>} : vector<10x32xf32>, vector<32x64xf32>, vector<10x64xf32> -> vector<10x64xf32>
    %c0_69 = arith.constant 0 : index
    %c0_70 = arith.constant 0 : index
    %c0_71 = arith.constant 0 : index
    %143 = vector.load %arg16[%c0_69, %c0_70, %c0_71] : memref<2x1x64xf32, #tpu.memory_space<vmem>>, vector<1x1x64xf32>
    %144 = vector.shape_cast %143 : vector<1x1x64xf32> to vector<1x64xf32>
    %145 = vector.broadcast %144 : vector<1x64xf32> to vector<10x64xf32>
    %146 = arith.addf %142, %145 : vector<10x64xf32>
    %147 = vector.extract_strided_slice %146 {offsets = [0, 0], sizes = [10, 32], strides = [1, 1]} : vector<10x64xf32> to vector<10x32xf32>
    %148 = vector.extract_strided_slice %146 {offsets = [0, 32], sizes = [10, 32], strides = [1, 1]} : vector<10x64xf32> to vector<10x32xf32>
    %c0_72 = arith.constant 0 : index
    %c0_73 = arith.constant 0 : index
    %c0_74 = arith.constant 0 : index
    %149 = vector.load %arg17[%c0_72, %c0_73, %c0_74] : memref<2x32x32xf32, #tpu.memory_space<vmem>>, vector<1x32x32xf32>
    %150 = vector.shape_cast %149 : vector<1x32x32xf32> to vector<32x32xf32>
    %c0_75 = arith.constant 0 : index
    %c0_76 = arith.constant 0 : index
    %c0_77 = arith.constant 0 : index
    %151 = vector.load %arg18[%c0_75, %c0_76, %c0_77] : memref<2x1x32xf32, #tpu.memory_space<vmem>>, vector<1x1x32xf32>
    %152 = vector.shape_cast %151 : vector<1x1x32xf32> to vector<1x32xf32>
    %cst_78 = arith.constant 0.000000e+00 : f32
    %153 = vector.broadcast %cst_78 : f32 to vector<8x32xf32>
    %154 = vector.extract_strided_slice %139 {offsets = [0, 0], sizes = [8, 8], strides = [1, 1]} : vector<8x32xf32> to vector<8x8xf32>
    %cst_79 = arith.constant 0.353553385 : f32
    %155 = vector.broadcast %cst_79 : f32 to vector<8x8xf32>
    %156 = arith.mulf %154, %155 : vector<8x8xf32>
    %157 = vector.extract_strided_slice %147 {offsets = [0, 0], sizes = [10, 8], strides = [1, 1]} : vector<10x32xf32> to vector<10x8xf32>
    %158 = vector.extract_strided_slice %148 {offsets = [0, 0], sizes = [10, 8], strides = [1, 1]} : vector<10x32xf32> to vector<10x8xf32>
    %cst_80 = arith.constant dense<0.000000e+00> : vector<8x10xf32>
    %159 = tpu.matmul %156, %157, %cst_80 {dimension_numbers = #tpu.dot_dimension_numbers<[1], [1], [0], [0], [0, 0, 1, 0], [], []>} : vector<8x8xf32>, vector<10x8xf32>, vector<8x10xf32> -> vector<8x10xf32>
    %cst_81 = arith.constant dense<0xFF800000> : vector<8xf32>
    %160 = vector.multi_reduction <maximumf>, %159, %cst_81 [1] : vector<8x10xf32> to vector<8xf32>
    %161 = vector.shape_cast %160 : vector<8xf32> to vector<8x1xf32>
    %162 = vector.broadcast %161 : vector<8x1xf32> to vector<8x10xf32>
    %163 = arith.subf %159, %162 : vector<8x10xf32>
    %164 = math.exp %163 : vector<8x10xf32>
    %cst_82 = arith.constant dense<0.000000e+00> : vector<8xf32>
    %165 = vector.multi_reduction <add>, %164, %cst_82 [1] : vector<8x10xf32> to vector<8xf32>
    %166 = vector.shape_cast %165 : vector<8xf32> to vector<8x1xf32>
    %167 = tpu.reciprocal %166 {approx = true} : vector<8x1xf32> -> vector<8x1xf32>
    %168 = vector.broadcast %167 : vector<8x1xf32> to vector<8x10xf32>
    %169 = arith.mulf %164, %168 : vector<8x10xf32>
    %cst_83 = arith.constant dense<0.000000e+00> : vector<8x8xf32>
    %170 = tpu.matmul %169, %158, %cst_83 {dimension_numbers = #tpu.dot_dimension_numbers<[1], [0], [0], [1], [0, 0, 1, 1], [], []>} : vector<8x10xf32>, vector<10x8xf32>, vector<8x8xf32> -> vector<8x8xf32>
    %171 = vector.extract_strided_slice %150 {offsets = [0, 0], sizes = [8, 32], strides = [1, 1]} : vector<32x32xf32> to vector<8x32xf32>
    %cst_84 = arith.constant dense<0.000000e+00> : vector<8x32xf32>
    %172 = tpu.matmul %170, %171, %cst_84 {dimension_numbers = #tpu.dot_dimension_numbers<[1], [0], [0], [1], [0, 0, 1, 1], [], []>} : vector<8x8xf32>, vector<8x32xf32>, vector<8x32xf32> -> vector<8x32xf32>
    %173 = arith.addf %153, %172 : vector<8x32xf32>
    %174 = vector.extract_strided_slice %139 {offsets = [0, 8], sizes = [8, 8], strides = [1, 1]} : vector<8x32xf32> to vector<8x8xf32>
    %cst_85 = arith.constant 0.353553385 : f32
    %175 = vector.broadcast %cst_85 : f32 to vector<8x8xf32>
    %176 = arith.mulf %174, %175 : vector<8x8xf32>
    %177 = vector.extract_strided_slice %147 {offsets = [0, 8], sizes = [10, 8], strides = [1, 1]} : vector<10x32xf32> to vector<10x8xf32>
    %178 = vector.extract_strided_slice %148 {offsets = [0, 8], sizes = [10, 8], strides = [1, 1]} : vector<10x32xf32> to vector<10x8xf32>
    %cst_86 = arith.constant dense<0.000000e+00> : vector<8x10xf32>
    %179 = tpu.matmul %176, %177, %cst_86 {dimension_numbers = #tpu.dot_dimension_numbers<[1], [1], [0], [0], [0, 0, 1, 0], [], []>} : vector<8x8xf32>, vector<10x8xf32>, vector<8x10xf32> -> vector<8x10xf32>
    %cst_87 = arith.constant dense<0xFF800000> : vector<8xf32>
    %180 = vector.multi_reduction <maximumf>, %179, %cst_87 [1] : vector<8x10xf32> to vector<8xf32>
    %181 = vector.shape_cast %180 : vector<8xf32> to vector<8x1xf32>
    %182 = vector.broadcast %181 : vector<8x1xf32> to vector<8x10xf32>
    %183 = arith.subf %179, %182 : vector<8x10xf32>
    %184 = math.exp %183 : vector<8x10xf32>
    %cst_88 = arith.constant dense<0.000000e+00> : vector<8xf32>
    %185 = vector.multi_reduction <add>, %184, %cst_88 [1] : vector<8x10xf32> to vector<8xf32>
    %186 = vector.shape_cast %185 : vector<8xf32> to vector<8x1xf32>
    %187 = tpu.reciprocal %186 {approx = true} : vector<8x1xf32> -> vector<8x1xf32>
    %188 = vector.broadcast %187 : vector<8x1xf32> to vector<8x10xf32>
    %189 = arith.mulf %184, %188 : vector<8x10xf32>
    %cst_89 = arith.constant dense<0.000000e+00> : vector<8x8xf32>
    %190 = tpu.matmul %189, %178, %cst_89 {dimension_numbers = #tpu.dot_dimension_numbers<[1], [0], [0], [1], [0, 0, 1, 1], [], []>} : vector<8x10xf32>, vector<10x8xf32>, vector<8x8xf32> -> vector<8x8xf32>
    %191 = vector.extract_strided_slice %150 {offsets = [8, 0], sizes = [8, 32], strides = [1, 1]} : vector<32x32xf32> to vector<8x32xf32>
    %cst_90 = arith.constant dense<0.000000e+00> : vector<8x32xf32>
    %192 = tpu.matmul %190, %191, %cst_90 {dimension_numbers = #tpu.dot_dimension_numbers<[1], [0], [0], [1], [0, 0, 1, 1], [], []>} : vector<8x8xf32>, vector<8x32xf32>, vector<8x32xf32> -> vector<8x32xf32>
    %193 = arith.addf %173, %192 : vector<8x32xf32>
    %194 = vector.extract_strided_slice %139 {offsets = [0, 16], sizes = [8, 8], strides = [1, 1]} : vector<8x32xf32> to vector<8x8xf32>
    %cst_91 = arith.constant 0.353553385 : f32
    %195 = vector.broadcast %cst_91 : f32 to vector<8x8xf32>
    %196 = arith.mulf %194, %195 : vector<8x8xf32>
    %197 = vector.extract_strided_slice %147 {offsets = [0, 16], sizes = [10, 8], strides = [1, 1]} : vector<10x32xf32> to vector<10x8xf32>
    %198 = vector.extract_strided_slice %148 {offsets = [0, 16], sizes = [10, 8], strides = [1, 1]} : vector<10x32xf32> to vector<10x8xf32>
    %cst_92 = arith.constant dense<0.000000e+00> : vector<8x10xf32>
    %199 = tpu.matmul %196, %197, %cst_92 {dimension_numbers = #tpu.dot_dimension_numbers<[1], [1], [0], [0], [0, 0, 1, 0], [], []>} : vector<8x8xf32>, vector<10x8xf32>, vector<8x10xf32> -> vector<8x10xf32>
    %cst_93 = arith.constant dense<0xFF800000> : vector<8xf32>
    %200 = vector.multi_reduction <maximumf>, %199, %cst_93 [1] : vector<8x10xf32> to vector<8xf32>
    %201 = vector.shape_cast %200 : vector<8xf32> to vector<8x1xf32>
    %202 = vector.broadcast %201 : vector<8x1xf32> to vector<8x10xf32>
    %203 = arith.subf %199, %202 : vector<8x10xf32>
    %204 = math.exp %203 : vector<8x10xf32>
    %cst_94 = arith.constant dense<0.000000e+00> : vector<8xf32>
    %205 = vector.multi_reduction <add>, %204, %cst_94 [1] : vector<8x10xf32> to vector<8xf32>
    %206 = vector.shape_cast %205 : vector<8xf32> to vector<8x1xf32>
    %207 = tpu.reciprocal %206 {approx = true} : vector<8x1xf32> -> vector<8x1xf32>
    %208 = vector.broadcast %207 : vector<8x1xf32> to vector<8x10xf32>
    %209 = arith.mulf %204, %208 : vector<8x10xf32>
    %cst_95 = arith.constant dense<0.000000e+00> : vector<8x8xf32>
    %210 = tpu.matmul %209, %198, %cst_95 {dimension_numbers = #tpu.dot_dimension_numbers<[1], [0], [0], [1], [0, 0, 1, 1], [], []>} : vector<8x10xf32>, vector<10x8xf32>, vector<8x8xf32> -> vector<8x8xf32>
    %211 = vector.extract_strided_slice %150 {offsets = [16, 0], sizes = [8, 32], strides = [1, 1]} : vector<32x32xf32> to vector<8x32xf32>
    %cst_96 = arith.constant dense<0.000000e+00> : vector<8x32xf32>
    %212 = tpu.matmul %210, %211, %cst_96 {dimension_numbers = #tpu.dot_dimension_numbers<[1], [0], [0], [1], [0, 0, 1, 1], [], []>} : vector<8x8xf32>, vector<8x32xf32>, vector<8x32xf32> -> vector<8x32xf32>
    %213 = arith.addf %193, %212 : vector<8x32xf32>
    %214 = vector.extract_strided_slice %139 {offsets = [0, 24], sizes = [8, 8], strides = [1, 1]} : vector<8x32xf32> to vector<8x8xf32>
    %cst_97 = arith.constant 0.353553385 : f32
    %215 = vector.broadcast %cst_97 : f32 to vector<8x8xf32>
    %216 = arith.mulf %214, %215 : vector<8x8xf32>
    %217 = vector.extract_strided_slice %147 {offsets = [0, 24], sizes = [10, 8], strides = [1, 1]} : vector<10x32xf32> to vector<10x8xf32>
    %218 = vector.extract_strided_slice %148 {offsets = [0, 24], sizes = [10, 8], strides = [1, 1]} : vector<10x32xf32> to vector<10x8xf32>
    %cst_98 = arith.constant dense<0.000000e+00> : vector<8x10xf32>
    %219 = tpu.matmul %216, %217, %cst_98 {dimension_numbers = #tpu.dot_dimension_numbers<[1], [1], [0], [0], [0, 0, 1, 0], [], []>} : vector<8x8xf32>, vector<10x8xf32>, vector<8x10xf32> -> vector<8x10xf32>
    %cst_99 = arith.constant dense<0xFF800000> : vector<8xf32>
    %220 = vector.multi_reduction <maximumf>, %219, %cst_99 [1] : vector<8x10xf32> to vector<8xf32>
    %221 = vector.shape_cast %220 : vector<8xf32> to vector<8x1xf32>
    %222 = vector.broadcast %221 : vector<8x1xf32> to vector<8x10xf32>
    %223 = arith.subf %219, %222 : vector<8x10xf32>
    %224 = math.exp %223 : vector<8x10xf32>
    %cst_100 = arith.constant dense<0.000000e+00> : vector<8xf32>
    %225 = vector.multi_reduction <add>, %224, %cst_100 [1] : vector<8x10xf32> to vector<8xf32>
    %226 = vector.shape_cast %225 : vector<8xf32> to vector<8x1xf32>
    %227 = tpu.reciprocal %226 {approx = true} : vector<8x1xf32> -> vector<8x1xf32>
    %228 = vector.broadcast %227 : vector<8x1xf32> to vector<8x10xf32>
    %229 = arith.mulf %224, %228 : vector<8x10xf32>
    %cst_101 = arith.constant dense<0.000000e+00> : vector<8x8xf32>
    %230 = tpu.matmul %229, %218, %cst_101 {dimension_numbers = #tpu.dot_dimension_numbers<[1], [0], [0], [1], [0, 0, 1, 1], [], []>} : vector<8x10xf32>, vector<10x8xf32>, vector<8x8xf32> -> vector<8x8xf32>
    %231 = vector.extract_strided_slice %150 {offsets = [24, 0], sizes = [8, 32], strides = [1, 1]} : vector<32x32xf32> to vector<8x32xf32>
    %cst_102 = arith.constant dense<0.000000e+00> : vector<8x32xf32>
    %232 = tpu.matmul %230, %231, %cst_102 {dimension_numbers = #tpu.dot_dimension_numbers<[1], [0], [0], [1], [0, 0, 1, 1], [], []>} : vector<8x8xf32>, vector<8x32xf32>, vector<8x32xf32> -> vector<8x32xf32>
    %233 = arith.addf %213, %232 : vector<8x32xf32>
    %234 = vector.broadcast %152 : vector<1x32xf32> to vector<8x32xf32>
    %235 = arith.addf %233, %234 : vector<8x32xf32>
    %236 = arith.addf %132, %235 : vector<8x32xf32>
    %cst_103 = arith.constant dense<0.000000e+00> : vector<8xf32>
    %237 = vector.multi_reduction <add>, %236, %cst_103 [1] : vector<8x32xf32> to vector<8xf32>
    %238 = vector.shape_cast %237 : vector<8xf32> to vector<8x1xf32>
    %cst_104 = arith.constant 3.200000e+01 : f32
    %239 = vector.broadcast %cst_104 : f32 to vector<8x1xf32>
    %240 = arith.divf %238, %239 : vector<8x1xf32>
    %241 = vector.broadcast %240 : vector<8x1xf32> to vector<8x32xf32>
    %242 = arith.subf %236, %241 : vector<8x32xf32>
    %243 = arith.mulf %242, %242 : vector<8x32xf32>
    %cst_105 = arith.constant dense<0.000000e+00> : vector<8xf32>
    %244 = vector.multi_reduction <add>, %243, %cst_105 [1] : vector<8x32xf32> to vector<8xf32>
    %245 = vector.shape_cast %244 : vector<8xf32> to vector<8x1xf32>
    %cst_106 = arith.constant 3.200000e+01 : f32
    %246 = vector.broadcast %cst_106 : f32 to vector<8x1xf32>
    %247 = arith.divf %245, %246 : vector<8x1xf32>
    %248 = vector.broadcast %240 : vector<8x1xf32> to vector<8x32xf32>
    %249 = arith.subf %236, %248 : vector<8x32xf32>
    %cst_107 = arith.constant 9.99999974E-6 : f32
    %250 = vector.broadcast %cst_107 : f32 to vector<8x1xf32>
    %251 = arith.addf %247, %250 : vector<8x1xf32>
    %252 = math.rsqrt %251 : vector<8x1xf32>
    %253 = vector.broadcast %252 : vector<8x1xf32> to vector<8x32xf32>
    %254 = arith.mulf %249, %253 : vector<8x32xf32>
    %255 = vector.broadcast %10 : vector<1x32xf32> to vector<8x32xf32>
    %256 = arith.mulf %254, %255 : vector<8x32xf32>
    %257 = vector.broadcast %12 : vector<1x32xf32> to vector<8x32xf32>
    %258 = arith.addf %256, %257 : vector<8x32xf32>
    %c0_108 = arith.constant 0 : index
    %c0_109 = arith.constant 0 : index
    %c0_110 = arith.constant 0 : index
    %259 = vector.load %arg21[%c0_108, %c0_109, %c0_110] : memref<2x32x64xf32, #tpu.memory_space<vmem>>, vector<1x32x64xf32>
    %260 = vector.shape_cast %259 : vector<1x32x64xf32> to vector<32x64xf32>
    %cst_111 = arith.constant dense<0.000000e+00> : vector<8x64xf32>
    %261 = tpu.matmul %258, %260, %cst_111 {dimension_numbers = #tpu.dot_dimension_numbers<[1], [0], [0], [1], [0, 0, 1, 1], [], []>} : vector<8x32xf32>, vector<32x64xf32>, vector<8x64xf32> -> vector<8x64xf32>
    %c0_112 = arith.constant 0 : index
    %c0_113 = arith.constant 0 : index
    %c0_114 = arith.constant 0 : index
    %262 = vector.load %arg22[%c0_112, %c0_113, %c0_114] : memref<2x1x64xf32, #tpu.memory_space<vmem>>, vector<1x1x64xf32>
    %263 = vector.shape_cast %262 : vector<1x1x64xf32> to vector<1x64xf32>
    %264 = vector.broadcast %263 : vector<1x64xf32> to vector<8x64xf32>
    %265 = arith.addf %261, %264 : vector<8x64xf32>
    %cst_115 = arith.constant 0.000000e+00 : f32
    %266 = vector.broadcast %cst_115 : f32 to vector<8x64xf32>
    %267 = arith.maximumf %265, %266 : vector<8x64xf32>
    %c0_116 = arith.constant 0 : index
    %c0_117 = arith.constant 0 : index
    %c0_118 = arith.constant 0 : index
    %268 = vector.load %arg23[%c0_116, %c0_117, %c0_118] : memref<2x64x32xf32, #tpu.memory_space<vmem>>, vector<1x64x32xf32>
    %269 = vector.shape_cast %268 : vector<1x64x32xf32> to vector<64x32xf32>
    %cst_119 = arith.constant dense<0.000000e+00> : vector<8x32xf32>
    %270 = tpu.matmul %267, %269, %cst_119 {dimension_numbers = #tpu.dot_dimension_numbers<[1], [0], [0], [1], [0, 0, 1, 1], [], []>} : vector<8x64xf32>, vector<64x32xf32>, vector<8x32xf32> -> vector<8x32xf32>
    %c0_120 = arith.constant 0 : index
    %c0_121 = arith.constant 0 : index
    %c0_122 = arith.constant 0 : index
    %271 = vector.load %arg24[%c0_120, %c0_121, %c0_122] : memref<2x1x32xf32, #tpu.memory_space<vmem>>, vector<1x1x32xf32>
    %272 = vector.shape_cast %271 : vector<1x1x32xf32> to vector<1x32xf32>
    %273 = vector.broadcast %272 : vector<1x32xf32> to vector<8x32xf32>
    %274 = arith.addf %270, %273 : vector<8x32xf32>
    %275 = arith.addf %258, %274 : vector<8x32xf32>
    %cst_123 = arith.constant dense<0.000000e+00> : vector<8xf32>
    %276 = vector.multi_reduction <add>, %275, %cst_123 [1] : vector<8x32xf32> to vector<8xf32>
    %277 = vector.shape_cast %276 : vector<8xf32> to vector<8x1xf32>
    %cst_124 = arith.constant 3.200000e+01 : f32
    %278 = vector.broadcast %cst_124 : f32 to vector<8x1xf32>
    %279 = arith.divf %277, %278 : vector<8x1xf32>
    %280 = vector.broadcast %279 : vector<8x1xf32> to vector<8x32xf32>
    %281 = arith.subf %275, %280 : vector<8x32xf32>
    %282 = arith.mulf %281, %281 : vector<8x32xf32>
    %cst_125 = arith.constant dense<0.000000e+00> : vector<8xf32>
    %283 = vector.multi_reduction <add>, %282, %cst_125 [1] : vector<8x32xf32> to vector<8xf32>
    %284 = vector.shape_cast %283 : vector<8xf32> to vector<8x1xf32>
    %cst_126 = arith.constant 3.200000e+01 : f32
    %285 = vector.broadcast %cst_126 : f32 to vector<8x1xf32>
    %286 = arith.divf %284, %285 : vector<8x1xf32>
    %287 = vector.broadcast %279 : vector<8x1xf32> to vector<8x32xf32>
    %288 = arith.subf %275, %287 : vector<8x32xf32>
    %cst_127 = arith.constant 9.99999974E-6 : f32
    %289 = vector.broadcast %cst_127 : f32 to vector<8x1xf32>
    %290 = arith.addf %286, %289 : vector<8x1xf32>
    %291 = math.rsqrt %290 : vector<8x1xf32>
    %292 = vector.broadcast %291 : vector<8x1xf32> to vector<8x32xf32>
    %293 = arith.mulf %288, %292 : vector<8x32xf32>
    %294 = vector.broadcast %10 : vector<1x32xf32> to vector<8x32xf32>
    %295 = arith.mulf %293, %294 : vector<8x32xf32>
    %296 = vector.broadcast %12 : vector<1x32xf32> to vector<8x32xf32>
    %297 = arith.addf %295, %296 : vector<8x32xf32>
    %c1 = arith.constant 1 : index
    %c0_128 = arith.constant 0 : index
    %c0_129 = arith.constant 0 : index
    %298 = vector.load %arg19[%c1, %c0_128, %c0_129] : memref<2x1x32xf32, #tpu.memory_space<vmem>>, vector<1x1x32xf32>
    %299 = vector.shape_cast %298 : vector<1x1x32xf32> to vector<1x32xf32>
    %c1_130 = arith.constant 1 : index
    %c0_131 = arith.constant 0 : index
    %c0_132 = arith.constant 0 : index
    %300 = vector.load %arg20[%c1_130, %c0_131, %c0_132] : memref<2x1x32xf32, #tpu.memory_space<vmem>>, vector<1x1x32xf32>
    %301 = vector.shape_cast %300 : vector<1x1x32xf32> to vector<1x32xf32>
    %c1_133 = arith.constant 1 : index
    %c0_134 = arith.constant 0 : index
    %c0_135 = arith.constant 0 : index
    %302 = vector.load %arg9[%c1_133, %c0_134, %c0_135] : memref<2x32x96xf32, #tpu.memory_space<vmem>>, vector<1x32x96xf32>
    %303 = vector.shape_cast %302 : vector<1x32x96xf32> to vector<32x96xf32>
    %cst_136 = arith.constant dense<0.000000e+00> : vector<8x96xf32>
    %304 = tpu.matmul %297, %303, %cst_136 {dimension_numbers = #tpu.dot_dimension_numbers<[1], [0], [0], [1], [0, 0, 1, 1], [], []>} : vector<8x32xf32>, vector<32x96xf32>, vector<8x96xf32> -> vector<8x96xf32>
    %c1_137 = arith.constant 1 : index
    %c0_138 = arith.constant 0 : index
    %c0_139 = arith.constant 0 : index
    %305 = vector.load %arg10[%c1_137, %c0_138, %c0_139] : memref<2x1x96xf32, #tpu.memory_space<vmem>>, vector<1x1x96xf32>
    %306 = vector.shape_cast %305 : vector<1x1x96xf32> to vector<1x96xf32>
    %307 = vector.broadcast %306 : vector<1x96xf32> to vector<8x96xf32>
    %308 = arith.addf %304, %307 : vector<8x96xf32>
    %309 = vector.extract_strided_slice %308 {offsets = [0, 0], sizes = [8, 32], strides = [1, 1]} : vector<8x96xf32> to vector<8x32xf32>
    %310 = vector.extract_strided_slice %308 {offsets = [0, 32], sizes = [8, 32], strides = [1, 1]} : vector<8x96xf32> to vector<8x32xf32>
    %311 = vector.extract_strided_slice %308 {offsets = [0, 64], sizes = [8, 32], strides = [1, 1]} : vector<8x96xf32> to vector<8x32xf32>
    %c1_140 = arith.constant 1 : index
    %c0_141 = arith.constant 0 : index
    %c0_142 = arith.constant 0 : index
    %312 = vector.load %arg11[%c1_140, %c0_141, %c0_142] : memref<2x32x32xf32, #tpu.memory_space<vmem>>, vector<1x32x32xf32>
    %313 = vector.shape_cast %312 : vector<1x32x32xf32> to vector<32x32xf32>
    %c1_143 = arith.constant 1 : index
    %c0_144 = arith.constant 0 : index
    %c0_145 = arith.constant 0 : index
    %314 = vector.load %arg12[%c1_143, %c0_144, %c0_145] : memref<2x1x32xf32, #tpu.memory_space<vmem>>, vector<1x1x32xf32>
    %315 = vector.shape_cast %314 : vector<1x1x32xf32> to vector<1x32xf32>
    %cst_146 = arith.constant 0.000000e+00 : f32
    %316 = vector.broadcast %cst_146 : f32 to vector<8x32xf32>
    %317 = vector.extract_strided_slice %309 {offsets = [0, 0], sizes = [8, 8], strides = [1, 1]} : vector<8x32xf32> to vector<8x8xf32>
    %cst_147 = arith.constant 0.353553385 : f32
    %318 = vector.broadcast %cst_147 : f32 to vector<8x8xf32>
    %319 = arith.mulf %317, %318 : vector<8x8xf32>
    %320 = vector.extract_strided_slice %310 {offsets = [0, 0], sizes = [8, 8], strides = [1, 1]} : vector<8x32xf32> to vector<8x8xf32>
    %321 = vector.extract_strided_slice %311 {offsets = [0, 0], sizes = [8, 8], strides = [1, 1]} : vector<8x32xf32> to vector<8x8xf32>
    %cst_148 = arith.constant dense<0.000000e+00> : vector<8x8xf32>
    %322 = tpu.matmul %319, %320, %cst_148 {dimension_numbers = #tpu.dot_dimension_numbers<[1], [1], [0], [0], [0, 0, 1, 0], [], []>} : vector<8x8xf32>, vector<8x8xf32>, vector<8x8xf32> -> vector<8x8xf32>
    %cst_149 = arith.constant dense<0xFF800000> : vector<8xf32>
    %323 = vector.multi_reduction <maximumf>, %322, %cst_149 [1] : vector<8x8xf32> to vector<8xf32>
    %324 = vector.shape_cast %323 : vector<8xf32> to vector<8x1xf32>
    %325 = vector.broadcast %324 : vector<8x1xf32> to vector<8x8xf32>
    %326 = arith.subf %322, %325 : vector<8x8xf32>
    %327 = math.exp %326 : vector<8x8xf32>
    %cst_150 = arith.constant dense<0.000000e+00> : vector<8xf32>
    %328 = vector.multi_reduction <add>, %327, %cst_150 [1] : vector<8x8xf32> to vector<8xf32>
    %329 = vector.shape_cast %328 : vector<8xf32> to vector<8x1xf32>
    %330 = tpu.reciprocal %329 {approx = true} : vector<8x1xf32> -> vector<8x1xf32>
    %331 = vector.broadcast %330 : vector<8x1xf32> to vector<8x8xf32>
    %332 = arith.mulf %327, %331 : vector<8x8xf32>
    %cst_151 = arith.constant dense<0.000000e+00> : vector<8x8xf32>
    %333 = tpu.matmul %332, %321, %cst_151 {dimension_numbers = #tpu.dot_dimension_numbers<[1], [0], [0], [1], [0, 0, 1, 1], [], []>} : vector<8x8xf32>, vector<8x8xf32>, vector<8x8xf32> -> vector<8x8xf32>
    %334 = vector.extract_strided_slice %313 {offsets = [0, 0], sizes = [8, 32], strides = [1, 1]} : vector<32x32xf32> to vector<8x32xf32>
    %cst_152 = arith.constant dense<0.000000e+00> : vector<8x32xf32>
    %335 = tpu.matmul %333, %334, %cst_152 {dimension_numbers = #tpu.dot_dimension_numbers<[1], [0], [0], [1], [0, 0, 1, 1], [], []>} : vector<8x8xf32>, vector<8x32xf32>, vector<8x32xf32> -> vector<8x32xf32>
    %336 = arith.addf %316, %335 : vector<8x32xf32>
    %337 = vector.extract_strided_slice %309 {offsets = [0, 8], sizes = [8, 8], strides = [1, 1]} : vector<8x32xf32> to vector<8x8xf32>
    %cst_153 = arith.constant 0.353553385 : f32
    %338 = vector.broadcast %cst_153 : f32 to vector<8x8xf32>
    %339 = arith.mulf %337, %338 : vector<8x8xf32>
    %340 = vector.extract_strided_slice %310 {offsets = [0, 8], sizes = [8, 8], strides = [1, 1]} : vector<8x32xf32> to vector<8x8xf32>
    %341 = vector.extract_strided_slice %311 {offsets = [0, 8], sizes = [8, 8], strides = [1, 1]} : vector<8x32xf32> to vector<8x8xf32>
    %cst_154 = arith.constant dense<0.000000e+00> : vector<8x8xf32>
    %342 = tpu.matmul %339, %340, %cst_154 {dimension_numbers = #tpu.dot_dimension_numbers<[1], [1], [0], [0], [0, 0, 1, 0], [], []>} : vector<8x8xf32>, vector<8x8xf32>, vector<8x8xf32> -> vector<8x8xf32>
    %cst_155 = arith.constant dense<0xFF800000> : vector<8xf32>
    %343 = vector.multi_reduction <maximumf>, %342, %cst_155 [1] : vector<8x8xf32> to vector<8xf32>
    %344 = vector.shape_cast %343 : vector<8xf32> to vector<8x1xf32>
    %345 = vector.broadcast %344 : vector<8x1xf32> to vector<8x8xf32>
    %346 = arith.subf %342, %345 : vector<8x8xf32>
    %347 = math.exp %346 : vector<8x8xf32>
    %cst_156 = arith.constant dense<0.000000e+00> : vector<8xf32>
    %348 = vector.multi_reduction <add>, %347, %cst_156 [1] : vector<8x8xf32> to vector<8xf32>
    %349 = vector.shape_cast %348 : vector<8xf32> to vector<8x1xf32>
    %350 = tpu.reciprocal %349 {approx = true} : vector<8x1xf32> -> vector<8x1xf32>
    %351 = vector.broadcast %350 : vector<8x1xf32> to vector<8x8xf32>
    %352 = arith.mulf %347, %351 : vector<8x8xf32>
    %cst_157 = arith.constant dense<0.000000e+00> : vector<8x8xf32>
    %353 = tpu.matmul %352, %341, %cst_157 {dimension_numbers = #tpu.dot_dimension_numbers<[1], [0], [0], [1], [0, 0, 1, 1], [], []>} : vector<8x8xf32>, vector<8x8xf32>, vector<8x8xf32> -> vector<8x8xf32>
    %354 = vector.extract_strided_slice %313 {offsets = [8, 0], sizes = [8, 32], strides = [1, 1]} : vector<32x32xf32> to vector<8x32xf32>
    %cst_158 = arith.constant dense<0.000000e+00> : vector<8x32xf32>
    %355 = tpu.matmul %353, %354, %cst_158 {dimension_numbers = #tpu.dot_dimension_numbers<[1], [0], [0], [1], [0, 0, 1, 1], [], []>} : vector<8x8xf32>, vector<8x32xf32>, vector<8x32xf32> -> vector<8x32xf32>
    %356 = arith.addf %336, %355 : vector<8x32xf32>
    %357 = vector.extract_strided_slice %309 {offsets = [0, 16], sizes = [8, 8], strides = [1, 1]} : vector<8x32xf32> to vector<8x8xf32>
    %cst_159 = arith.constant 0.353553385 : f32
    %358 = vector.broadcast %cst_159 : f32 to vector<8x8xf32>
    %359 = arith.mulf %357, %358 : vector<8x8xf32>
    %360 = vector.extract_strided_slice %310 {offsets = [0, 16], sizes = [8, 8], strides = [1, 1]} : vector<8x32xf32> to vector<8x8xf32>
    %361 = vector.extract_strided_slice %311 {offsets = [0, 16], sizes = [8, 8], strides = [1, 1]} : vector<8x32xf32> to vector<8x8xf32>
    %cst_160 = arith.constant dense<0.000000e+00> : vector<8x8xf32>
    %362 = tpu.matmul %359, %360, %cst_160 {dimension_numbers = #tpu.dot_dimension_numbers<[1], [1], [0], [0], [0, 0, 1, 0], [], []>} : vector<8x8xf32>, vector<8x8xf32>, vector<8x8xf32> -> vector<8x8xf32>
    %cst_161 = arith.constant dense<0xFF800000> : vector<8xf32>
    %363 = vector.multi_reduction <maximumf>, %362, %cst_161 [1] : vector<8x8xf32> to vector<8xf32>
    %364 = vector.shape_cast %363 : vector<8xf32> to vector<8x1xf32>
    %365 = vector.broadcast %364 : vector<8x1xf32> to vector<8x8xf32>
    %366 = arith.subf %362, %365 : vector<8x8xf32>
    %367 = math.exp %366 : vector<8x8xf32>
    %cst_162 = arith.constant dense<0.000000e+00> : vector<8xf32>
    %368 = vector.multi_reduction <add>, %367, %cst_162 [1] : vector<8x8xf32> to vector<8xf32>
    %369 = vector.shape_cast %368 : vector<8xf32> to vector<8x1xf32>
    %370 = tpu.reciprocal %369 {approx = true} : vector<8x1xf32> -> vector<8x1xf32>
    %371 = vector.broadcast %370 : vector<8x1xf32> to vector<8x8xf32>
    %372 = arith.mulf %367, %371 : vector<8x8xf32>
    %cst_163 = arith.constant dense<0.000000e+00> : vector<8x8xf32>
    %373 = tpu.matmul %372, %361, %cst_163 {dimension_numbers = #tpu.dot_dimension_numbers<[1], [0], [0], [1], [0, 0, 1, 1], [], []>} : vector<8x8xf32>, vector<8x8xf32>, vector<8x8xf32> -> vector<8x8xf32>
    %374 = vector.extract_strided_slice %313 {offsets = [16, 0], sizes = [8, 32], strides = [1, 1]} : vector<32x32xf32> to vector<8x32xf32>
    %cst_164 = arith.constant dense<0.000000e+00> : vector<8x32xf32>
    %375 = tpu.matmul %373, %374, %cst_164 {dimension_numbers = #tpu.dot_dimension_numbers<[1], [0], [0], [1], [0, 0, 1, 1], [], []>} : vector<8x8xf32>, vector<8x32xf32>, vector<8x32xf32> -> vector<8x32xf32>
    %376 = arith.addf %356, %375 : vector<8x32xf32>
    %377 = vector.extract_strided_slice %309 {offsets = [0, 24], sizes = [8, 8], strides = [1, 1]} : vector<8x32xf32> to vector<8x8xf32>
    %cst_165 = arith.constant 0.353553385 : f32
    %378 = vector.broadcast %cst_165 : f32 to vector<8x8xf32>
    %379 = arith.mulf %377, %378 : vector<8x8xf32>
    %380 = vector.extract_strided_slice %310 {offsets = [0, 24], sizes = [8, 8], strides = [1, 1]} : vector<8x32xf32> to vector<8x8xf32>
    %381 = vector.extract_strided_slice %311 {offsets = [0, 24], sizes = [8, 8], strides = [1, 1]} : vector<8x32xf32> to vector<8x8xf32>
    %cst_166 = arith.constant dense<0.000000e+00> : vector<8x8xf32>
    %382 = tpu.matmul %379, %380, %cst_166 {dimension_numbers = #tpu.dot_dimension_numbers<[1], [1], [0], [0], [0, 0, 1, 0], [], []>} : vector<8x8xf32>, vector<8x8xf32>, vector<8x8xf32> -> vector<8x8xf32>
    %cst_167 = arith.constant dense<0xFF800000> : vector<8xf32>
    %383 = vector.multi_reduction <maximumf>, %382, %cst_167 [1] : vector<8x8xf32> to vector<8xf32>
    %384 = vector.shape_cast %383 : vector<8xf32> to vector<8x1xf32>
    %385 = vector.broadcast %384 : vector<8x1xf32> to vector<8x8xf32>
    %386 = arith.subf %382, %385 : vector<8x8xf32>
    %387 = math.exp %386 : vector<8x8xf32>
    %cst_168 = arith.constant dense<0.000000e+00> : vector<8xf32>
    %388 = vector.multi_reduction <add>, %387, %cst_168 [1] : vector<8x8xf32> to vector<8xf32>
    %389 = vector.shape_cast %388 : vector<8xf32> to vector<8x1xf32>
    %390 = tpu.reciprocal %389 {approx = true} : vector<8x1xf32> -> vector<8x1xf32>
    %391 = vector.broadcast %390 : vector<8x1xf32> to vector<8x8xf32>
    %392 = arith.mulf %387, %391 : vector<8x8xf32>
    %cst_169 = arith.constant dense<0.000000e+00> : vector<8x8xf32>
    %393 = tpu.matmul %392, %381, %cst_169 {dimension_numbers = #tpu.dot_dimension_numbers<[1], [0], [0], [1], [0, 0, 1, 1], [], []>} : vector<8x8xf32>, vector<8x8xf32>, vector<8x8xf32> -> vector<8x8xf32>
    %394 = vector.extract_strided_slice %313 {offsets = [24, 0], sizes = [8, 32], strides = [1, 1]} : vector<32x32xf32> to vector<8x32xf32>
    %cst_170 = arith.constant dense<0.000000e+00> : vector<8x32xf32>
    %395 = tpu.matmul %393, %394, %cst_170 {dimension_numbers = #tpu.dot_dimension_numbers<[1], [0], [0], [1], [0, 0, 1, 1], [], []>} : vector<8x8xf32>, vector<8x32xf32>, vector<8x32xf32> -> vector<8x32xf32>
    %396 = arith.addf %376, %395 : vector<8x32xf32>
    %397 = vector.broadcast %315 : vector<1x32xf32> to vector<8x32xf32>
    %398 = arith.addf %396, %397 : vector<8x32xf32>
    %399 = arith.addf %297, %398 : vector<8x32xf32>
    %cst_171 = arith.constant dense<0.000000e+00> : vector<8xf32>
    %400 = vector.multi_reduction <add>, %399, %cst_171 [1] : vector<8x32xf32> to vector<8xf32>
    %401 = vector.shape_cast %400 : vector<8xf32> to vector<8x1xf32>
    %cst_172 = arith.constant 3.200000e+01 : f32
    %402 = vector.broadcast %cst_172 : f32 to vector<8x1xf32>
    %403 = arith.divf %401, %402 : vector<8x1xf32>
    %404 = vector.broadcast %403 : vector<8x1xf32> to vector<8x32xf32>
    %405 = arith.subf %399, %404 : vector<8x32xf32>
    %406 = arith.mulf %405, %405 : vector<8x32xf32>
    %cst_173 = arith.constant dense<0.000000e+00> : vector<8xf32>
    %407 = vector.multi_reduction <add>, %406, %cst_173 [1] : vector<8x32xf32> to vector<8xf32>
    %408 = vector.shape_cast %407 : vector<8xf32> to vector<8x1xf32>
    %cst_174 = arith.constant 3.200000e+01 : f32
    %409 = vector.broadcast %cst_174 : f32 to vector<8x1xf32>
    %410 = arith.divf %408, %409 : vector<8x1xf32>
    %411 = vector.broadcast %403 : vector<8x1xf32> to vector<8x32xf32>
    %412 = arith.subf %399, %411 : vector<8x32xf32>
    %cst_175 = arith.constant 9.99999974E-6 : f32
    %413 = vector.broadcast %cst_175 : f32 to vector<8x1xf32>
    %414 = arith.addf %410, %413 : vector<8x1xf32>
    %415 = math.rsqrt %414 : vector<8x1xf32>
    %416 = vector.broadcast %415 : vector<8x1xf32> to vector<8x32xf32>
    %417 = arith.mulf %412, %416 : vector<8x32xf32>
    %418 = vector.broadcast %299 : vector<1x32xf32> to vector<8x32xf32>
    %419 = arith.mulf %417, %418 : vector<8x32xf32>
    %420 = vector.broadcast %301 : vector<1x32xf32> to vector<8x32xf32>
    %421 = arith.addf %419, %420 : vector<8x32xf32>
    %c1_176 = arith.constant 1 : index
    %c0_177 = arith.constant 0 : index
    %c0_178 = arith.constant 0 : index
    %422 = vector.load %arg13[%c1_176, %c0_177, %c0_178] : memref<2x32x32xf32, #tpu.memory_space<vmem>>, vector<1x32x32xf32>
    %423 = vector.shape_cast %422 : vector<1x32x32xf32> to vector<32x32xf32>
    %cst_179 = arith.constant dense<0.000000e+00> : vector<8x32xf32>
    %424 = tpu.matmul %421, %423, %cst_179 {dimension_numbers = #tpu.dot_dimension_numbers<[1], [0], [0], [1], [0, 0, 1, 1], [], []>} : vector<8x32xf32>, vector<32x32xf32>, vector<8x32xf32> -> vector<8x32xf32>
    %c1_180 = arith.constant 1 : index
    %c0_181 = arith.constant 0 : index
    %c0_182 = arith.constant 0 : index
    %425 = vector.load %arg14[%c1_180, %c0_181, %c0_182] : memref<2x1x32xf32, #tpu.memory_space<vmem>>, vector<1x1x32xf32>
    %426 = vector.shape_cast %425 : vector<1x1x32xf32> to vector<1x32xf32>
    %427 = vector.broadcast %426 : vector<1x32xf32> to vector<8x32xf32>
    %428 = arith.addf %424, %427 : vector<8x32xf32>
    %c1_183 = arith.constant 1 : index
    %c0_184 = arith.constant 0 : index
    %c0_185 = arith.constant 0 : index
    %429 = vector.load %arg15[%c1_183, %c0_184, %c0_185] : memref<2x32x64xf32, #tpu.memory_space<vmem>>, vector<1x32x64xf32>
    %430 = vector.shape_cast %429 : vector<1x32x64xf32> to vector<32x64xf32>
    %cst_186 = arith.constant dense<0.000000e+00> : vector<10x64xf32>
    %431 = tpu.matmul %3, %430, %cst_186 {dimension_numbers = #tpu.dot_dimension_numbers<[1], [0], [0], [1], [0, 0, 1, 1], [], []>} : vector<10x32xf32>, vector<32x64xf32>, vector<10x64xf32> -> vector<10x64xf32>
    %c1_187 = arith.constant 1 : index
    %c0_188 = arith.constant 0 : index
    %c0_189 = arith.constant 0 : index
    %432 = vector.load %arg16[%c1_187, %c0_188, %c0_189] : memref<2x1x64xf32, #tpu.memory_space<vmem>>, vector<1x1x64xf32>
    %433 = vector.shape_cast %432 : vector<1x1x64xf32> to vector<1x64xf32>
    %434 = vector.broadcast %433 : vector<1x64xf32> to vector<10x64xf32>
    %435 = arith.addf %431, %434 : vector<10x64xf32>
    %436 = vector.extract_strided_slice %435 {offsets = [0, 0], sizes = [10, 32], strides = [1, 1]} : vector<10x64xf32> to vector<10x32xf32>
    %437 = vector.extract_strided_slice %435 {offsets = [0, 32], sizes = [10, 32], strides = [1, 1]} : vector<10x64xf32> to vector<10x32xf32>
    %c1_190 = arith.constant 1 : index
    %c0_191 = arith.constant 0 : index
    %c0_192 = arith.constant 0 : index
    %438 = vector.load %arg17[%c1_190, %c0_191, %c0_192] : memref<2x32x32xf32, #tpu.memory_space<vmem>>, vector<1x32x32xf32>
    %439 = vector.shape_cast %438 : vector<1x32x32xf32> to vector<32x32xf32>
    %c1_193 = arith.constant 1 : index
    %c0_194 = arith.constant 0 : index
    %c0_195 = arith.constant 0 : index
    %440 = vector.load %arg18[%c1_193, %c0_194, %c0_195] : memref<2x1x32xf32, #tpu.memory_space<vmem>>, vector<1x1x32xf32>
    %441 = vector.shape_cast %440 : vector<1x1x32xf32> to vector<1x32xf32>
    %cst_196 = arith.constant 0.000000e+00 : f32
    %442 = vector.broadcast %cst_196 : f32 to vector<8x32xf32>
    %443 = vector.extract_strided_slice %428 {offsets = [0, 0], sizes = [8, 8], strides = [1, 1]} : vector<8x32xf32> to vector<8x8xf32>
    %cst_197 = arith.constant 0.353553385 : f32
    %444 = vector.broadcast %cst_197 : f32 to vector<8x8xf32>
    %445 = arith.mulf %443, %444 : vector<8x8xf32>
    %446 = vector.extract_strided_slice %436 {offsets = [0, 0], sizes = [10, 8], strides = [1, 1]} : vector<10x32xf32> to vector<10x8xf32>
    %447 = vector.extract_strided_slice %437 {offsets = [0, 0], sizes = [10, 8], strides = [1, 1]} : vector<10x32xf32> to vector<10x8xf32>
    %cst_198 = arith.constant dense<0.000000e+00> : vector<8x10xf32>
    %448 = tpu.matmul %445, %446, %cst_198 {dimension_numbers = #tpu.dot_dimension_numbers<[1], [1], [0], [0], [0, 0, 1, 0], [], []>} : vector<8x8xf32>, vector<10x8xf32>, vector<8x10xf32> -> vector<8x10xf32>
    %cst_199 = arith.constant dense<0xFF800000> : vector<8xf32>
    %449 = vector.multi_reduction <maximumf>, %448, %cst_199 [1] : vector<8x10xf32> to vector<8xf32>
    %450 = vector.shape_cast %449 : vector<8xf32> to vector<8x1xf32>
    %451 = vector.broadcast %450 : vector<8x1xf32> to vector<8x10xf32>
    %452 = arith.subf %448, %451 : vector<8x10xf32>
    %453 = math.exp %452 : vector<8x10xf32>
    %cst_200 = arith.constant dense<0.000000e+00> : vector<8xf32>
    %454 = vector.multi_reduction <add>, %453, %cst_200 [1] : vector<8x10xf32> to vector<8xf32>
    %455 = vector.shape_cast %454 : vector<8xf32> to vector<8x1xf32>
    %456 = tpu.reciprocal %455 {approx = true} : vector<8x1xf32> -> vector<8x1xf32>
    %457 = vector.broadcast %456 : vector<8x1xf32> to vector<8x10xf32>
    %458 = arith.mulf %453, %457 : vector<8x10xf32>
    %cst_201 = arith.constant dense<0.000000e+00> : vector<8x8xf32>
    %459 = tpu.matmul %458, %447, %cst_201 {dimension_numbers = #tpu.dot_dimension_numbers<[1], [0], [0], [1], [0, 0, 1, 1], [], []>} : vector<8x10xf32>, vector<10x8xf32>, vector<8x8xf32> -> vector<8x8xf32>
    %460 = vector.extract_strided_slice %439 {offsets = [0, 0], sizes = [8, 32], strides = [1, 1]} : vector<32x32xf32> to vector<8x32xf32>
    %cst_202 = arith.constant dense<0.000000e+00> : vector<8x32xf32>
    %461 = tpu.matmul %459, %460, %cst_202 {dimension_numbers = #tpu.dot_dimension_numbers<[1], [0], [0], [1], [0, 0, 1, 1], [], []>} : vector<8x8xf32>, vector<8x32xf32>, vector<8x32xf32> -> vector<8x32xf32>
    %462 = arith.addf %442, %461 : vector<8x32xf32>
    %463 = vector.extract_strided_slice %428 {offsets = [0, 8], sizes = [8, 8], strides = [1, 1]} : vector<8x32xf32> to vector<8x8xf32>
    %cst_203 = arith.constant 0.353553385 : f32
    %464 = vector.broadcast %cst_203 : f32 to vector<8x8xf32>
    %465 = arith.mulf %463, %464 : vector<8x8xf32>
    %466 = vector.extract_strided_slice %436 {offsets = [0, 8], sizes = [10, 8], strides = [1, 1]} : vector<10x32xf32> to vector<10x8xf32>
    %467 = vector.extract_strided_slice %437 {offsets = [0, 8], sizes = [10, 8], strides = [1, 1]} : vector<10x32xf32> to vector<10x8xf32>
    %cst_204 = arith.constant dense<0.000000e+00> : vector<8x10xf32>
    %468 = tpu.matmul %465, %466, %cst_204 {dimension_numbers = #tpu.dot_dimension_numbers<[1], [1], [0], [0], [0, 0, 1, 0], [], []>} : vector<8x8xf32>, vector<10x8xf32>, vector<8x10xf32> -> vector<8x10xf32>
    %cst_205 = arith.constant dense<0xFF800000> : vector<8xf32>
    %469 = vector.multi_reduction <maximumf>, %468, %cst_205 [1] : vector<8x10xf32> to vector<8xf32>
    %470 = vector.shape_cast %469 : vector<8xf32> to vector<8x1xf32>
    %471 = vector.broadcast %470 : vector<8x1xf32> to vector<8x10xf32>
    %472 = arith.subf %468, %471 : vector<8x10xf32>
    %473 = math.exp %472 : vector<8x10xf32>
    %cst_206 = arith.constant dense<0.000000e+00> : vector<8xf32>
    %474 = vector.multi_reduction <add>, %473, %cst_206 [1] : vector<8x10xf32> to vector<8xf32>
    %475 = vector.shape_cast %474 : vector<8xf32> to vector<8x1xf32>
    %476 = tpu.reciprocal %475 {approx = true} : vector<8x1xf32> -> vector<8x1xf32>
    %477 = vector.broadcast %476 : vector<8x1xf32> to vector<8x10xf32>
    %478 = arith.mulf %473, %477 : vector<8x10xf32>
    %cst_207 = arith.constant dense<0.000000e+00> : vector<8x8xf32>
    %479 = tpu.matmul %478, %467, %cst_207 {dimension_numbers = #tpu.dot_dimension_numbers<[1], [0], [0], [1], [0, 0, 1, 1], [], []>} : vector<8x10xf32>, vector<10x8xf32>, vector<8x8xf32> -> vector<8x8xf32>
    %480 = vector.extract_strided_slice %439 {offsets = [8, 0], sizes = [8, 32], strides = [1, 1]} : vector<32x32xf32> to vector<8x32xf32>
    %cst_208 = arith.constant dense<0.000000e+00> : vector<8x32xf32>
    %481 = tpu.matmul %479, %480, %cst_208 {dimension_numbers = #tpu.dot_dimension_numbers<[1], [0], [0], [1], [0, 0, 1, 1], [], []>} : vector<8x8xf32>, vector<8x32xf32>, vector<8x32xf32> -> vector<8x32xf32>
    %482 = arith.addf %462, %481 : vector<8x32xf32>
    %483 = vector.extract_strided_slice %428 {offsets = [0, 16], sizes = [8, 8], strides = [1, 1]} : vector<8x32xf32> to vector<8x8xf32>
    %cst_209 = arith.constant 0.353553385 : f32
    %484 = vector.broadcast %cst_209 : f32 to vector<8x8xf32>
    %485 = arith.mulf %483, %484 : vector<8x8xf32>
    %486 = vector.extract_strided_slice %436 {offsets = [0, 16], sizes = [10, 8], strides = [1, 1]} : vector<10x32xf32> to vector<10x8xf32>
    %487 = vector.extract_strided_slice %437 {offsets = [0, 16], sizes = [10, 8], strides = [1, 1]} : vector<10x32xf32> to vector<10x8xf32>
    %cst_210 = arith.constant dense<0.000000e+00> : vector<8x10xf32>
    %488 = tpu.matmul %485, %486, %cst_210 {dimension_numbers = #tpu.dot_dimension_numbers<[1], [1], [0], [0], [0, 0, 1, 0], [], []>} : vector<8x8xf32>, vector<10x8xf32>, vector<8x10xf32> -> vector<8x10xf32>
    %cst_211 = arith.constant dense<0xFF800000> : vector<8xf32>
    %489 = vector.multi_reduction <maximumf>, %488, %cst_211 [1] : vector<8x10xf32> to vector<8xf32>
    %490 = vector.shape_cast %489 : vector<8xf32> to vector<8x1xf32>
    %491 = vector.broadcast %490 : vector<8x1xf32> to vector<8x10xf32>
    %492 = arith.subf %488, %491 : vector<8x10xf32>
    %493 = math.exp %492 : vector<8x10xf32>
    %cst_212 = arith.constant dense<0.000000e+00> : vector<8xf32>
    %494 = vector.multi_reduction <add>, %493, %cst_212 [1] : vector<8x10xf32> to vector<8xf32>
    %495 = vector.shape_cast %494 : vector<8xf32> to vector<8x1xf32>
    %496 = tpu.reciprocal %495 {approx = true} : vector<8x1xf32> -> vector<8x1xf32>
    %497 = vector.broadcast %496 : vector<8x1xf32> to vector<8x10xf32>
    %498 = arith.mulf %493, %497 : vector<8x10xf32>
    %cst_213 = arith.constant dense<0.000000e+00> : vector<8x8xf32>
    %499 = tpu.matmul %498, %487, %cst_213 {dimension_numbers = #tpu.dot_dimension_numbers<[1], [0], [0], [1], [0, 0, 1, 1], [], []>} : vector<8x10xf32>, vector<10x8xf32>, vector<8x8xf32> -> vector<8x8xf32>
    %500 = vector.extract_strided_slice %439 {offsets = [16, 0], sizes = [8, 32], strides = [1, 1]} : vector<32x32xf32> to vector<8x32xf32>
    %cst_214 = arith.constant dense<0.000000e+00> : vector<8x32xf32>
    %501 = tpu.matmul %499, %500, %cst_214 {dimension_numbers = #tpu.dot_dimension_numbers<[1], [0], [0], [1], [0, 0, 1, 1], [], []>} : vector<8x8xf32>, vector<8x32xf32>, vector<8x32xf32> -> vector<8x32xf32>
    %502 = arith.addf %482, %501 : vector<8x32xf32>
    %503 = vector.extract_strided_slice %428 {offsets = [0, 24], sizes = [8, 8], strides = [1, 1]} : vector<8x32xf32> to vector<8x8xf32>
    %cst_215 = arith.constant 0.353553385 : f32
    %504 = vector.broadcast %cst_215 : f32 to vector<8x8xf32>
    %505 = arith.mulf %503, %504 : vector<8x8xf32>
    %506 = vector.extract_strided_slice %436 {offsets = [0, 24], sizes = [10, 8], strides = [1, 1]} : vector<10x32xf32> to vector<10x8xf32>
    %507 = vector.extract_strided_slice %437 {offsets = [0, 24], sizes = [10, 8], strides = [1, 1]} : vector<10x32xf32> to vector<10x8xf32>
    %cst_216 = arith.constant dense<0.000000e+00> : vector<8x10xf32>
    %508 = tpu.matmul %505, %506, %cst_216 {dimension_numbers = #tpu.dot_dimension_numbers<[1], [1], [0], [0], [0, 0, 1, 0], [], []>} : vector<8x8xf32>, vector<10x8xf32>, vector<8x10xf32> -> vector<8x10xf32>
    %cst_217 = arith.constant dense<0xFF800000> : vector<8xf32>
    %509 = vector.multi_reduction <maximumf>, %508, %cst_217 [1] : vector<8x10xf32> to vector<8xf32>
    %510 = vector.shape_cast %509 : vector<8xf32> to vector<8x1xf32>
    %511 = vector.broadcast %510 : vector<8x1xf32> to vector<8x10xf32>
    %512 = arith.subf %508, %511 : vector<8x10xf32>
    %513 = math.exp %512 : vector<8x10xf32>
    %cst_218 = arith.constant dense<0.000000e+00> : vector<8xf32>
    %514 = vector.multi_reduction <add>, %513, %cst_218 [1] : vector<8x10xf32> to vector<8xf32>
    %515 = vector.shape_cast %514 : vector<8xf32> to vector<8x1xf32>
    %516 = tpu.reciprocal %515 {approx = true} : vector<8x1xf32> -> vector<8x1xf32>
    %517 = vector.broadcast %516 : vector<8x1xf32> to vector<8x10xf32>
    %518 = arith.mulf %513, %517 : vector<8x10xf32>
    %cst_219 = arith.constant dense<0.000000e+00> : vector<8x8xf32>
    %519 = tpu.matmul %518, %507, %cst_219 {dimension_numbers = #tpu.dot_dimension_numbers<[1], [0], [0], [1], [0, 0, 1, 1], [], []>} : vector<8x10xf32>, vector<10x8xf32>, vector<8x8xf32> -> vector<8x8xf32>
    %520 = vector.extract_strided_slice %439 {offsets = [24, 0], sizes = [8, 32], strides = [1, 1]} : vector<32x32xf32> to vector<8x32xf32>
    %cst_220 = arith.constant dense<0.000000e+00> : vector<8x32xf32>
    %521 = tpu.matmul %519, %520, %cst_220 {dimension_numbers = #tpu.dot_dimension_numbers<[1], [0], [0], [1], [0, 0, 1, 1], [], []>} : vector<8x8xf32>, vector<8x32xf32>, vector<8x32xf32> -> vector<8x32xf32>
    %522 = arith.addf %502, %521 : vector<8x32xf32>
    %523 = vector.broadcast %441 : vector<1x32xf32> to vector<8x32xf32>
    %524 = arith.addf %522, %523 : vector<8x32xf32>
    %525 = arith.addf %421, %524 : vector<8x32xf32>
    %cst_221 = arith.constant dense<0.000000e+00> : vector<8xf32>
    %526 = vector.multi_reduction <add>, %525, %cst_221 [1] : vector<8x32xf32> to vector<8xf32>
    %527 = vector.shape_cast %526 : vector<8xf32> to vector<8x1xf32>
    %cst_222 = arith.constant 3.200000e+01 : f32
    %528 = vector.broadcast %cst_222 : f32 to vector<8x1xf32>
    %529 = arith.divf %527, %528 : vector<8x1xf32>
    %530 = vector.broadcast %529 : vector<8x1xf32> to vector<8x32xf32>
    %531 = arith.subf %525, %530 : vector<8x32xf32>
    %532 = arith.mulf %531, %531 : vector<8x32xf32>
    %cst_223 = arith.constant dense<0.000000e+00> : vector<8xf32>
    %533 = vector.multi_reduction <add>, %532, %cst_223 [1] : vector<8x32xf32> to vector<8xf32>
    %534 = vector.shape_cast %533 : vector<8xf32> to vector<8x1xf32>
    %cst_224 = arith.constant 3.200000e+01 : f32
    %535 = vector.broadcast %cst_224 : f32 to vector<8x1xf32>
    %536 = arith.divf %534, %535 : vector<8x1xf32>
    %537 = vector.broadcast %529 : vector<8x1xf32> to vector<8x32xf32>
    %538 = arith.subf %525, %537 : vector<8x32xf32>
    %cst_225 = arith.constant 9.99999974E-6 : f32
    %539 = vector.broadcast %cst_225 : f32 to vector<8x1xf32>
    %540 = arith.addf %536, %539 : vector<8x1xf32>
    %541 = math.rsqrt %540 : vector<8x1xf32>
    %542 = vector.broadcast %541 : vector<8x1xf32> to vector<8x32xf32>
    %543 = arith.mulf %538, %542 : vector<8x32xf32>
    %544 = vector.broadcast %299 : vector<1x32xf32> to vector<8x32xf32>
    %545 = arith.mulf %543, %544 : vector<8x32xf32>
    %546 = vector.broadcast %301 : vector<1x32xf32> to vector<8x32xf32>
    %547 = arith.addf %545, %546 : vector<8x32xf32>
    %c1_226 = arith.constant 1 : index
    %c0_227 = arith.constant 0 : index
    %c0_228 = arith.constant 0 : index
    %548 = vector.load %arg21[%c1_226, %c0_227, %c0_228] : memref<2x32x64xf32, #tpu.memory_space<vmem>>, vector<1x32x64xf32>
    %549 = vector.shape_cast %548 : vector<1x32x64xf32> to vector<32x64xf32>
    %cst_229 = arith.constant dense<0.000000e+00> : vector<8x64xf32>
    %550 = tpu.matmul %547, %549, %cst_229 {dimension_numbers = #tpu.dot_dimension_numbers<[1], [0], [0], [1], [0, 0, 1, 1], [], []>} : vector<8x32xf32>, vector<32x64xf32>, vector<8x64xf32> -> vector<8x64xf32>
    %c1_230 = arith.constant 1 : index
    %c0_231 = arith.constant 0 : index
    %c0_232 = arith.constant 0 : index
    %551 = vector.load %arg22[%c1_230, %c0_231, %c0_232] : memref<2x1x64xf32, #tpu.memory_space<vmem>>, vector<1x1x64xf32>
    %552 = vector.shape_cast %551 : vector<1x1x64xf32> to vector<1x64xf32>
    %553 = vector.broadcast %552 : vector<1x64xf32> to vector<8x64xf32>
    %554 = arith.addf %550, %553 : vector<8x64xf32>
    %cst_233 = arith.constant 0.000000e+00 : f32
    %555 = vector.broadcast %cst_233 : f32 to vector<8x64xf32>
    %556 = arith.maximumf %554, %555 : vector<8x64xf32>
    %c1_234 = arith.constant 1 : index
    %c0_235 = arith.constant 0 : index
    %c0_236 = arith.constant 0 : index
    %557 = vector.load %arg23[%c1_234, %c0_235, %c0_236] : memref<2x64x32xf32, #tpu.memory_space<vmem>>, vector<1x64x32xf32>
    %558 = vector.shape_cast %557 : vector<1x64x32xf32> to vector<64x32xf32>
    %cst_237 = arith.constant dense<0.000000e+00> : vector<8x32xf32>
    %559 = tpu.matmul %556, %558, %cst_237 {dimension_numbers = #tpu.dot_dimension_numbers<[1], [0], [0], [1], [0, 0, 1, 1], [], []>} : vector<8x64xf32>, vector<64x32xf32>, vector<8x32xf32> -> vector<8x32xf32>
    %c1_238 = arith.constant 1 : index
    %c0_239 = arith.constant 0 : index
    %c0_240 = arith.constant 0 : index
    %560 = vector.load %arg24[%c1_238, %c0_239, %c0_240] : memref<2x1x32xf32, #tpu.memory_space<vmem>>, vector<1x1x32xf32>
    %561 = vector.shape_cast %560 : vector<1x1x32xf32> to vector<1x32xf32>
    %562 = vector.broadcast %561 : vector<1x32xf32> to vector<8x32xf32>
    %563 = arith.addf %559, %562 : vector<8x32xf32>
    %564 = arith.addf %547, %563 : vector<8x32xf32>
    %cst_241 = arith.constant dense<0.000000e+00> : vector<8xf32>
    %565 = vector.multi_reduction <add>, %564, %cst_241 [1] : vector<8x32xf32> to vector<8xf32>
    %566 = vector.shape_cast %565 : vector<8xf32> to vector<8x1xf32>
    %cst_242 = arith.constant 3.200000e+01 : f32
    %567 = vector.broadcast %cst_242 : f32 to vector<8x1xf32>
    %568 = arith.divf %566, %567 : vector<8x1xf32>
    %569 = vector.broadcast %568 : vector<8x1xf32> to vector<8x32xf32>
    %570 = arith.subf %564, %569 : vector<8x32xf32>
    %571 = arith.mulf %570, %570 : vector<8x32xf32>
    %cst_243 = arith.constant dense<0.000000e+00> : vector<8xf32>
    %572 = vector.multi_reduction <add>, %571, %cst_243 [1] : vector<8x32xf32> to vector<8xf32>
    %573 = vector.shape_cast %572 : vector<8xf32> to vector<8x1xf32>
    %cst_244 = arith.constant 3.200000e+01 : f32
    %574 = vector.broadcast %cst_244 : f32 to vector<8x1xf32>
    %575 = arith.divf %573, %574 : vector<8x1xf32>
    %576 = vector.broadcast %568 : vector<8x1xf32> to vector<8x32xf32>
    %577 = arith.subf %564, %576 : vector<8x32xf32>
    %cst_245 = arith.constant 9.99999974E-6 : f32
    %578 = vector.broadcast %cst_245 : f32 to vector<8x1xf32>
    %579 = arith.addf %575, %578 : vector<8x1xf32>
    %580 = math.rsqrt %579 : vector<8x1xf32>
    %581 = vector.broadcast %580 : vector<8x1xf32> to vector<8x32xf32>
    %582 = arith.mulf %577, %581 : vector<8x32xf32>
    %583 = vector.broadcast %299 : vector<1x32xf32> to vector<8x32xf32>
    %584 = arith.mulf %582, %583 : vector<8x32xf32>
    %585 = vector.broadcast %301 : vector<1x32xf32> to vector<8x32xf32>
    %586 = arith.addf %584, %585 : vector<8x32xf32>
    %587 = arith.mulf %586, %586 : vector<8x32xf32>
    %cst_246 = arith.constant dense<0.000000e+00> : vector<8xf32>
    %588 = vector.multi_reduction <add>, %587, %cst_246 [1] : vector<8x32xf32> to vector<8xf32>
    %589 = vector.shape_cast %588 : vector<8xf32> to vector<8x1xf32>
    %590 = math.sqrt %589 : vector<8x1xf32>
    %cst_247 = arith.constant dense<0xFF800000> : vector<1xf32>
    %591 = vector.multi_reduction <maximumf>, %590, %cst_247 [0] : vector<8x1xf32> to vector<1xf32>
    %592 = vector.shape_cast %591 : vector<1xf32> to vector<1x1xf32>
    %593 = vector.broadcast %592 : vector<1x1xf32> to vector<8x1xf32>
    %594 = arith.subf %590, %593 : vector<8x1xf32>
    %595 = math.exp %594 : vector<8x1xf32>
    %cst_248 = arith.constant dense<0.000000e+00> : vector<1xf32>
    %596 = vector.multi_reduction <add>, %595, %cst_248 [0] : vector<8x1xf32> to vector<1xf32>
    %597 = vector.shape_cast %596 : vector<1xf32> to vector<1x1xf32>
    %598 = tpu.reciprocal %597 {approx = true} : vector<1x1xf32> -> vector<1x1xf32>
    %599 = vector.broadcast %598 : vector<1x1xf32> to vector<8x1xf32>
    %600 = arith.mulf %595, %599 : vector<8x1xf32>
    %601 = vector.broadcast %600 : vector<8x1xf32> to vector<8x32xf32>
    %602 = arith.mulf %586, %601 : vector<8x32xf32>
    %cst_249 = arith.constant dense<0.000000e+00> : vector<32xf32>
    %603 = vector.multi_reduction <add>, %602, %cst_249 [0] : vector<8x32xf32> to vector<32xf32>
    %604 = vector.shape_cast %603 : vector<32xf32> to vector<1x32xf32>
    %c0_250 = arith.constant 0 : index
    %c0_251 = arith.constant 0 : index
    %605 = vector.load %arg5[%c0_250, %c0_251] : memref<32x256xf32, #tpu.memory_space<vmem>>, vector<32x256xf32>
    %cst_252 = arith.constant dense<0.000000e+00> : vector<1x256xf32>
    %606 = tpu.matmul %604, %605, %cst_252 {dimension_numbers = #tpu.dot_dimension_numbers<[1], [0], [0], [1], [0, 0, 1, 1], [], []>} : vector<1x32xf32>, vector<32x256xf32>, vector<1x256xf32> -> vector<1x256xf32>
    %c0_253 = arith.constant 0 : index
    %c0_254 = arith.constant 0 : index
    %607 = vector.load %arg6[%c0_253, %c0_254] : memref<1x256xf32, #tpu.memory_space<vmem>>, vector<1x256xf32>
    %608 = arith.addf %606, %607 : vector<1x256xf32>
    %cst_255 = arith.constant 0.000000e+00 : f32
    %609 = vector.broadcast %cst_255 : f32 to vector<1x256xf32>
    %610 = arith.maximumf %608, %609 : vector<1x256xf32>
    %c0_256 = arith.constant 0 : index
    %c0_257 = arith.constant 0 : index
    %611 = vector.load %arg7[%c0_256, %c0_257] : memref<256x2xf32, #tpu.memory_space<vmem>>, vector<256x2xf32>
    %cst_258 = arith.constant dense<0.000000e+00> : vector<1x2xf32>
    %612 = tpu.matmul %610, %611, %cst_258 {dimension_numbers = #tpu.dot_dimension_numbers<[1], [0], [0], [1], [0, 0, 1, 1], [], []>} : vector<1x256xf32>, vector<256x2xf32>, vector<1x2xf32> -> vector<1x2xf32>
    %c0_259 = arith.constant 0 : index
    %c0_260 = arith.constant 0 : index
    %613 = vector.load %arg8[%c0_259, %c0_260] : memref<1x2xf32, #tpu.memory_space<vmem>>, vector<1x2xf32>
    %614 = arith.addf %612, %613 : vector<1x2xf32>
    %c0_261 = arith.constant 0 : index
    %c0_262 = arith.constant 0 : index
    %c0_263 = arith.constant 0 : index
    %615 = vector.load %arg25[%c0_261, %c0_262, %c0_263] : memref<1x1x2xf32, #tpu.memory_space<vmem>>, vector<1x1x2xf32>
    %616 = vector.shape_cast %615 : vector<1x1x2xf32> to vector<1x2xf32>
    %617 = vector.shape_cast %614 : vector<1x2xf32> to vector<1x1x2xf32>
    tpu.vector_store %arg25[%c0_261, %c0_262, %c0_263], %617 {strides = array<i32>} : memref<1x1x2xf32, #tpu.memory_space<vmem>>, vector<1x1x2xf32>,
    return
  }
  func.func @transform_0(%arg0: i32) -> (i32, i32, i32) {
    %c0_i32 = arith.constant 0 : i32
    %c0_i32_0 = arith.constant 0 : i32
    %c0_i32_1 = arith.constant 0 : i32
    return %arg0, %c0_i32, %c0_i32_0 : i32, i32, i32
  }
  func.func @transform_1(%arg0: i32) -> (i32, i32, i32) {
    %c0_i32 = arith.constant 0 : i32
    %c0_i32_0 = arith.constant 0 : i32
    %c0_i32_1 = arith.constant 0 : i32
    return %arg0, %c0_i32, %c0_i32_0 : i32, i32, i32
  }
  func.func @transform_2(%arg0: i32) -> (i32, i32) {
    %c0_i32 = arith.constant 0 : i32
    %c0_i32_0 = arith.constant 0 : i32
    %c0_i32_1 = arith.constant 0 : i32
    return %c0_i32, %c0_i32_0 : i32, i32
  }
  func.func @transform_3(%arg0: i32) -> (i32, i32) {
    %c0_i32 = arith.constant 0 : i32
    %c0_i32_0 = arith.constant 0 : i32
    %c0_i32_1 = arith.constant 0 : i32
    return %c0_i32, %c0_i32_0 : i32, i32
  }
  func.func @transform_4(%arg0: i32) -> (i32, i32) {
    %c0_i32 = arith.constant 0 : i32
    %c0_i32_0 = arith.constant 0 : i32
    %c0_i32_1 = arith.constant 0 : i32
    return %c0_i32, %c0_i32_0 : i32, i32
  }
  func.func @transform_5(%arg0: i32) -> (i32, i32) {
    %c0_i32 = arith.constant 0 : i32
    %c0_i32_0 = arith.constant 0 : i32
    %c0_i32_1 = arith.constant 0 : i32
    return %c0_i32, %c0_i32_0 : i32, i32
  }
  func.func @transform_6(%arg0: i32) -> (i32, i32) {
    %c0_i32 = arith.constant 0 : i32
    %c0_i32_0 = arith.constant 0 : i32
    %c0_i32_1 = arith.constant 0 : i32
    return %c0_i32, %c0_i32_0 : i32, i32
  }
  func.func @transform_7(%arg0: i32) -> (i32, i32) {
    %c0_i32 = arith.constant 0 : i32
    %c0_i32_0 = arith.constant 0 : i32
    %c0_i32_1 = arith.constant 0 : i32
    return %c0_i32, %c0_i32_0 : i32, i32
  }
  func.func @transform_8(%arg0: i32) -> (i32, i32, i32) {
    %c0_i32 = arith.constant 0 : i32
    %c0_i32_0 = arith.constant 0 : i32
    %c0_i32_1 = arith.constant 0 : i32
    %c0_i32_2 = arith.constant 0 : i32
    return %c0_i32, %c0_i32_0, %c0_i32_1 : i32, i32, i32
  }
  func.func @transform_9(%arg0: i32) -> (i32, i32, i32) {
    %c0_i32 = arith.constant 0 : i32
    %c0_i32_0 = arith.constant 0 : i32
    %c0_i32_1 = arith.constant 0 : i32
    %c0_i32_2 = arith.constant 0 : i32
    return %c0_i32, %c0_i32_0, %c0_i32_1 : i32, i32, i32
  }
  func.func @transform_10(%arg0: i32) -> (i32, i32, i32) {
    %c0_i32 = arith.constant 0 : i32
    %c0_i32_0 = arith.constant 0 : i32
    %c0_i32_1 = arith.constant 0 : i32
    %c0_i32_2 = arith.constant 0 : i32
    return %c0_i32, %c0_i32_0, %c0_i32_1 : i32, i32, i32
  }
  func.func @transform_11(%arg0: i32) -> (i32, i32, i32) {
    %c0_i32 = arith.constant 0 : i32
    %c0_i32_0 = arith.constant 0 : i32
    %c0_i32_1 = arith.constant 0 : i32
    %c0_i32_2 = arith.constant 0 : i32
    return %c0_i32, %c0_i32_0, %c0_i32_1 : i32, i32, i32
  }
  func.func @transform_12(%arg0: i32) -> (i32, i32, i32) {
    %c0_i32 = arith.constant 0 : i32
    %c0_i32_0 = arith.constant 0 : i32
    %c0_i32_1 = arith.constant 0 : i32
    %c0_i32_2 = arith.constant 0 : i32
    return %c0_i32, %c0_i32_0, %c0_i32_1 : i32, i32, i32
  }
  func.func @transform_13(%arg0: i32) -> (i32, i32, i32) {
    %c0_i32 = arith.constant 0 : i32
    %c0_i32_0 = arith.constant 0 : i32
    %c0_i32_1 = arith.constant 0 : i32
    %c0_i32_2 = arith.constant 0 : i32
    return %c0_i32, %c0_i32_0, %c0_i32_1 : i32, i32, i32
  }
  func.func @transform_14(%arg0: i32) -> (i32, i32, i32) {
    %c0_i32 = arith.constant 0 : i32
    %c0_i32_0 = arith.constant 0 : i32
    %c0_i32_1 = arith.constant 0 : i32
    %c0_i32_2 = arith.constant 0 : i32
    return %c0_i32, %c0_i32_0, %c0_i32_1 : i32, i32, i32
  }
  func.func @transform_15(%arg0: i32) -> (i32, i32, i32) {
    %c0_i32 = arith.constant 0 : i32
    %c0_i32_0 = arith.constant 0 : i32
    %c0_i32_1 = arith.constant 0 : i32
    %c0_i32_2 = arith.constant 0 : i32
    return %c0_i32, %c0_i32_0, %c0_i32_1 : i32, i32, i32
  }
  func.func @transform_16(%arg0: i32) -> (i32, i32, i32) {
    %c0_i32 = arith.constant 0 : i32
    %c0_i32_0 = arith.constant 0 : i32
    %c0_i32_1 = arith.constant 0 : i32
    %c0_i32_2 = arith.constant 0 : i32
    return %c0_i32, %c0_i32_0, %c0_i32_1 : i32, i32, i32
  }
  func.func @transform_17(%arg0: i32) -> (i32, i32, i32) {
    %c0_i32 = arith.constant 0 : i32
    %c0_i32_0 = arith.constant 0 : i32
    %c0_i32_1 = arith.constant 0 : i32
    %c0_i32_2 = arith.constant 0 : i32
    return %c0_i32, %c0_i32_0, %c0_i32_1 : i32, i32, i32
  }
  func.func @transform_18(%arg0: i32) -> (i32, i32, i32) {
    %c0_i32 = arith.constant 0 : i32
    %c0_i32_0 = arith.constant 0 : i32
    %c0_i32_1 = arith.constant 0 : i32
    %c0_i32_2 = arith.constant 0 : i32
    return %c0_i32, %c0_i32_0, %c0_i32_1 : i32, i32, i32
  }
  func.func @transform_19(%arg0: i32) -> (i32, i32, i32) {
    %c0_i32 = arith.constant 0 : i32
    %c0_i32_0 = arith.constant 0 : i32
    %c0_i32_1 = arith.constant 0 : i32
    %c0_i32_2 = arith.constant 0 : i32
    return %c0_i32, %c0_i32_0, %c0_i32_1 : i32, i32, i32
  }
  func.func @transform_20(%arg0: i32) -> (i32, i32, i32) {
    %c0_i32 = arith.constant 0 : i32
    %c0_i32_0 = arith.constant 0 : i32
    %c0_i32_1 = arith.constant 0 : i32
    %c0_i32_2 = arith.constant 0 : i32
    return %c0_i32, %c0_i32_0, %c0_i32_1 : i32, i32, i32
  }
  func.func @transform_21(%arg0: i32) -> (i32, i32, i32) {
    %c0_i32 = arith.constant 0 : i32
    %c0_i32_0 = arith.constant 0 : i32
    %c0_i32_1 = arith.constant 0 : i32
    %c0_i32_2 = arith.constant 0 : i32
    return %c0_i32, %c0_i32_0, %c0_i32_1 : i32, i32, i32
  }
  func.func @transform_22(%arg0: i32) -> (i32, i32, i32) {
    %c0_i32 = arith.constant 0 : i32
    %c0_i32_0 = arith.constant 0 : i32
    %c0_i32_1 = arith.constant 0 : i32
    %c0_i32_2 = arith.constant 0 : i32
    return %c0_i32, %c0_i32_0, %c0_i32_1 : i32, i32, i32
  }
  func.func @transform_23(%arg0: i32) -> (i32, i32, i32) {
    %c0_i32 = arith.constant 0 : i32
    %c0_i32_0 = arith.constant 0 : i32
    %c0_i32_1 = arith.constant 0 : i32
    %c0_i32_2 = arith.constant 0 : i32
    return %c0_i32, %c0_i32_0, %c0_i32_1 : i32, i32, i32
  }
  func.func @transform_24(%arg0: i32) -> (i32, i32, i32) {
    %c0_i32 = arith.constant 0 : i32
    %c0_i32_0 = arith.constant 0 : i32
    %c0_i32_1 = arith.constant 0 : i32
    return %arg0, %c0_i32, %c0_i32_0 : i32, i32, i32
  }
}

</mosaic_0001>

<llo_original>
// kernel: decoder_forward.1
$region0: #{decoder_forward.1}
  #allocation0 [shape = 'u32[]', space=smem, size = 0x4, offset = 0x4, fixed_abs, tag = 'smem constant byte address 0x4 - core index']
  #allocation1 [shape = 'u32[72,128]{1,0:T(1,128)}', space=vmem, size = 0x9000, scoped, tag = 'internal scratch']
  %s0 = inlined_call_operand.hbm [shape: f32[2,8,16], index: 0, kind: input, shape index: {}]
  %s1 = inlined_call_operand.vmem [shape: f32[2,10,32], index: 1, kind: input, shape index: {}]
  %s2 = inlined_call_operand.hbm [shape: f32[16,32], index: 2, kind: input, shape index: {}]
  %s3 = inlined_call_operand.hbm [shape: f32[1,32], index: 3, kind: input, shape index: {}]
  %s4 = inlined_call_operand.vmem [shape: f32[32,256], index: 4, kind: input, shape index: {}]
  %s5 = inlined_call_operand.vmem [shape: f32[1,256], index: 5, kind: input, shape index: {}]
  %s6 = inlined_call_operand.vmem [shape: f32[256,2], index: 6, kind: input, shape index: {}]
  %s7 = inlined_call_operand.hbm [shape: f32[1,2], index: 7, kind: input, shape index: {}]
  %s8 = inlined_call_operand.vmem [shape: f32[2,32,96], index: 8, kind: input, shape index: {}]
  %s9 = inlined_call_operand.vmem [shape: f32[2,1,96], index: 9, kind: input, shape index: {}]
  %s10 = inlined_call_operand.vmem [shape: f32[2,32,32], index: 10, kind: input, shape index: {}]
  %s11 = inlined_call_operand.hbm [shape: f32[2,1,32], index: 11, kind: input, shape index: {}]
  %s12 = inlined_call_operand.vmem [shape: f32[2,32,32], index: 12, kind: input, shape index: {}]
  %s13 = inlined_call_operand.hbm [shape: f32[2,1,32], index: 13, kind: input, shape index: {}]
  %s14 = inlined_call_operand.vmem [shape: f32[2,32,64], index: 14, kind: input, shape index: {}]
  %s15 = inlined_call_operand.hbm [shape: f32[2,1,64], index: 15, kind: input, shape index: {}]
  %s16 = inlined_call_operand.vmem [shape: f32[2,32,32], index: 16, kind: input, shape index: {}]
  %s17 = inlined_call_operand.hbm [shape: f32[2,1,32], index: 17, kind: input, shape index: {}]
  %s18 = inlined_call_operand.hbm [shape: f32[2,1,32], index: 18, kind: input, shape index: {}]
  %s19 = inlined_call_operand.hbm [shape: f32[2,1,32], index: 19, kind: input, shape index: {}]
  %s20 = inlined_call_operand.vmem [shape: f32[2,32,64], index: 20, kind: input, shape index: {}]
  %s21 = inlined_call_operand.hbm [shape: f32[2,1,64], index: 21, kind: input, shape index: {}]
  %s22 = inlined_call_operand.vmem [shape: f32[2,64,32], index: 22, kind: input, shape index: {}]
  %s23 = inlined_call_operand.hbm [shape: f32[2,1,32], index: 23, kind: input, shape index: {}]
  %s24 = inlined_call_operand.hbm [shape: f32[2,1,2], index: 24, kind: output, shape index: {}]
  %s25 = sld [smem:[#allocation0]]
  $region177: #{decoder_forward.1} parent=0
    _
  %s27 = ssub.s32 1, %s25
  %s28 = scalar_select 0, %s27, %s25
  $region1: #{decoder_forward.1} parent=0
    #allocation2 [shape = 'u8[8192]{0}', space=vmem, size = 0x2000, scoped, tag = 'input window, operand 0']
    #allocation3 [shape = 's32[2]{0}', space=sflag, size = 0x8, scoped, tag = 'scoped memory for decoder_forward.1']
    #allocation4 [shape = 's32[2]{0}', space=sflag, size = 0x8, scoped, tag = 'scoped memory for decoder_forward.1']
    #allocation5 [shape = 'u8[8192]{0}', space=vmem, size = 0x2000, scoped, tag = 'input window, operand 2, single buffered']
    #allocation6 [shape = 's32[1]{0}', space=sflag, size = 0x4, scoped, tag = 'scoped memory for decoder_forward.1']
    #allocation7 [shape = 'u8[512]{0}', space=vmem, size = 0x400, scoped, tag = 'input window, operand 3, single buffered']
    #allocation8 [shape = 'u8[512]{0}', space=vmem, size = 0x400, scoped, tag = 'input window, operand 7, single buffered']
    #allocation9 [shape = 's32[1]{0}', space=sflag, size = 0x4, scoped, tag = 'scoped memory for decoder_forward.1']
    #allocation10 [shape = 'u8[1024]{0}', space=vmem, size = 0x400, scoped, tag = 'input window, operand 11, single buffered']
    #allocation11 [shape = 'u8[1024]{0}', space=vmem, size = 0x400, scoped, tag = 'input window, operand 13, single buffered']
    #allocation12 [shape = 's32[1]{0}', space=sflag, size = 0x4, scoped, tag = 'scoped memory for decoder_forward.1']
    #allocation13 [shape = 'u8[1024]{0}', space=vmem, size = 0x400, scoped, tag = 'input window, operand 15, single buffered']
    #allocation14 [shape = 'u8[1024]{0}', space=vmem, size = 0x400, scoped, tag = 'input window, operand 17, single buffered']
    #allocation15 [shape = 's32[1]{0}', space=sflag, size = 0x4, scoped, tag = 'scoped memory for decoder_forward.1']
    #allocation16 [shape = 'u8[1024]{0}', space=vmem, size = 0x400, scoped, tag = 'input window, operand 18, single buffered']
    #allocation17 [shape = 'u8[1024]{0}', space=vmem, size = 0x400, scoped, tag = 'input window, operand 19, single buffered']
    #allocation18 [shape = 's32[1]{0}', space=sflag, size = 0x4, scoped, tag = 'scoped memory for decoder_forward.1']
    #allocation19 [shape = 'u8[1024]{0}', space=vmem, size = 0x400, scoped, tag = 'input window, operand 21, single buffered']
    #allocation20 [shape = 'u8[1024]{0}', space=vmem, size = 0x400, scoped, tag = 'input window, operand 23, single buffered']
    #allocation21 [shape = 's32[1]{0}', space=sflag, size = 0x4, scoped, tag = 'scoped memory for decoder_forward.1']
    #allocation22 [shape = 'u8[1024]{0}', space=vmem, size = 0x400, scoped, tag = 'output window, operand 0']
    %29 = vsyncpa [#allocation3], 0
    %s30 = scalar_lea.sflag [#allocation3], 1
    %31 = vsyncpa %s30, 0
    %32 = vsyncpa [#allocation6], 0
    %33 = vsyncpa [#allocation9], 0
    %34 = vsyncpa [#allocation12], 0
    %35 = vsyncpa [#allocation15], 0
    %36 = vsyncpa [#allocation18], 0
    %37 = vsyncpa [#allocation21], 0
    %38 = vsyncpa [#allocation4], 0
    %s39 = scalar_lea.sflag [#allocation4], 1
    %40 = vsyncpa %s39, 0
    loop: start=0, step=1, limit=4
    $region2: #{decoder_forward.1} parent=1 // loop_pre_header
      _
    $region3: #{decoder_forward.1} parent=1 // loop_header
      %s42 = sphi 0, %s46
      %p43 = scmp.ge.s32.totalorder %s42, 4
      %s52 = sphi 0, %s54
      %s55 = sphi 0, %s52
      %s56 = sphi 0, %s55
      %s72 = sphi 0, %s56
      %s78 = sphi 0, %s80
      %s81 = sphi 0, %s78
      %s82 = sphi 0, %s81
      %s98 = sphi 0, %s82
      %s102 = sphi 0, %s102
      %s104 = sphi 0, %s102
      %s105 = sphi 0, %s104
      %s119 = sphi 0, %s105
      %s123 = sphi 0, %s123
      %s125 = sphi 0, %s123
      %s126 = sphi 0, %s125
      %s140 = sphi 0, %s126
      %s144 = sphi 0, %s144
      %s146 = sphi 0, %s144
      %s147 = sphi 0, %s146
      %s161 = sphi 0, %s147
      %s165 = sphi 0, %s165
      %s167 = sphi 0, %s165
      %s168 = sphi 0, %s167
      %s182 = sphi 0, %s168
      %s186 = sphi 0, %s186
      %s188 = sphi 0, %s186
      %s189 = sphi 0, %s188
      %s203 = sphi 0, %s189
      %s207 = sphi 0, %s207
      %s209 = sphi 0, %s207
      %s210 = sphi 0, %s209
      %s224 = sphi 0, %s210
      %s228 = sphi 0, %s228
      %s230 = sphi 0, %s228
      %s231 = sphi 0, %s230
      %s245 = sphi 0, %s231
      %s249 = sphi 0, %s249
      %s251 = sphi 0, %s249
      %s252 = sphi 0, %s251
      %s266 = sphi 0, %s252
      %s270 = sphi 0, %s270
      %s272 = sphi 0, %s270
      %s273 = sphi 0, %s272
      %s287 = sphi 0, %s273
      %s291 = sphi 0, %s291
      %s293 = sphi 0, %s291
      %s294 = sphi 0, %s293
      %s308 = sphi 0, %s294
      %s312 = sphi 0, %s312
      %s314 = sphi 0, %s312
      %s315 = sphi 0, %s314
      %s329 = sphi 0, %s315
      %s333 = sphi 0, %s333
      %s335 = sphi 0, %s333
      %s336 = sphi 0, %s335
      %s350 = sphi 0, %s336
      %s354 = sphi 0, %s354
      %s356 = sphi 0, %s354
      %s357 = sphi 0, %s356
      %s371 = sphi 0, %s357
      %s375 = sphi 0, %s375
      %s377 = sphi 0, %s375
      %s378 = sphi 0, %s377
      %s392 = sphi 0, %s378
      %s396 = sphi 0, %s396
      %s398 = sphi 0, %s396
      %s399 = sphi 0, %s398
      %s413 = sphi 0, %s399
      %s417 = sphi 0, %s417
      %s419 = sphi 0, %s417
      %s420 = sphi 0, %s419
      %s434 = sphi 0, %s420
      %s438 = sphi 0, %s438
      %s440 = sphi 0, %s438
      %s441 = sphi 0, %s440
      %s455 = sphi 0, %s441
      %s459 = sphi 0, %s459
      %s461 = sphi 0, %s459
      %s462 = sphi 0, %s461
      %s476 = sphi 0, %s462
      %s480 = sphi 0, %s480
      %s482 = sphi 0, %s480
      %s483 = sphi 0, %s482
      %s497 = sphi 0, %s483
      %s501 = sphi 0, %s501
      %s503 = sphi 0, %s501
      %s504 = sphi 0, %s503
      %s518 = sphi 0, %s504
      %s522 = sphi 0, %s522
      %s524 = sphi 0, %s522
      %s525 = sphi 0, %s524
      %s539 = sphi 0, %s525
      %s543 = sphi 0, %s543
      %s545 = sphi 0, %s543
      %s546 = sphi 0, %s545
      %s560 = sphi 0, %s546
      %s566 = sphi 0, %s568
      %s569 = sphi 0, %s566
      %s570 = sphi 0, %s569
      %s586 = sphi 0, %s570
    $region4: #{decoder_forward.1} parent=1 // loop_header_branch
      %45 = sbr.rel (%p43) target = $region8
    $region5: #{decoder_forward.1} parent=1 // loop_body
      %s47 = ssub.s32 %s42, 1
      %s48 = ssub.s32 %s42, 2
      %s49 = sadd.s32 %s42, 1
      %s50 = ssub.s32 %s42, %s49
      %p51 = scmp.eq.s32.totalorder %s50, 0
      %s53 = sadd.s32 %s52, 1
      %s54 = scalar_select %p51, %s52, %s53
      %p57 = pneg %p51
      %p58 = scmp.eq.s32.totalorder %s42, 1
      %p59 = por %p57, %p58
      %p60 = scmp.ne.s32.totalorder %s52, %s55
      %p61 = scmp.eq.s32.totalorder %s42, 0
      %p62 = por %p60, %p61
      %p63 = scmp.ne.s32.totalorder %s52, %s55
      %p64 = scmp.eq.s32.totalorder %s47, 1
      %p65 = por %p63, %p64
      %p66 = scmp.ne.s32.totalorder %s55, %s56
      %p67 = scmp.eq.s32.totalorder %s47, 0
      %p68 = por %p66, %p67
      %p69 = scmp.ne.s32.totalorder %s55, %s56
      %p70 = scmp.eq.s32.totalorder %s48, 1
      %p71 = por %p69, %p70
      %p73 = scmp.ne.s32.totalorder %s56, %s72
      %p74 = scmp.eq.s32.totalorder %s48, 0
      %p75 = por %p73, %p74
      %s76 = ssub.s32 %s42, %s49
      %p77 = scmp.eq.s32.totalorder %s76, 0
      %s79 = sadd.s32 %s78, 1
      %s80 = scalar_select %p77, %s78, %s79
      %p83 = pneg %p77
      %p84 = scmp.eq.s32.totalorder %s42, 1
      %p85 = por %p83, %p84
      %p86 = scmp.ne.s32.totalorder %s78, %s81
      %p87 = scmp.eq.s32.totalorder %s42, 0
      %p88 = por %p86, %p87
      %p89 = scmp.ne.s32.totalorder %s78, %s81
      %p90 = scmp.eq.s32.totalorder %s47, 1
      %p91 = por %p89, %p90
      %p92 = scmp.ne.s32.totalorder %s81, %s82
      %p93 = scmp.eq.s32.totalorder %s47, 0
      %p94 = por %p92, %p93
      %p95 = scmp.ne.s32.totalorder %s81, %s82
      %p96 = scmp.eq.s32.totalorder %s48, 1
      %p97 = por %p95, %p96
      %p99 = scmp.ne.s32.totalorder %s82, %s98
      %p100 = scmp.eq.s32.totalorder %s48, 0
      %p101 = por %p99, %p100
      %s103 = sadd.s32 %s102, 1
      %p106 = scmp.eq.s32.totalorder %s42, 1
      %p107 = scmp.ne.s32.totalorder %s102, %s104
      %p108 = scmp.eq.s32.totalorder %s42, 0
      %p109 = por %p107, %p108
      %p110 = scmp.ne.s32.totalorder %s102, %s104
      %p111 = scmp.eq.s32.totalorder %s47, 1
      %p112 = por %p110, %p111
      %p113 = scmp.ne.s32.totalorder %s104, %s105
      %p114 = scmp.eq.s32.totalorder %s47, 0
      %p115 = por %p113, %p114
      %p116 = scmp.ne.s32.totalorder %s104, %s105
      %p117 = scmp.eq.s32.totalorder %s48, 1
      %p118 = por %p116, %p117
      %p120 = scmp.ne.s32.totalorder %s105, %s119
      %p121 = scmp.eq.s32.totalorder %s48, 0
      %p122 = por %p120, %p121
      %s124 = sadd.s32 %s123, 1
      %p127 = scmp.eq.s32.totalorder %s42, 1
      %p128 = scmp.ne.s32.totalorder %s123, %s125
      %p129 = scmp.eq.s32.totalorder %s42, 0
      %p130 = por %p128, %p129
      %p131 = scmp.ne.s32.totalorder %s123, %s125
      %p132 = scmp.eq.s32.totalorder %s47, 1
      %p133 = por %p131, %p132
      %p134 = scmp.ne.s32.totalorder %s125, %s126
      %p135 = scmp.eq.s32.totalorder %s47, 0
      %p136 = por %p134, %p135
      %p137 = scmp.ne.s32.totalorder %s125, %s126
      %p138 = scmp.eq.s32.totalorder %s48, 1
      %p139 = por %p137, %p138
      %p141 = scmp.ne.s32.totalorder %s126, %s140
      %p142 = scmp.eq.s32.totalorder %s48, 0
      %p143 = por %p141, %p142
      %s145 = sadd.s32 %s144, 1
      %p148 = scmp.eq.s32.totalorder %s42, 1
      %p149 = scmp.ne.s32.totalorder %s144, %s146
      %p150 = scmp.eq.s32.totalorder %s42, 0
      %p151 = por %p149, %p150
      %p152 = scmp.ne.s32.totalorder %s144, %s146
      %p153 = scmp.eq.s32.totalorder %s47, 1
      %p154 = por %p152, %p153
      %p155 = scmp.ne.s32.totalorder %s146, %s147
      %p156 = scmp.eq.s32.totalorder %s47, 0
      %p157 = por %p155, %p156
      %p158 = scmp.ne.s32.totalorder %s146, %s147
      %p159 = scmp.eq.s32.totalorder %s48, 1
      %p160 = por %p158, %p159
      %p162 = scmp.ne.s32.totalorder %s147, %s161
      %p163 = scmp.eq.s32.totalorder %s48, 0
      %p164 = por %p162, %p163
      %s166 = sadd.s32 %s165, 1
      %p169 = scmp.eq.s32.totalorder %s42, 1
      %p170 = scmp.ne.s32.totalorder %s165, %s167
      %p171 = scmp.eq.s32.totalorder %s42, 0
      %p172 = por %p170, %p171
      %p173 = scmp.ne.s32.totalorder %s165, %s167
      %p174 = scmp.eq.s32.totalorder %s47, 1
      %p175 = por %p173, %p174
      %p176 = scmp.ne.s32.totalorder %s167, %s168
      %p177 = scmp.eq.s32.totalorder %s47, 0
      %p178 = por %p176, %p177
      %p179 = scmp.ne.s32.totalorder %s167, %s168
      %p180 = scmp.eq.s32.totalorder %s48, 1
      %p181 = por %p179, %p180
      %p183 = scmp.ne.s32.totalorder %s168, %s182
      %p184 = scmp.eq.s32.totalorder %s48, 0
      %p185 = por %p183, %p184
      %s187 = sadd.s32 %s186, 1
      %p190 = scmp.eq.s32.totalorder %s42, 1
      %p191 = scmp.ne.s32.totalorder %s186, %s188
      %p192 = scmp.eq.s32.totalorder %s42, 0
      %p193 = por %p191, %p192
      %p194 = scmp.ne.s32.totalorder %s186, %s188
      %p195 = scmp.eq.s32.totalorder %s47, 1
      %p196 = por %p194, %p195
      %p197 = scmp.ne.s32.totalorder %s188, %s189
      %p198 = scmp.eq.s32.totalorder %s47, 0
      %p199 = por %p197, %p198
      %p200 = scmp.ne.s32.totalorder %s188, %s189
      %p201 = scmp.eq.s32.totalorder %s48, 1
      %p202 = por %p200, %p201
      %p204 = scmp.ne.s32.totalorder %s189, %s203
      %p205 = scmp.eq.s32.totalorder %s48, 0
      %p206 = por %p204, %p205
      %s208 = sadd.s32 %s207, 1
      %p211 = scmp.eq.s32.totalorder %s42, 1
      %p212 = scmp.ne.s32.totalorder %s207, %s209
      %p213 = scmp.eq.s32.totalorder %s42, 0
      %p214 = por %p212, %p213
      %p215 = scmp.ne.s32.totalorder %s207, %s209
      %p216 = scmp.eq.s32.totalorder %s47, 1
      %p217 = por %p215, %p216
      %p218 = scmp.ne.s32.totalorder %s209, %s210
      %p219 = scmp.eq.s32.totalorder %s47, 0
      %p220 = por %p218, %p219
      %p221 = scmp.ne.s32.totalorder %s209, %s210
      %p222 = scmp.eq.s32.totalorder %s48, 1
      %p223 = por %p221, %p222
      %p225 = scmp.ne.s32.totalorder %s210, %s224
      %p226 = scmp.eq.s32.totalorder %s48, 0
      %p227 = por %p225, %p226
      %s229 = sadd.s32 %s228, 1
      %p232 = scmp.eq.s32.totalorder %s42, 1
      %p233 = scmp.ne.s32.totalorder %s228, %s230
      %p234 = scmp.eq.s32.totalorder %s42, 0
      %p235 = por %p233, %p234
      %p236 = scmp.ne.s32.totalorder %s228, %s230
      %p237 = scmp.eq.s32.totalorder %s47, 1
      %p238 = por %p236, %p237
      %p239 = scmp.ne.s32.totalorder %s230, %s231
      %p240 = scmp.eq.s32.totalorder %s47, 0
      %p241 = por %p239, %p240
      %p242 = scmp.ne.s32.totalorder %s230, %s231
      %p243 = scmp.eq.s32.totalorder %s48, 1
      %p244 = por %p242, %p243
      %p246 = scmp.ne.s32.totalorder %s231, %s245
      %p247 = scmp.eq.s32.totalorder %s48, 0
      %p248 = por %p246, %p247
      %s250 = sadd.s32 %s249, 1
      %p253 = scmp.eq.s32.totalorder %s42, 1
      %p254 = scmp.ne.s32.totalorder %s249, %s251
      %p255 = scmp.eq.s32.totalorder %s42, 0
      %p256 = por %p254, %p255
      %p257 = scmp.ne.s32.totalorder %s249, %s251
      %p258 = scmp.eq.s32.totalorder %s47, 1
      %p259 = por %p257, %p258
      %p260 = scmp.ne.s32.totalorder %s251, %s252
      %p261 = scmp.eq.s32.totalorder %s47, 0
      %p262 = por %p260, %p261
      %p263 = scmp.ne.s32.totalorder %s251, %s252
      %p264 = scmp.eq.s32.totalorder %s48, 1
      %p265 = por %p263, %p264
      %p267 = scmp.ne.s32.totalorder %s252, %s266
      %p268 = scmp.eq.s32.totalorder %s48, 0
      %p269 = por %p267, %p268
      %s271 = sadd.s32 %s270, 1
      %p274 = scmp.eq.s32.totalorder %s42, 1
      %p275 = scmp.ne.s32.totalorder %s270, %s272
      %p276 = scmp.eq.s32.totalorder %s42, 0
      %p277 = por %p275, %p276
      %p278 = scmp.ne.s32.totalorder %s270, %s272
      %p279 = scmp.eq.s32.totalorder %s47, 1
      %p280 = por %p278, %p279
      %p281 = scmp.ne.s32.totalorder %s272, %s273
      %p282 = scmp.eq.s32.totalorder %s47, 0
      %p283 = por %p281, %p282
      %p284 = scmp.ne.s32.totalorder %s272, %s273
      %p285 = scmp.eq.s32.totalorder %s48, 1
      %p286 = por %p284, %p285
      %p288 = scmp.ne.s32.totalorder %s273, %s287
      %p289 = scmp.eq.s32.totalorder %s48, 0
      %p290 = por %p288, %p289
      %s292 = sadd.s32 %s291, 1
      %p295 = scmp.eq.s32.totalorder %s42, 1
      %p296 = scmp.ne.s32.totalorder %s291, %s293
      %p297 = scmp.eq.s32.totalorder %s42, 0
      %p298 = por %p296, %p297
      %p299 = scmp.ne.s32.totalorder %s291, %s293
      %p300 = scmp.eq.s32.totalorder %s47, 1
      %p301 = por %p299, %p300
      %p302 = scmp.ne.s32.totalorder %s293, %s294
      %p303 = scmp.eq.s32.totalorder %s47, 0
      %p304 = por %p302, %p303
      %p305 = scmp.ne.s32.totalorder %s293, %s294
      %p306 = scmp.eq.s32.totalorder %s48, 1
      %p307 = por %p305, %p306
      %p309 = scmp.ne.s32.totalorder %s294, %s308
      %p310 = scmp.eq.s32.totalorder %s48, 0
      %p311 = por %p309, %p310
      %s313 = sadd.s32 %s312, 1
      %p316 = scmp.eq.s32.totalorder %s42, 1
      %p317 = scmp.ne.s32.totalorder %s312, %s314
      %p318 = scmp.eq.s32.totalorder %s42, 0
      %p319 = por %p317, %p318
      %p320 = scmp.ne.s32.totalorder %s312, %s314
      %p321 = scmp.eq.s32.totalorder %s47, 1
      %p322 = por %p320, %p321
      %p323 = scmp.ne.s32.totalorder %s314, %s315
      %p324 = scmp.eq.s32.totalorder %s47, 0
      %p325 = por %p323, %p324
      %p326 = scmp.ne.s32.totalorder %s314, %s315
      %p327 = scmp.eq.s32.totalorder %s48, 1
      %p328 = por %p326, %p327
      %p330 = scmp.ne.s32.totalorder %s315, %s329
      %p331 = scmp.eq.s32.totalorder %s48, 0
      %p332 = por %p330, %p331
      %s334 = sadd.s32 %s333, 1
      %p337 = scmp.eq.s32.totalorder %s42, 1
      %p338 = scmp.ne.s32.totalorder %s333, %s335
      %p339 = scmp.eq.s32.totalorder %s42, 0
      %p340 = por %p338, %p339
      %p341 = scmp.ne.s32.totalorder %s333, %s335
      %p342 = scmp.eq.s32.totalorder %s47, 1
      %p343 = por %p341, %p342
      %p344 = scmp.ne.s32.totalorder %s335, %s336
      %p345 = scmp.eq.s32.totalorder %s47, 0
      %p346 = por %p344, %p345
      %p347 = scmp.ne.s32.totalorder %s335, %s336
      %p348 = scmp.eq.s32.totalorder %s48, 1
      %p349 = por %p347, %p348
      %p351 = scmp.ne.s32.totalorder %s336, %s350
      %p352 = scmp.eq.s32.totalorder %s48, 0
      %p353 = por %p351, %p352
      %s355 = sadd.s32 %s354, 1
      %p358 = scmp.eq.s32.totalorder %s42, 1
      %p359 = scmp.ne.s32.totalorder %s354, %s356
      %p360 = scmp.eq.s32.totalorder %s42, 0
      %p361 = por %p359, %p360
      %p362 = scmp.ne.s32.totalorder %s354, %s356
      %p363 = scmp.eq.s32.totalorder %s47, 1
      %p364 = por %p362, %p363
      %p365 = scmp.ne.s32.totalorder %s356, %s357
      %p366 = scmp.eq.s32.totalorder %s47, 0
      %p367 = por %p365, %p366
      %p368 = scmp.ne.s32.totalorder %s356, %s357
      %p369 = scmp.eq.s32.totalorder %s48, 1
      %p370 = por %p368, %p369
      %p372 = scmp.ne.s32.totalorder %s357, %s371
      %p373 = scmp.eq.s32.totalorder %s48, 0
      %p374 = por %p372, %p373
      %s376 = sadd.s32 %s375, 1
      %p379 = scmp.eq.s32.totalorder %s42, 1
      %p380 = scmp.ne.s32.totalorder %s375, %s377
      %p381 = scmp.eq.s32.totalorder %s42, 0
      %p382 = por %p380, %p381
      %p383 = scmp.ne.s32.totalorder %s375, %s377
      %p384 = scmp.eq.s32.totalorder %s47, 1
      %p385 = por %p383, %p384
      %p386 = scmp.ne.s32.totalorder %s377, %s378
      %p387 = scmp.eq.s32.totalorder %s47, 0
      %p388 = por %p386, %p387
      %p389 = scmp.ne.s32.totalorder %s377, %s378
      %p390 = scmp.eq.s32.totalorder %s48, 1
      %p391 = por %p389, %p390
      %p393 = scmp.ne.s32.totalorder %s378, %s392
      %p394 = scmp.eq.s32.totalorder %s48, 0
      %p395 = por %p393, %p394
      %s397 = sadd.s32 %s396, 1
      %p400 = scmp.eq.s32.totalorder %s42, 1
      %p401 = scmp.ne.s32.totalorder %s396, %s398
      %p402 = scmp.eq.s32.totalorder %s42, 0
      %p403 = por %p401, %p402
      %p404 = scmp.ne.s32.totalorder %s396, %s398
      %p405 = scmp.eq.s32.totalorder %s47, 1
      %p406 = por %p404, %p405
      %p407 = scmp.ne.s32.totalorder %s398, %s399
      %p408 = scmp.eq.s32.totalorder %s47, 0
      %p409 = por %p407, %p408
      %p410 = scmp.ne.s32.totalorder %s398, %s399
      %p411 = scmp.eq.s32.totalorder %s48, 1
      %p412 = por %p410, %p411
      %p414 = scmp.ne.s32.totalorder %s399, %s413
      %p415 = scmp.eq.s32.totalorder %s48, 0
      %p416 = por %p414, %p415
      %s418 = sadd.s32 %s417, 1
      %p421 = scmp.eq.s32.totalorder %s42, 1
      %p422 = scmp.ne.s32.totalorder %s417, %s419
      %p423 = scmp.eq.s32.totalorder %s42, 0
      %p424 = por %p422, %p423
      %p425 = scmp.ne.s32.totalorder %s417, %s419
      %p426 = scmp.eq.s32.totalorder %s47, 1
      %p427 = por %p425, %p426
      %p428 = scmp.ne.s32.totalorder %s419, %s420
      %p429 = scmp.eq.s32.totalorder %s47, 0
      %p430 = por %p428, %p429
      %p431 = scmp.ne.s32.totalorder %s419, %s420
      %p432 = scmp.eq.s32.totalorder %s48, 1
      %p433 = por %p431, %p432
      %p435 = scmp.ne.s32.totalorder %s420, %s434
      %p436 = scmp.eq.s32.totalorder %s48, 0
      %p437 = por %p435, %p436
      %s439 = sadd.s32 %s438, 1
      %p442 = scmp.eq.s32.totalorder %s42, 1
      %p443 = scmp.ne.s32.totalorder %s438, %s440
      %p444 = scmp.eq.s32.totalorder %s42, 0
      %p445 = por %p443, %p444
      %p446 = scmp.ne.s32.totalorder %s438, %s440
      %p447 = scmp.eq.s32.totalorder %s47, 1
      %p448 = por %p446, %p447
      %p449 = scmp.ne.s32.totalorder %s440, %s441
      %p450 = scmp.eq.s32.totalorder %s47, 0
      %p451 = por %p449, %p450
      %p452 = scmp.ne.s32.totalorder %s440, %s441
      %p453 = scmp.eq.s32.totalorder %s48, 1
      %p454 = por %p452, %p453
      %p456 = scmp.ne.s32.totalorder %s441, %s455
      %p457 = scmp.eq.s32.totalorder %s48, 0
      %p458 = por %p456, %p457
      %s460 = sadd.s32 %s459, 1
      %p463 = scmp.eq.s32.totalorder %s42, 1
      %p464 = scmp.ne.s32.totalorder %s459, %s461
      %p465 = scmp.eq.s32.totalorder %s42, 0
      %p466 = por %p464, %p465
      %p467 = scmp.ne.s32.totalorder %s459, %s461
      %p468 = scmp.eq.s32.totalorder %s47, 1
      %p469 = por %p467, %p468
      %p470 = scmp.ne.s32.totalorder %s461, %s462
      %p471 = scmp.eq.s32.totalorder %s47, 0
      %p472 = por %p470, %p471
      %p473 = scmp.ne.s32.totalorder %s461, %s462
      %p474 = scmp.eq.s32.totalorder %s48, 1
      %p475 = por %p473, %p474
      %p477 = scmp.ne.s32.totalorder %s462, %s476
      %p478 = scmp.eq.s32.totalorder %s48, 0
      %p479 = por %p477, %p478
      %s481 = sadd.s32 %s480, 1
      %p484 = scmp.eq.s32.totalorder %s42, 1
      %p485 = scmp.ne.s32.totalorder %s480, %s482
      %p486 = scmp.eq.s32.totalorder %s42, 0
      %p487 = por %p485, %p486
      %p488 = scmp.ne.s32.totalorder %s480, %s482
      %p489 = scmp.eq.s32.totalorder %s47, 1
      %p490 = por %p488, %p489
      %p491 = scmp.ne.s32.totalorder %s482, %s483
      %p492 = scmp.eq.s32.totalorder %s47, 0
      %p493 = por %p491, %p492
      %p494 = scmp.ne.s32.totalorder %s482, %s483
      %p495 = scmp.eq.s32.totalorder %s48, 1
      %p496 = por %p494, %p495
      %p498 = scmp.ne.s32.totalorder %s483, %s497
      %p499 = scmp.eq.s32.totalorder %s48, 0
      %p500 = por %p498, %p499
      %s502 = sadd.s32 %s501, 1
      %p505 = scmp.eq.s32.totalorder %s42, 1
      %p506 = scmp.ne.s32.totalorder %s501, %s503
      %p507 = scmp.eq.s32.totalorder %s42, 0
      %p508 = por %p506, %p507
      %p509 = scmp.ne.s32.totalorder %s501, %s503
      %p510 = scmp.eq.s32.totalorder %s47, 1
      %p511 = por %p509, %p510
      %p512 = scmp.ne.s32.totalorder %s503, %s504
      %p513 = scmp.eq.s32.totalorder %s47, 0
      %p514 = por %p512, %p513
      %p515 = scmp.ne.s32.totalorder %s503, %s504
      %p516 = scmp.eq.s32.totalorder %s48, 1
      %p517 = por %p515, %p516
      %p519 = scmp.ne.s32.totalorder %s504, %s518
      %p520 = scmp.eq.s32.totalorder %s48, 0
      %p521 = por %p519, %p520
      %s523 = sadd.s32 %s522, 1
      %p526 = scmp.eq.s32.totalorder %s42, 1
      %p527 = scmp.ne.s32.totalorder %s522, %s524
      %p528 = scmp.eq.s32.totalorder %s42, 0
      %p529 = por %p527, %p528
      %p530 = scmp.ne.s32.totalorder %s522, %s524
      %p531 = scmp.eq.s32.totalorder %s47, 1
      %p532 = por %p530, %p531
      %p533 = scmp.ne.s32.totalorder %s524, %s525
      %p534 = scmp.eq.s32.totalorder %s47, 0
      %p535 = por %p533, %p534
      %p536 = scmp.ne.s32.totalorder %s524, %s525
      %p537 = scmp.eq.s32.totalorder %s48, 1
      %p538 = por %p536, %p537
      %p540 = scmp.ne.s32.totalorder %s525, %s539
      %p541 = scmp.eq.s32.totalorder %s48, 0
      %p542 = por %p540, %p541
      %s544 = sadd.s32 %s543, 1
      %p547 = scmp.eq.s32.totalorder %s42, 1
      %p548 = scmp.ne.s32.totalorder %s543, %s545
      %p549 = scmp.eq.s32.totalorder %s42, 0
      %p550 = por %p548, %p549
      %p551 = scmp.ne.s32.totalorder %s543, %s545
      %p552 = scmp.eq.s32.totalorder %s47, 1
      %p553 = por %p551, %p552
      %p554 = scmp.ne.s32.totalorder %s545, %s546
      %p555 = scmp.eq.s32.totalorder %s47, 0
      %p556 = por %p554, %p555
      %p557 = scmp.ne.s32.totalorder %s545, %s546
      %p558 = scmp.eq.s32.totalorder %s48, 1
      %p559 = por %p557, %p558
      %p561 = scmp.ne.s32.totalorder %s546, %s560
      %p562 = scmp.eq.s32.totalorder %s48, 0
      %p563 = por %p561, %p562
      %s564 = ssub.s32 %s42, %s49
      %p565 = scmp.eq.s32.totalorder %s564, 0
      %s567 = sadd.s32 %s566, 1
      %s568 = scalar_select %p565, %s566, %s567
      %p571 = pneg %p565
      %p572 = scmp.eq.s32.totalorder %s42, 1
      %p573 = por %p571, %p572
      %p574 = scmp.ne.s32.totalorder %s566, %s569
      %p575 = scmp.eq.s32.totalorder %s42, 0
      %p576 = por %p574, %p575
      %p577 = scmp.ne.s32.totalorder %s566, %s569
      %p578 = scmp.eq.s32.totalorder %s47, 1
      %p579 = por %p577, %p578
      %p580 = scmp.ne.s32.totalorder %s569, %s570
      %p581 = scmp.eq.s32.totalorder %s47, 0
      %p582 = por %p580, %p581
      %p583 = scmp.ne.s32.totalorder %s569, %s570
      %p584 = scmp.eq.s32.totalorder %s48, 1
      %p585 = por %p583, %p584
      %p587 = scmp.ne.s32.totalorder %s570, %s586
      %p588 = scmp.eq.s32.totalorder %s48, 0
      %p589 = por %p587, %p588
      %p590 = scmp.le.s32.totalorder 1, %s42
      %p591 = scmp.lt.s32.totalorder %s42, 3
      %p592 = pnand %p590, %p591
      %p593 = pneg %p592
      // Predicated region
      $region9: #{decoder_forward.1} parent=5 // pred_check
        _
      $region10: #{decoder_forward.1} parent=5 // pred_check_branch
        %595 = sbr.rel (%p592) target = $region12
      $region11: #{decoder_forward.1} parent=5 // pred_region
        %s596 = ssub.s32 %s42, 1
        // Predicated region
        $region13: #{decoder_forward.1} parent=11 // pred_check
          %p597 = pneg %p115
        $region14: #{decoder_forward.1} parent=11 // pred_check_branch
          %599 = sbr.rel (%p597) target = $region16
        $region15: #{decoder_forward.1} parent=11 // pred_region
          %601 = vsyncadd [#allocation6], 0
          %s602 = sshll.u32 %s2, 4
          %s603 = int_to_ptr.hbm [resolvable:$true] %s602
          %s604 = sshll.u32 [#allocation5], 4
          %s605 = int_to_ptr.vmem [resolvable:$true] %s604
          %610 = dma.hbm_to_vmem [thread:$0]  %s603, 256, %s605, [#allocation6], 128, 128, 8
        $region16: #{decoder_forward.1} parent=11 // pred_fallthru
          _
        // Predicated region
        $region17: #{decoder_forward.1} parent=11 // pred_check
          %p611 = pneg %p136
        $region18: #{decoder_forward.1} parent=11 // pred_check_branch
          %613 = sbr.rel (%p611) target = $region20
        $region19: #{decoder_forward.1} parent=11 // pred_region
          %615 = vsyncadd [#allocation6], 0
          %s617 = sshll.u32 %s3, 4
          %s618 = int_to_ptr.hbm [resolvable:$true] %s617
          %s619 = sshll.u32 [#allocation7], 4
          %s620 = int_to_ptr.vmem [resolvable:$true] %s619
          %622 = dma.hbm_to_vmem [thread:$0]  %s618, 16, %s620, [#allocation6]
        $region20: #{decoder_forward.1} parent=11 // pred_fallthru
          _
        // Predicated region
        $region21: #{decoder_forward.1} parent=11 // pred_check
          %p623 = pneg %p157
        $region22: #{decoder_forward.1} parent=11 // pred_check_branch
          %625 = sbr.rel (%p623) target = $region24
        $region23: #{decoder_forward.1} parent=11 // pred_region
          _
        $region24: #{decoder_forward.1} parent=11 // pred_fallthru
          _
        // Predicated region
        $region25: #{decoder_forward.1} parent=11 // pred_check
          %p626 = pneg %p178
        $region26: #{decoder_forward.1} parent=11 // pred_check_branch
          %628 = sbr.rel (%p626) target = $region28
        $region27: #{decoder_forward.1} parent=11 // pred_region
          _
        $region28: #{decoder_forward.1} parent=11 // pred_fallthru
          _
        // Predicated region
        $region29: #{decoder_forward.1} parent=11 // pred_check
          %p629 = pneg %p199
        $region30: #{decoder_forward.1} parent=11 // pred_check_branch
          %631 = sbr.rel (%p629) target = $region32
        $region31: #{decoder_forward.1} parent=11 // pred_region
          _
        $region32: #{decoder_forward.1} parent=11 // pred_fallthru
          _
        // Predicated region
        $region33: #{decoder_forward.1} parent=11 // pred_check
          %p632 = pneg %p220
        $region34: #{decoder_forward.1} parent=11 // pred_check_branch
          %634 = sbr.rel (%p632) target = $region36
        $region35: #{decoder_forward.1} parent=11 // pred_region
          %636 = vsyncadd [#allocation9], 0
          %s638 = sshll.u32 %s7, 4
          %s639 = int_to_ptr.hbm [resolvable:$true] %s638
          %s640 = sshll.u32 [#allocation8], 4
          %s641 = int_to_ptr.vmem [resolvable:$true] %s640
          %643 = dma.hbm_to_vmem [thread:$0]  %s639, 16, %s641, [#allocation9]
        $region36: #{decoder_forward.1} parent=11 // pred_fallthru
          _
        // Predicated region
        $region37: #{decoder_forward.1} parent=11 // pred_check
          %p644 = pneg %p241
        $region38: #{decoder_forward.1} parent=11 // pred_check_branch
          %646 = sbr.rel (%p644) target = $region40
        $region39: #{decoder_forward.1} parent=11 // pred_region
          _
        $region40: #{decoder_forward.1} parent=11 // pred_fallthru
          _
        // Predicated region
        $region41: #{decoder_forward.1} parent=11 // pred_check
          %p647 = pneg %p262
        $region42: #{decoder_forward.1} parent=11 // pred_check_branch
          %649 = sbr.rel (%p647) target = $region44
        $region43: #{decoder_forward.1} parent=11 // pred_region
          _
        $region44: #{decoder_forward.1} parent=11 // pred_fallthru
          _
        // Predicated region
        $region45: #{decoder_forward.1} parent=11 // pred_check
          %p650 = pneg %p283
        $region46: #{decoder_forward.1} parent=11 // pred_check_branch
          %652 = sbr.rel (%p650) target = $region48
        $region47: #{decoder_forward.1} parent=11 // pred_region
          _
        $region48: #{decoder_forward.1} parent=11 // pred_fallthru
          _
        // Predicated region
        $region49: #{decoder_forward.1} parent=11 // pred_check
          %p653 = pneg %p304
        $region50: #{decoder_forward.1} parent=11 // pred_check_branch
          %655 = sbr.rel (%p653) target = $region52
        $region51: #{decoder_forward.1} parent=11 // pred_region
          %657 = vsyncadd [#allocation9], 0
          %s658 = sshll.u32 %s11, 4
          %s659 = int_to_ptr.hbm [resolvable:$true] %s658
          %s660 = sshll.u32 [#allocation10], 4
          %s661 = int_to_ptr.vmem [resolvable:$true] %s660
          %666 = dma.hbm_to_vmem [thread:$0]  %s659, 32, %s661, [#allocation9], 16, 16, 1
        $region52: #{decoder_forward.1} parent=11 // pred_fallthru
          _
        // Predicated region
        $region53: #{decoder_forward.1} parent=11 // pred_check
          %p667 = pneg %p325
        $region54: #{decoder_forward.1} parent=11 // pred_check_branch
          %669 = sbr.rel (%p667) target = $region56
        $region55: #{decoder_forward.1} parent=11 // pred_region
          _
        $region56: #{decoder_forward.1} parent=11 // pred_fallthru
          _
        // Predicated region
        $region57: #{decoder_forward.1} parent=11 // pred_check
          %p670 = pneg %p346
        $region58: #{decoder_forward.1} parent=11 // pred_check_branch
          %672 = sbr.rel (%p670) target = $region60
        $region59: #{decoder_forward.1} parent=11 // pred_region
          %674 = vsyncadd [#allocation12], 0
          %s675 = sshll.u32 %s13, 4
          %s676 = int_to_ptr.hbm [resolvable:$true] %s675
          %s677 = sshll.u32 [#allocation11], 4
          %s678 = int_to_ptr.vmem [resolvable:$true] %s677
          %683 = dma.hbm_to_vmem [thread:$0]  %s676, 32, %s678, [#allocation12], 16, 16, 1
        $region60: #{decoder_forward.1} parent=11 // pred_fallthru
          _
        // Predicated region
        $region61: #{decoder_forward.1} parent=11 // pred_check
          %p684 = pneg %p367
        $region62: #{decoder_forward.1} parent=11 // pred_check_branch
          %686 = sbr.rel (%p684) target = $region64
        $region63: #{decoder_forward.1} parent=11 // pred_region
          _
        $region64: #{decoder_forward.1} parent=11 // pred_fallthru
          _
        // Predicated region
        $region65: #{decoder_forward.1} parent=11 // pred_check
          %p687 = pneg %p388
        $region66: #{decoder_forward.1} parent=11 // pred_check_branch
          %689 = sbr.rel (%p687) target = $region68
        $region67: #{decoder_forward.1} parent=11 // pred_region
          %691 = vsyncadd [#allocation12], 0
          %s692 = sshll.u32 %s15, 4
          %s693 = int_to_ptr.hbm [resolvable:$true] %s692
          %s694 = sshll.u32 [#allocation13], 4
          %s695 = int_to_ptr.vmem [resolvable:$true] %s694
          %700 = dma.hbm_to_vmem [thread:$0]  %s693, 32, %s695, [#allocation12], 16, 16, 1
        $region68: #{decoder_forward.1} parent=11 // pred_fallthru
          _
        // Predicated region
        $region69: #{decoder_forward.1} parent=11 // pred_check
          %p701 = pneg %p409
        $region70: #{decoder_forward.1} parent=11 // pred_check_branch
          %703 = sbr.rel (%p701) target = $region72
        $region71: #{decoder_forward.1} parent=11 // pred_region
          _
        $region72: #{decoder_forward.1} parent=11 // pred_fallthru
          _
        // Predicated region
        $region73: #{decoder_forward.1} parent=11 // pred_check
          %p704 = pneg %p430
        $region74: #{decoder_forward.1} parent=11 // pred_check_branch
          %706 = sbr.rel (%p704) target = $region76
        $region75: #{decoder_forward.1} parent=11 // pred_region
          %708 = vsyncadd [#allocation15], 0
          %s709 = sshll.u32 %s17, 4
          %s710 = int_to_ptr.hbm [resolvable:$true] %s709
          %s711 = sshll.u32 [#allocation14], 4
          %s712 = int_to_ptr.vmem [resolvable:$true] %s711
          %717 = dma.hbm_to_vmem [thread:$0]  %s710, 32, %s712, [#allocation15], 16, 16, 1
        $region76: #{decoder_forward.1} parent=11 // pred_fallthru
          _
        // Predicated region
        $region77: #{decoder_forward.1} parent=11 // pred_check
          %p718 = pneg %p451
        $region78: #{decoder_forward.1} parent=11 // pred_check_branch
          %720 = sbr.rel (%p718) target = $region80
        $region79: #{decoder_forward.1} parent=11 // pred_region
          %722 = vsyncadd [#allocation15], 0
          %s723 = sshll.u32 %s18, 4
          %s724 = int_to_ptr.hbm [resolvable:$true] %s723
          %s725 = sshll.u32 [#allocation16], 4
          %s726 = int_to_ptr.vmem [resolvable:$true] %s725
          %731 = dma.hbm_to_vmem [thread:$0]  %s724, 32, %s726, [#allocation15], 16, 16, 1
        $region80: #{decoder_forward.1} parent=11 // pred_fallthru
          _
        // Predicated region
        $region81: #{decoder_forward.1} parent=11 // pred_check
          %p732 = pneg %p472
        $region82: #{decoder_forward.1} parent=11 // pred_check_branch
          %734 = sbr.rel (%p732) target = $region84
        $region83: #{decoder_forward.1} parent=11 // pred_region
          %736 = vsyncadd [#allocation18], 0
          %s737 = sshll.u32 %s19, 4
          %s738 = int_to_ptr.hbm [resolvable:$true] %s737
          %s739 = sshll.u32 [#allocation17], 4
          %s740 = int_to_ptr.vmem [resolvable:$true] %s739
          %745 = dma.hbm_to_vmem [thread:$0]  %s738, 32, %s740, [#allocation18], 16, 16, 1
        $region84: #{decoder_forward.1} parent=11 // pred_fallthru
          _
        // Predicated region
        $region85: #{decoder_forward.1} parent=11 // pred_check
          %p746 = pneg %p493
        $region86: #{decoder_forward.1} parent=11 // pred_check_branch
          %748 = sbr.rel (%p746) target = $region88
        $region87: #{decoder_forward.1} parent=11 // pred_region
          _
        $region88: #{decoder_forward.1} parent=11 // pred_fallthru
          _
        // Predicated region
        $region89: #{decoder_forward.1} parent=11 // pred_check
          %p749 = pneg %p514
        $region90: #{decoder_forward.1} parent=11 // pred_check_branch
          %751 = sbr.rel (%p749) target = $region92
        $region91: #{decoder_forward.1} parent=11 // pred_region
          %753 = vsyncadd [#allocation18], 0
          %s754 = sshll.u32 %s21, 4
          %s755 = int_to_ptr.hbm [resolvable:$true] %s754
          %s756 = sshll.u32 [#allocation19], 4
          %s757 = int_to_ptr.vmem [resolvable:$true] %s756
          %762 = dma.hbm_to_vmem [thread:$0]  %s755, 32, %s757, [#allocation18], 16, 16, 1
        $region92: #{decoder_forward.1} parent=11 // pred_fallthru
          _
        // Predicated region
        $region93: #{decoder_forward.1} parent=11 // pred_check
          %p763 = pneg %p535
        $region94: #{decoder_forward.1} parent=11 // pred_check_branch
          %765 = sbr.rel (%p763) target = $region96
        $region95: #{decoder_forward.1} parent=11 // pred_region
          _
        $region96: #{decoder_forward.1} parent=11 // pred_fallthru
          _
        // Predicated region
        $region97: #{decoder_forward.1} parent=11 // pred_check
          %p766 = pneg %p556
        $region98: #{decoder_forward.1} parent=11 // pred_check_branch
          %768 = sbr.rel (%p766) target = $region100
        $region99: #{decoder_forward.1} parent=11 // pred_region
          %770 = vsyncadd [#allocation21], 0
          %s771 = sshll.u32 %s23, 4
          %s772 = int_to_ptr.hbm [resolvable:$true] %s771
          %s773 = sshll.u32 [#allocation20], 4
          %s774 = int_to_ptr.vmem [resolvable:$true] %s773
          %779 = dma.hbm_to_vmem [thread:$0]  %s772, 32, %s774, [#allocation21], 16, 16, 1
        $region100: #{decoder_forward.1} parent=11 // pred_fallthru
          _
      $region12: #{decoder_forward.1} parent=5 // pred_fallthru
        _
      %p780 = scmp.lt.s32.totalorder %s42, 2
      // Predicated region
      $region101: #{decoder_forward.1} parent=5 // pred_check
        %p781 = pneg %p780
      $region102: #{decoder_forward.1} parent=5 // pred_check_branch
        %783 = sbr.rel (%p781) target = $region104
      $region103: #{decoder_forward.1} parent=5 // pred_region
        // Predicated region
        $region105: #{decoder_forward.1} parent=103 // pred_check
          %p784 = pneg %p62
        $region106: #{decoder_forward.1} parent=103 // pred_check_branch
          %786 = sbr.rel (%p784) target = $region108
        $region107: #{decoder_forward.1} parent=103 // pred_region
          %s787 = sand.u32 %s52, 1
          %s788 = scalar_lea.sflag [#allocation3], %s787
          %s789 = sand.u32 %s52, 1
          %s790 = smul.addr %s789, 8
          %s791 = scalar_lea.vmem [#allocation2], %s790
          %793 = vsyncadd %s788, 0
          %s794 = smul.addr %s42, 8
          %s795 = scalar_lea.hbm %s0, %s794
          %s797 = sshll.u32 %s795, 4
          %s798 = int_to_ptr.hbm [resolvable:$true] %s797
          %s799 = sshll.u32 %s791, 4
          %s800 = int_to_ptr.vmem [resolvable:$true] %s799
          %802 = dma.hbm_to_vmem [thread:$0]  %s798, 128, %s800, %s788
        $region108: #{decoder_forward.1} parent=103 // pred_fallthru
          _
        // Predicated region
        $region109: #{decoder_forward.1} parent=103 // pred_check
          %p803 = pneg %p88
        $region110: #{decoder_forward.1} parent=103 // pred_check_branch
          %805 = sbr.rel (%p803) target = $region112
        $region111: #{decoder_forward.1} parent=103 // pred_region
          %p806 = scmp.lt.s32.totalorder %s42, 1
          %s807 = scalar_select %p806, %s42, 1
          %s808 = smul.addr %s807, 2
          %s809 = smul.addr %s808, 8
          %s810 = scalar_lea.vmem %s1, %s809
        $region112: #{decoder_forward.1} parent=103 // pred_fallthru
          _
      $region104: #{decoder_forward.1} parent=5 // pred_fallthru
        _
      %p811 = scmp.le.s32.totalorder 1, %s42
      %p812 = scmp.lt.s32.totalorder %s42, 3
      %p813 = pnand %p811, %p812
      %p814 = pneg %p813
      // Predicated region
      $region113: #{decoder_forward.1} parent=5 // pred_check
        _
      $region114: #{decoder_forward.1} parent=5 // pred_check_branch
        %816 = sbr.rel (%p813) target = $region116
      $region115: #{decoder_forward.1} parent=5 // pred_region
        %s817 = ssub.s32 %s42, 1
        %s818 = sand.u32 %s55, 1
        %s819 = scalar_lea.sflag [#allocation3], %s818
        %s820 = sand.u32 %s55, 1
        %s821 = smul.addr %s820, 8
        %s822 = scalar_lea.vmem [#allocation2], %s821
        // Predicated region
        $region117: #{decoder_forward.1} parent=115 // pred_check
          %p823 = pneg %p68
        $region118: #{decoder_forward.1} parent=115 // pred_check_branch
          %825 = sbr.rel (%p823) target = $region120
        $region119: #{decoder_forward.1} parent=115 // pred_region
          %827 = dma.done %s819, 128
        $region120: #{decoder_forward.1} parent=115 // pred_fallthru
          _
        // Predicated region
        $region121: #{decoder_forward.1} parent=115 // pred_check
          %p828 = pneg %p115
        $region122: #{decoder_forward.1} parent=115 // pred_check_branch
          %830 = sbr.rel (%p828) target = $region124
        $region123: #{decoder_forward.1} parent=115 // pred_region
          %832 = dma.done [#allocation6], 256
        $region124: #{decoder_forward.1} parent=115 // pred_fallthru
          _
        // Predicated region
        $region125: #{decoder_forward.1} parent=115 // pred_check
          %p833 = pneg %p136
        $region126: #{decoder_forward.1} parent=115 // pred_check_branch
          %835 = sbr.rel (%p833) target = $region128
        $region127: #{decoder_forward.1} parent=115 // pred_region
          %837 = dma.done [#allocation6], 16
        $region128: #{decoder_forward.1} parent=115 // pred_fallthru
          _
        // Predicated region
        $region129: #{decoder_forward.1} parent=115 // pred_check
          %p838 = pneg %p220
        $region130: #{decoder_forward.1} parent=115 // pred_check_branch
          %840 = sbr.rel (%p838) target = $region132
        $region131: #{decoder_forward.1} parent=115 // pred_region
          %842 = dma.done [#allocation9], 16
        $region132: #{decoder_forward.1} parent=115 // pred_fallthru
          _
        // Predicated region
        $region133: #{decoder_forward.1} parent=115 // pred_check
          %p843 = pneg %p304
        $region134: #{decoder_forward.1} parent=115 // pred_check_branch
          %845 = sbr.rel (%p843) target = $region136
        $region135: #{decoder_forward.1} parent=115 // pred_region
          %847 = dma.done [#allocation9], 32
        $region136: #{decoder_forward.1} parent=115 // pred_fallthru
          _
        // Predicated region
        $region137: #{decoder_forward.1} parent=115 // pred_check
          %p848 = pneg %p346
        $region138: #{decoder_forward.1} parent=115 // pred_check_branch
          %850 = sbr.rel (%p848) target = $region140
        $region139: #{decoder_forward.1} parent=115 // pred_region
          %852 = dma.done [#allocation12], 32
        $region140: #{decoder_forward.1} parent=115 // pred_fallthru
          _
        // Predicated region
        $region141: #{decoder_forward.1} parent=115 // pred_check
          %p853 = pneg %p388
        $region142: #{decoder_forward.1} parent=115 // pred_check_branch
          %855 = sbr.rel (%p853) target = $region144
        $region143: #{decoder_forward.1} parent=115 // pred_region
          %857 = dma.done [#allocation12], 32
        $region144: #{decoder_forward.1} parent=115 // pred_fallthru
          _
        // Predicated region
        $region145: #{decoder_forward.1} parent=115 // pred_check
          %p858 = pneg %p430
        $region146: #{decoder_forward.1} parent=115 // pred_check_branch
          %860 = sbr.rel (%p858) target = $region148
        $region147: #{decoder_forward.1} parent=115 // pred_region
          %862 = dma.done [#allocation15], 32
        $region148: #{decoder_forward.1} parent=115 // pred_fallthru
          _
        // Predicated region
        $region149: #{decoder_forward.1} parent=115 // pred_check
          %p863 = pneg %p451
        $region150: #{decoder_forward.1} parent=115 // pred_check_branch
          %865 = sbr.rel (%p863) target = $region152
        $region151: #{decoder_forward.1} parent=115 // pred_region
          %867 = dma.done [#allocation15], 32
        $region152: #{decoder_forward.1} parent=115 // pred_fallthru
          _
        // Predicated region
        $region153: #{decoder_forward.1} parent=115 // pred_check
          %p868 = pneg %p472
        $region154: #{decoder_forward.1} parent=115 // pred_check_branch
          %870 = sbr.rel (%p868) target = $region156
        $region155: #{decoder_forward.1} parent=115 // pred_region
          %872 = dma.done [#allocation18], 32
        $region156: #{decoder_forward.1} parent=115 // pred_fallthru
          _
        // Predicated region
        $region157: #{decoder_forward.1} parent=115 // pred_check
          %p873 = pneg %p514
        $region158: #{decoder_forward.1} parent=115 // pred_check_branch
          %875 = sbr.rel (%p873) target = $region160
        $region159: #{decoder_forward.1} parent=115 // pred_region
          %877 = dma.done [#allocation18], 32
        $region160: #{decoder_forward.1} parent=115 // pred_fallthru
          _
        // Predicated region
        $region161: #{decoder_forward.1} parent=115 // pred_check
          %p878 = pneg %p556
        $region162: #{decoder_forward.1} parent=115 // pred_check_branch
          %880 = sbr.rel (%p878) target = $region164
        $region163: #{decoder_forward.1} parent=115 // pred_region
          %882 = dma.done [#allocation21], 32
        $region164: #{decoder_forward.1} parent=115 // pred_fallthru
          _
        %s883 = sand.u32 %s55, 1
        %s884 = scalar_lea.sflag [#allocation3], %s883
        %s885 = sand.u32 %s55, 1
        %s886 = smul.addr %s885, 8
        %s887 = scalar_lea.vmem [#allocation2], %s886
        %p888 = pneg %p68
        %p889 = pneg %p65
        %p890 = scmp.lt.s32.totalorder %s47, 1
        %s891 = scalar_select %p890, %s47, 1
        %s892 = smul.addr %s891, 2
        %s893 = smul.addr %s892, 8
        %s894 = scalar_lea.vmem %s1, %s893
        %p895 = pneg %p94
        %p896 = pneg %p91
        %p897 = pneg %p115
        %p898 = pneg %p112
        %p899 = pneg %p136
        %p900 = pneg %p133
        %p901 = pneg %p157
        %p902 = pneg %p154
        %p903 = pneg %p178
        %p904 = pneg %p175
        %p905 = pneg %p199
        %p906 = pneg %p196
        %p907 = pneg %p220
        %p908 = pneg %p217
        %p909 = pneg %p241
        %p910 = pneg %p238
        %p911 = pneg %p262
        %p912 = pneg %p259
        %p913 = pneg %p283
        %p914 = pneg %p280
        %p915 = pneg %p304
        %p916 = pneg %p301
        %p917 = pneg %p325
        %p918 = pneg %p322
        %p919 = pneg %p346
        %p920 = pneg %p343
        %p921 = pneg %p367
        %p922 = pneg %p364
        %p923 = pneg %p388
        %p924 = pneg %p385
        %p925 = pneg %p409
        %p926 = pneg %p406
        %p927 = pneg %p430
        %p928 = pneg %p427
        %p929 = pneg %p451
        %p930 = pneg %p448
        %p931 = pneg %p472
        %p932 = pneg %p469
        %p933 = pneg %p493
        %p934 = pneg %p490
        %p935 = pneg %p514
        %p936 = pneg %p511
        %p937 = pneg %p535
        %p938 = pneg %p532
        %p939 = pneg %p556
        %p940 = pneg %p553
        %p941 = pneg %p582
        %p942 = pneg %p579
        %s943 = sand.u32 %s569, 1
        %s944 = scalar_lea.sflag [#allocation4], %s943
        %s945 = sand.u32 %s569, 1
        %s946 = scalar_lea.vmem [#allocation22], %s945
        %p947 = scmp.lt.s32.totalorder %s47, 1
        %s948 = scalar_select %p947, %s47, 1
        %s949 = smul.addr %s948, 2
        %s950 = smul.addr %s949, 8
        %s951 = scalar_lea.vmem %s1, %s950
        %v952 = vld [vmem:[%s822] sm:$0xff]
        %v953 = vld [vmem:[%s951] sm:$0xff]
        %v954 = vld [vmem:[%s951 + $0x8] sm:$0x3]
        %v955 = vld [vmem:[#allocation5] sm:$0xff]
        %v956 = vld [vmem:[#allocation5 + $0x8] sm:$0xff]
        %v957 = vld [vmem:[#allocation7] sm:$0x1]
        %v959 = vperm.slane %v957, 0
        %vm961 = vcmask 130048
        %v963 = vsel %vm961, %v952, 0
        %965 = vmatpush.msra.mxu0 0.0
        %966 = vmatpush.msra.mxu0 0.0
        %967 = vmatpush.msra.mxu0 0.0
        %968 = vmatpush.msra.mxu0 0.0
        %969 = vmatpush.msra.mxu0 0.0
        %970 = vmatpush.msra.mxu0 0.0
        %971 = vmatpush.msra.mxu0 0.0
        %972 = vmatpush.msra.mxu0 0.0
        %973 = vmatpush.msra.mxu0 0.0
        %974 = vmatpush.msra.mxu0 0.0
        %975 = vmatpush.msra.mxu0 0.0
        %976 = vmatpush.msra.mxu0 0.0
        %977 = vmatpush.msra.mxu0 0.0
        %978 = vmatpush.msra.mxu0 0.0
        %979 = vmatpush.msra.mxu0 %v956
        %980 = vmatpush.msra.mxu0 %v955
        %981 = vmatmul.f32.gmra.mxu0 %v963
        %v982 = vpop.f32.mrf.mxu0
        %v983 = vadd.f32 %v959, %v982
        %984 = vdwg.mxu0
        %v985 = vld [vmem:[#allocation16] sm:$0x1]
        %v986 = vld [vmem:[#allocation17] sm:$0x1]
        %v987 = vld [vmem:[%s8] sm:$0xff]
        %v988 = vld [vmem:[%s8 + $0x8] sm:$0xff]
        %v989 = vld [vmem:[%s8 + $0x10] sm:$0xff]
        %v990 = vld [vmem:[%s8 + $0x18] sm:$0xff]
        %v991 = vld [vmem:[%s9] sm:$0x1]
        %v993 = vperm.slane %v991, 0
        %vm995 = vcmask 261120
        %v997 = vsel %vm995, %v983, 0
        %999 = vmatpush.msra.mxu0 0.0
        %1000 = vmatpush.msra.mxu0 0.0
        %1001 = vmatpush.msra.mxu0 0.0
        %1002 = vmatpush.msra.mxu0 0.0
        %1003 = vmatpush.msra.mxu0 0.0
        %1004 = vmatpush.msra.mxu0 0.0
        %1005 = vmatpush.msra.mxu0 0.0
        %1006 = vmatpush.msra.mxu0 0.0
        %1007 = vmatpush.msra.mxu0 0.0
        %1008 = vmatpush.msra.mxu0 0.0
        %1009 = vmatpush.msra.mxu0 0.0
        %1010 = vmatpush.msra.mxu0 0.0
        %1011 = vmatpush.msra.mxu0 %v990
        %1012 = vmatpush.msra.mxu0 %v989
        %1013 = vmatpush.msra.mxu0 %v988
        %1014 = vmatpush.msra.mxu0 %v987
        %1015 = vmatmul.f32.gmra.mxu0 %v997
        %v1016 = vpop.f32.mrf.mxu0
        %v1017 = vadd.f32 %v993, %v1016
        %1018 = vdwg.mxu0
        %v1019 = vld [vmem:[%s10] sm:$0xff]
        %v1020 = vld [vmem:[%s10 + $0x8] sm:$0xff]
        %v1021 = vld [vmem:[%s10 + $0x10] sm:$0xff]
        %v1022 = vld [vmem:[%s10 + $0x18] sm:$0xff]
        %v1023 = vld [vmem:[#allocation10] sm:$0x1]
        %v1024 = vmul.f32 %v1017, 0.35355338
        %1026 = vrot.lane.b32.xlu0 %v1017, 96
        %v1027 = vpop.permute.xlu0 %1026
        %vm1028 = vcmask 64512
        %v1030 = vsel %vm1028, %v1024, 0
        %v1032 = vsel %vm1028, %v1027, 0
        %1034 = vmatpush.xpose.msra.mxu0 0.0
        %1035 = vmatpush.xpose.msra.mxu0 0.0
        %1036 = vmatpush.xpose.msra.mxu0 0.0
        %1037 = vmatpush.xpose.msra.mxu0 0.0
        %1038 = vmatpush.xpose.msra.mxu0 0.0
        %1039 = vmatpush.xpose.msra.mxu0 0.0
        %1040 = vmatpush.xpose.msra.mxu0 0.0
        %1041 = vmatpush.xpose.msra.mxu0 0.0
        %1042 = vmatpush.xpose.msra.mxu0 0.0
        %1043 = vmatpush.xpose.msra.mxu0 0.0
        %1044 = vmatpush.xpose.msra.mxu0 0.0
        %1045 = vmatpush.xpose.msra.mxu0 0.0
        %1046 = vmatpush.xpose.msra.mxu0 0.0
        %1047 = vmatpush.xpose.msra.mxu0 0.0
        %1048 = vmatpush.xpose.msra.mxu0 0.0
        %1049 = vmatpush.xpose.msra.mxu0 %v1032
        %1050 = vmatmul.f32.gmra.mxu0 %v1030
        %v1051 = vpop.f32.mrf.mxu0
        %v1052 = vadd.f32 0.0, %v1051
        %1053 = vdwg.mxu0
        %v1054 = vsel %vm1028, %v1052, -inf
        %1055 = vmax.xlane.f32.xlu0 %v1054
        %v1056 = vpop.xlane.xlu0 %1055
        %v1057 = vsub.f32 %v1052, %v1056
        %v1058 = vmul.f32 %v1057, 1.442695
        %v1059 = vpow.pop %v1058
        %v1060 = vsel %vm1028, %v1059, 0.0
        %1061 = vadd.xlane.f32.xlu0 %v1060
        %v1062 = vpop.xlane.xlu0 %1061
        %v1063 = vrcp.pop %v1062
        %v1064 = vmul.f32 %v1059, %v1063
        %1065 = vrot.lane.b32.xlu0 %v1017, 64
        %v1066 = vpop.permute.xlu0 %1065
        %v1069 = vsel %vm1028, %v1064, 0
        %1071 = vmatpush.msra.mxu0 0.0
        %1072 = vmatpush.msra.mxu0 0.0
        %1073 = vmatpush.msra.mxu0 0.0
        %1074 = vmatpush.msra.mxu0 0.0
        %1075 = vmatpush.msra.mxu0 0.0
        %1076 = vmatpush.msra.mxu0 0.0
        %1077 = vmatpush.msra.mxu0 0.0
        %1078 = vmatpush.msra.mxu0 0.0
        %1079 = vmatpush.msra.mxu0 0.0
        %1080 = vmatpush.msra.mxu0 0.0
        %1081 = vmatpush.msra.mxu0 0.0
        %1082 = vmatpush.msra.mxu0 0.0
        %1083 = vmatpush.msra.mxu0 0.0
        %1084 = vmatpush.msra.mxu0 0.0
        %1085 = vmatpush.msra.mxu0 0.0
        %1086 = vmatpush.msra.mxu0 %v1066
        %1087 = vmatmul.f32.gmra.mxu0 %v1069
        %v1088 = vpop.f32.mrf.mxu0
        %v1089 = vadd.f32 0.0, %v1088
        %1090 = vdwg.mxu0
        %1091 = vrot.lane.b32.xlu0 %v1024, 120
        %v1092 = vpop.permute.xlu0 %1091
        %1093 = vrot.lane.b32.xlu0 %v1017, 88
        %v1094 = vpop.permute.xlu0 %1093
        %v1095 = vsel %vm1028, %v1092, 0
        %v1097 = vsel %vm1028, %v1094, 0
        %1099 = vmatpush.xpose.msra.mxu0 0.0
        %1100 = vmatpush.xpose.msra.mxu0 0.0
        %1101 = vmatpush.xpose.msra.mxu0 0.0
        %1102 = vmatpush.xpose.msra.mxu0 0.0
        %1103 = vmatpush.xpose.msra.mxu0 0.0
        %1104 = vmatpush.xpose.msra.mxu0 0.0
        %1105 = vmatpush.xpose.msra.mxu0 0.0
        %1106 = vmatpush.xpose.msra.mxu0 0.0
        %1107 = vmatpush.xpose.msra.mxu0 0.0
        %1108 = vmatpush.xpose.msra.mxu0 0.0
        %1109 = vmatpush.xpose.msra.mxu0 0.0
        %1110 = vmatpush.xpose.msra.mxu0 0.0
        %1111 = vmatpush.xpose.msra.mxu0 0.0
        %1112 = vmatpush.xpose.msra.mxu0 0.0
        %1113 = vmatpush.xpose.msra.mxu0 0.0
        %1114 = vmatpush.xpose.msra.mxu0 %v1097
        %1115 = vmatmul.f32.gmra.mxu0 %v1095
        %v1116 = vpop.f32.mrf.mxu0
        %v1117 = vadd.f32 0.0, %v1116
        %1118 = vdwg.mxu0
        %v1119 = vsel %vm1028, %v1117, -inf
        %1120 = vmax.xlane.f32.xlu0 %v1119
        %v1121 = vpop.xlane.xlu0 %1120
        %v1122 = vsub.f32 %v1117, %v1121
        %v1123 = vmul.f32 %v1122, 1.442695
        %v1124 = vpow.pop %v1123
        %v1125 = vsel %vm1028, %v1124, 0.0
        %1126 = vadd.xlane.f32.xlu0 %v1125
        %v1127 = vpop.xlane.xlu0 %1126
        %v1128 = vrcp.pop %v1127
        %v1129 = vmul.f32 %v1124, %v1128
        %1130 = vrot.lane.b32.xlu0 %v1017, 56
        %v1131 = vpop.permute.xlu0 %1130
        %v1134 = vsel %vm1028, %v1129, 0
        %1136 = vmatpush.msra.mxu0 0.0
        %1137 = vmatpush.msra.mxu0 0.0
        %1138 = vmatpush.msra.mxu0 0.0
        %1139 = vmatpush.msra.mxu0 0.0
        %1140 = vmatpush.msra.mxu0 0.0
        %1141 = vmatpush.msra.mxu0 0.0
        %1142 = vmatpush.msra.mxu0 0.0
        %1143 = vmatpush.msra.mxu0 0.0
        %1144 = vmatpush.msra.mxu0 0.0
        %1145 = vmatpush.msra.mxu0 0.0
        %1146 = vmatpush.msra.mxu0 0.0
        %1147 = vmatpush.msra.mxu0 0.0
        %1148 = vmatpush.msra.mxu0 0.0
        %1149 = vmatpush.msra.mxu0 0.0
        %1150 = vmatpush.msra.mxu0 0.0
        %1151 = vmatpush.msra.mxu0 %v1131
        %1152 = vmatmul.f32.gmra.mxu0 %v1134
        %v1153 = vpop.f32.mrf.mxu0
        %v1154 = vadd.f32 0.0, %v1153
        %1155 = vdwg.mxu0
        %v1157 = vsel %vm1028, %v1154, 0
        %1159 = vmatpush.msra.mxu0 0.0
        %1160 = vmatpush.msra.mxu0 0.0
        %1161 = vmatpush.msra.mxu0 0.0
        %1162 = vmatpush.msra.mxu0 0.0
        %1163 = vmatpush.msra.mxu0 0.0
        %1164 = vmatpush.msra.mxu0 0.0
        %1165 = vmatpush.msra.mxu0 0.0
        %1166 = vmatpush.msra.mxu0 0.0
        %1167 = vmatpush.msra.mxu0 0.0
        %1168 = vmatpush.msra.mxu0 0.0
        %1169 = vmatpush.msra.mxu0 0.0
        %1170 = vmatpush.msra.mxu0 0.0
        %1171 = vmatpush.msra.mxu0 0.0
        %1172 = vmatpush.msra.mxu0 0.0
        %1173 = vmatpush.msra.mxu0 0.0
        %1174 = vmatpush.msra.mxu0 %v1020
        %1175 = vmatmul.f32.gmra.mxu0 %v1157
        %v1176 = vpop.f32.mrf.mxu0
        %v1177 = vadd.f32 0.0, %v1176
        %1178 = vdwg.mxu0
        %v1180 = vsel %vm1028, %v1089, 0
        %1182 = vmatpush.msra.mxu0 0.0
        %1183 = vmatpush.msra.mxu0 0.0
        %1184 = vmatpush.msra.mxu0 0.0
        %1185 = vmatpush.msra.mxu0 0.0
        %1186 = vmatpush.msra.mxu0 0.0
        %1187 = vmatpush.msra.mxu0 0.0
        %1188 = vmatpush.msra.mxu0 0.0
        %1189 = vmatpush.msra.mxu0 0.0
        %1190 = vmatpush.msra.mxu0 0.0
        %1191 = vmatpush.msra.mxu0 0.0
        %1192 = vmatpush.msra.mxu0 0.0
        %1193 = vmatpush.msra.mxu0 0.0
        %1194 = vmatpush.msra.mxu0 0.0
        %1195 = vmatpush.msra.mxu0 0.0
        %1196 = vmatpush.msra.mxu0 0.0
        %1197 = vmatpush.msra.mxu0 %v1019
        %1198 = vmatmul.f32.gmra.mxu0 %v1180
        %v1199 = vpop.f32.mrf.mxu0
        %v1200 = vadd.f32 %v1177, %v1199
        %1201 = vdwg.mxu0
        %1202 = vrot.lane.b32.xlu0 %v1024, 112
        %v1203 = vpop.permute.xlu0 %1202
        %1204 = vrot.lane.b32.xlu0 %v1017, 80
        %v1205 = vpop.permute.xlu0 %1204
        %v1206 = vsel %vm1028, %v1203, 0
        %v1208 = vsel %vm1028, %v1205, 0
        %1210 = vmatpush.xpose.msra.mxu0 0.0
        %1211 = vmatpush.xpose.msra.mxu0 0.0
        %1212 = vmatpush.xpose.msra.mxu0 0.0
        %1213 = vmatpush.xpose.msra.mxu0 0.0
        %1214 = vmatpush.xpose.msra.mxu0 0.0
        %1215 = vmatpush.xpose.msra.mxu0 0.0
        %1216 = vmatpush.xpose.msra.mxu0 0.0
        %1217 = vmatpush.xpose.msra.mxu0 0.0
        %1218 = vmatpush.xpose.msra.mxu0 0.0
        %1219 = vmatpush.xpose.msra.mxu0 0.0
        %1220 = vmatpush.xpose.msra.mxu0 0.0
        %1221 = vmatpush.xpose.msra.mxu0 0.0
        %1222 = vmatpush.xpose.msra.mxu0 0.0
        %1223 = vmatpush.xpose.msra.mxu0 0.0
        %1224 = vmatpush.xpose.msra.mxu0 0.0
        %1225 = vmatpush.xpose.msra.mxu0 %v1208
        %1226 = vmatmul.f32.gmra.mxu0 %v1206
        %v1227 = vpop.f32.mrf.mxu0
        %v1228 = vadd.f32 0.0, %v1227
        %1229 = vdwg.mxu0
        %v1230 = vsel %vm1028, %v1228, -inf
        %1231 = vmax.xlane.f32.xlu0 %v1230
        %v1232 = vpop.xlane.xlu0 %1231
        %v1233 = vsub.f32 %v1228, %v1232
        %v1234 = vmul.f32 %v1233, 1.442695
        %v1235 = vpow.pop %v1234
        %v1236 = vsel %vm1028, %v1235, 0.0
        %1237 = vadd.xlane.f32.xlu0 %v1236
        %v1238 = vpop.xlane.xlu0 %1237
        %v1239 = vrcp.pop %v1238
        %v1240 = vmul.f32 %v1235, %v1239
        %1241 = vrot.lane.b32.xlu0 %v1017, 48
        %v1242 = vpop.permute.xlu0 %1241
        %v1245 = vsel %vm1028, %v1240, 0
        %1247 = vmatpush.msra.mxu0 0.0
        %1248 = vmatpush.msra.mxu0 0.0
        %1249 = vmatpush.msra.mxu0 0.0
        %1250 = vmatpush.msra.mxu0 0.0
        %1251 = vmatpush.msra.mxu0 0.0
        %1252 = vmatpush.msra.mxu0 0.0
        %1253 = vmatpush.msra.mxu0 0.0
        %1254 = vmatpush.msra.mxu0 0.0
        %1255 = vmatpush.msra.mxu0 0.0
        %1256 = vmatpush.msra.mxu0 0.0
        %1257 = vmatpush.msra.mxu0 0.0
        %1258 = vmatpush.msra.mxu0 0.0
        %1259 = vmatpush.msra.mxu0 0.0
        %1260 = vmatpush.msra.mxu0 0.0
        %1261 = vmatpush.msra.mxu0 0.0
        %1262 = vmatpush.msra.mxu0 %v1242
        %1263 = vmatmul.f32.gmra.mxu0 %v1245
        %v1264 = vpop.f32.mrf.mxu0
        %v1265 = vadd.f32 0.0, %v1264
        %1266 = vdwg.mxu0
        %v1268 = vsel %vm1028, %v1265, 0
        %1270 = vmatpush.msra.mxu0 0.0
        %1271 = vmatpush.msra.mxu0 0.0
        %1272 = vmatpush.msra.mxu0 0.0
        %1273 = vmatpush.msra.mxu0 0.0
        %1274 = vmatpush.msra.mxu0 0.0
        %1275 = vmatpush.msra.mxu0 0.0
        %1276 = vmatpush.msra.mxu0 0.0
        %1277 = vmatpush.msra.mxu0 0.0
        %1278 = vmatpush.msra.mxu0 0.0
        %1279 = vmatpush.msra.mxu0 0.0
        %1280 = vmatpush.msra.mxu0 0.0
        %1281 = vmatpush.msra.mxu0 0.0
        %1282 = vmatpush.msra.mxu0 0.0
        %1283 = vmatpush.msra.mxu0 0.0
        %1284 = vmatpush.msra.mxu0 0.0
        %1285 = vmatpush.msra.mxu0 %v1021
        %1286 = vmatmul.f32.gmra.mxu0 %v1268
        %v1287 = vpop.f32.mrf.mxu0
        %v1288 = vadd.f32 0.0, %v1287
        %1289 = vdwg.mxu0
        %v1290 = vadd.f32 %v1200, %v1288
        %1291 = vrot.lane.b32.xlu0 %v1024, 104
        %v1292 = vpop.permute.xlu0 %1291
        %1293 = vrot.lane.b32.xlu0 %v1017, 72
        %v1294 = vpop.permute.xlu0 %1293
        %v1295 = vsel %vm1028, %v1292, 0
        %v1297 = vsel %vm1028, %v1294, 0
        %1299 = vmatpush.xpose.msra.mxu0 0.0
        %1300 = vmatpush.xpose.msra.mxu0 0.0
        %1301 = vmatpush.xpose.msra.mxu0 0.0
        %1302 = vmatpush.xpose.msra.mxu0 0.0
        %1303 = vmatpush.xpose.msra.mxu0 0.0
        %1304 = vmatpush.xpose.msra.mxu0 0.0
        %1305 = vmatpush.xpose.msra.mxu0 0.0
        %1306 = vmatpush.xpose.msra.mxu0 0.0
        %1307 = vmatpush.xpose.msra.mxu0 0.0
        %1308 = vmatpush.xpose.msra.mxu0 0.0
        %1309 = vmatpush.xpose.msra.mxu0 0.0
        %1310 = vmatpush.xpose.msra.mxu0 0.0
        %1311 = vmatpush.xpose.msra.mxu0 0.0
        %1312 = vmatpush.xpose.msra.mxu0 0.0
        %1313 = vmatpush.xpose.msra.mxu0 0.0
        %1314 = vmatpush.xpose.msra.mxu0 %v1297
        %1315 = vmatmul.f32.gmra.mxu0 %v1295
        %v1316 = vpop.f32.mrf.mxu0
        %v1317 = vadd.f32 0.0, %v1316
        %1318 = vdwg.mxu0
        %v1319 = vsel %vm1028, %v1317, -inf
        %1320 = vmax.xlane.f32.xlu0 %v1319
        %v1321 = vpop.xlane.xlu0 %1320
        %v1322 = vsub.f32 %v1317, %v1321
        %v1323 = vmul.f32 %v1322, 1.442695
        %v1324 = vpow.pop %v1323
        %v1325 = vsel %vm1028, %v1324, 0.0
        %1326 = vadd.xlane.f32.xlu0 %v1325
        %v1327 = vpop.xlane.xlu0 %1326
        %v1328 = vrcp.pop %v1327
        %v1329 = vmul.f32 %v1324, %v1328
        %1330 = vrot.lane.b32.xlu0 %v1017, 40
        %v1331 = vpop.permute.xlu0 %1330
        %v1334 = vsel %vm1028, %v1329, 0
        %1336 = vmatpush.msra.mxu0 0.0
        %1337 = vmatpush.msra.mxu0 0.0
        %1338 = vmatpush.msra.mxu0 0.0
        %1339 = vmatpush.msra.mxu0 0.0
        %1340 = vmatpush.msra.mxu0 0.0
        %1341 = vmatpush.msra.mxu0 0.0
        %1342 = vmatpush.msra.mxu0 0.0
        %1343 = vmatpush.msra.mxu0 0.0
        %1344 = vmatpush.msra.mxu0 0.0
        %1345 = vmatpush.msra.mxu0 0.0
        %1346 = vmatpush.msra.mxu0 0.0
        %1347 = vmatpush.msra.mxu0 0.0
        %1348 = vmatpush.msra.mxu0 0.0
        %1349 = vmatpush.msra.mxu0 0.0
        %1350 = vmatpush.msra.mxu0 0.0
        %1351 = vmatpush.msra.mxu0 %v1331
        %1352 = vmatmul.f32.gmra.mxu0 %v1334
        %v1353 = vpop.f32.mrf.mxu0
        %v1354 = vadd.f32 0.0, %v1353
        %1355 = vdwg.mxu0
        %v1357 = vsel %vm1028, %v1354, 0
        %1359 = vmatpush.msra.mxu0 0.0
        %1360 = vmatpush.msra.mxu0 0.0
        %1361 = vmatpush.msra.mxu0 0.0
        %1362 = vmatpush.msra.mxu0 0.0
        %1363 = vmatpush.msra.mxu0 0.0
        %1364 = vmatpush.msra.mxu0 0.0
        %1365 = vmatpush.msra.mxu0 0.0
        %1366 = vmatpush.msra.mxu0 0.0
        %1367 = vmatpush.msra.mxu0 0.0
        %1368 = vmatpush.msra.mxu0 0.0
        %1369 = vmatpush.msra.mxu0 0.0
        %1370 = vmatpush.msra.mxu0 0.0
        %1371 = vmatpush.msra.mxu0 0.0
        %1372 = vmatpush.msra.mxu0 0.0
        %1373 = vmatpush.msra.mxu0 0.0
        %1374 = vmatpush.msra.mxu0 %v1022
        %1375 = vmatmul.f32.gmra.mxu0 %v1357
        %v1376 = vpop.f32.mrf.mxu0
        %v1377 = vadd.f32 0.0, %v1376
        %1378 = vdwg.mxu0
        %v1379 = vadd.f32 %v1290, %v1377
        %v1381 = vperm.slane %v1023, 0
        %v1383 = vadd.f32 %v1379, %v1381
        %v1384 = vadd.f32 %v983, %v1383
        %v1385 = vsel %vm995, %v1384, 0.0
        %1386 = vadd.xlane.f32.xlu0 %v1385
        %v1387 = vpop.xlane.xlu0 %1386
        %v1388 = vrcp.pop 32.0
        %v1389 = vmul.f32 32.0, %v1388
        %v1390 = vsub.f32 1.0, %v1389
        %v1391 = vmul.f32 %v1388, %v1390
        %v1392 = vadd.f32 %v1388, %v1391
        %vm1393 = vweird.f32 %v1388
        %v1394 = vsel %vm1393, %v1388, %v1392
        %v1395 = vmul.f32 %v1387, %v1394
        %v1396 = vsub.f32 %v1384, %v1395
        %v1397 = vmul.f32 %v1396, %v1396
        %v1398 = vsel %vm995, %v1397, 0.0
        %1399 = vadd.xlane.f32.xlu0 %v1398
        %v1400 = vpop.xlane.xlu0 %1399
        %v1401 = vmul.f32 %v1400, %v1394
        %v1402 = vadd.f32 %v1401, 1e-05
        %v1403 = vrsqrt.pop %v1402
        %v1404 = vmul.f32 %v1403, %v1402
        %v1405 = vmul.f32 %v1404, %v1403
        %v1406 = vmul.f32 0.5, %v1405
        %v1407 = vsub.f32 1.5, %v1406
        %v1408 = vmul.f32 %v1403, %v1407
        %vm1409 = vweird.f32 %v1402
        %vm1410 = vweird.f32 %v1403
        %vm1411 = vmor %vm1409, %vm1410
        %v1412 = vsel %vm1411, %v1403, %v1408
        %v1413 = vmul.f32 %v1396, %v1412
        %v1415 = vperm.slane %v985, 0
        %v1417 = vmul.f32 %v1413, %v1415
        %v1419 = vperm.slane %v986, 0
        %v1421 = vadd.f32 %v1417, %v1419
        %v1422 = vld [vmem:[%s12] sm:$0xff]
        %v1423 = vld [vmem:[%s12 + $0x8] sm:$0xff]
        %v1424 = vld [vmem:[%s12 + $0x10] sm:$0xff]
        %v1425 = vld [vmem:[%s12 + $0x18] sm:$0xff]
        %v1426 = vld [vmem:[#allocation11] sm:$0x1]
        %v1428 = vperm.slane %v1426, 0
        %v1431 = vsel %vm995, %v1421, 0
        %1433 = vmatpush.msra.mxu0 0.0
        %1434 = vmatpush.msra.mxu0 0.0
        %1435 = vmatpush.msra.mxu0 0.0
        %1436 = vmatpush.msra.mxu0 0.0
        %1437 = vmatpush.msra.mxu0 0.0
        %1438 = vmatpush.msra.mxu0 0.0
        %1439 = vmatpush.msra.mxu0 0.0
        %1440 = vmatpush.msra.mxu0 0.0
        %1441 = vmatpush.msra.mxu0 0.0
        %1442 = vmatpush.msra.mxu0 0.0
        %1443 = vmatpush.msra.mxu0 0.0
        %1444 = vmatpush.msra.mxu0 0.0
        %1445 = vmatpush.msra.mxu0 %v1425
        %1446 = vmatpush.msra.mxu0 %v1424
        %1447 = vmatpush.msra.mxu0 %v1423
        %1448 = vmatpush.msra.mxu0 %v1422
        %1449 = vmatmul.f32.gmra.mxu0 %v1431
        %v1450 = vpop.f32.mrf.mxu0
        %v1451 = vadd.f32 %v1428, %v1450
        %1452 = vdwg.mxu0
        %v1453 = vld [vmem:[%s14] sm:$0xff]
        %v1454 = vld [vmem:[%s14 + $0x8] sm:$0xff]
        %v1455 = vld [vmem:[%s14 + $0x10] sm:$0xff]
        %v1456 = vld [vmem:[%s14 + $0x18] sm:$0xff]
        %v1457 = vld [vmem:[#allocation13] sm:$0x1]
        %v1459 = vperm.slane %v1457, 0
        %v1462 = vsel %vm995, %v953, 0
        %v1465 = vsel %vm995, %v954, 0
        %1467 = vmatpush.msra.mxu0 0.0
        %1468 = vmatpush.msra.mxu0 0.0
        %1469 = vmatpush.msra.mxu0 0.0
        %1470 = vmatpush.msra.mxu0 0.0
        %1471 = vmatpush.msra.mxu0 0.0
        %1472 = vmatpush.msra.mxu0 0.0
        %1473 = vmatpush.msra.mxu0 0.0
        %1474 = vmatpush.msra.mxu0 0.0
        %1475 = vmatpush.msra.mxu0 0.0
        %1476 = vmatpush.msra.mxu0 0.0
        %1477 = vmatpush.msra.mxu0 0.0
        %1478 = vmatpush.msra.mxu0 0.0
        %1479 = vmatpush.msra.mxu0 %v1456
        %1480 = vmatpush.msra.mxu0 %v1455
        %1481 = vmatpush.msra.mxu0 %v1454
        %1482 = vmatpush.msra.mxu0 %v1453
        %1483 = vmatmul.f32.gmra.mxu0 %v1462
        %v1484 = vpop.f32.mrf.mxu0
        %v1485 = vadd.f32 %v1459, %v1484
        %1486 = vmatmul.f32.gmra.mxu0 %v1465
        %v1487 = vpop.f32.mrf.mxu0
        %v1488 = vadd.f32 %v1459, %v1487
        %1489 = vdwg.mxu0
        %v1490 = vld [vmem:[%s16] sm:$0xff]
        %v1491 = vld [vmem:[%s16 + $0x8] sm:$0xff]
        %v1492 = vld [vmem:[%s16 + $0x10] sm:$0xff]
        %v1493 = vld [vmem:[%s16 + $0x18] sm:$0xff]
        %v1494 = vld [vmem:[#allocation14] sm:$0x1]
        %v1495 = vmul.f32 %v1451, 0.35355338
        %v1497 = vsel %vm1028, %v1495, 0
        %v1500 = vsel %vm1028, %v1485, 0
        %v1503 = vsel %vm1028, %v1488, 0
        %1505 = vmatpush.xpose.msra.mxu0 0.0
        %1506 = vmatpush.xpose.msra.mxu0 0.0
        %1507 = vmatpush.xpose.msra.mxu0 0.0
        %1508 = vmatpush.xpose.msra.mxu0 0.0
        %1509 = vmatpush.xpose.msra.mxu0 0.0
        %1510 = vmatpush.xpose.msra.mxu0 0.0
        %1511 = vmatpush.xpose.msra.mxu0 0.0
        %1512 = vmatpush.xpose.msra.mxu0 0.0
        %1513 = vmatpush.xpose.msra.mxu0 0.0
        %1514 = vmatpush.xpose.msra.mxu0 0.0
        %1515 = vmatpush.xpose.msra.mxu0 0.0
        %1516 = vmatpush.xpose.msra.mxu0 0.0
        %1517 = vmatpush.xpose.msra.mxu0 0.0
        %1518 = vmatpush.xpose.msra.mxu0 0.0
        %1519 = vmatpush.xpose.msra.mxu0 %v1503
        %1520 = vmatpush.xpose.msra.mxu0 %v1500
        %1521 = vmatmul.f32.gmra.mxu0 %v1497
        %v1522 = vpop.f32.mrf.mxu0
        %v1523 = vadd.f32 0.0, %v1522
        %1524 = vdwg.mxu0
        %vm1525 = vcmask 80896
        %v1526 = vsel %vm1525, %v1523, -inf
        %1527 = vmax.xlane.f32.xlu0 %v1526
        %v1528 = vpop.xlane.xlu0 %1527
        %v1529 = vsub.f32 %v1523, %v1528
        %v1530 = vmul.f32 %v1529, 1.442695
        %v1531 = vpow.pop %v1530
        %v1532 = vsel %vm1525, %v1531, 0.0
        %1533 = vadd.xlane.f32.xlu0 %v1532
        %v1534 = vpop.xlane.xlu0 %1533
        %v1535 = vrcp.pop %v1534
        %v1536 = vmul.f32 %v1531, %v1535
        %1537 = vrot.lane.b32.xlu0 %v1485, 96
        %v1538 = vpop.permute.xlu0 %1537
        %1539 = vrot.lane.b32.xlu0 %v1488, 96
        %v1540 = vpop.permute.xlu0 %1539
        %v1543 = vsel %vm1525, %v1536, 0
        %vm1545 = vcmask 1041408
        %v1546 = vsel %vm1545, %v1540, 0
        %1548 = vmatpush.msra.mxu0 0.0
        %1549 = vmatpush.msra.mxu0 0.0
        %1550 = vmatpush.msra.mxu0 0.0
        %1551 = vmatpush.msra.mxu0 0.0
        %1552 = vmatpush.msra.mxu0 0.0
        %1553 = vmatpush.msra.mxu0 0.0
        %1554 = vmatpush.msra.mxu0 0.0
        %1555 = vmatpush.msra.mxu0 0.0
        %1556 = vmatpush.msra.mxu0 0.0
        %1557 = vmatpush.msra.mxu0 0.0
        %1558 = vmatpush.msra.mxu0 0.0
        %1559 = vmatpush.msra.mxu0 0.0
        %1560 = vmatpush.msra.mxu0 0.0
        %1561 = vmatpush.msra.mxu0 0.0
        %1562 = vmatpush.msra.mxu0 %v1546
        %1563 = vmatpush.msra.mxu0 %v1538
        %1564 = vmatmul.f32.gmra.mxu0 %v1543
        %v1565 = vpop.f32.mrf.mxu0
        %v1566 = vadd.f32 0.0, %v1565
        %1567 = vdwg.mxu0
        %1568 = vrot.lane.b32.xlu0 %v1495, 120
        %v1569 = vpop.permute.xlu0 %1568
        %1570 = vrot.lane.b32.xlu0 %v1485, 120
        %v1571 = vpop.permute.xlu0 %1570
        %1572 = vrot.lane.b32.xlu0 %v1488, 120
        %v1573 = vpop.permute.xlu0 %1572
        %v1574 = vsel %vm1028, %v1569, 0
        %v1576 = vsel %vm1028, %v1571, 0
        %v1578 = vsel %vm1028, %v1573, 0
        %1580 = vmatpush.xpose.msra.mxu0 0.0
        %1581 = vmatpush.xpose.msra.mxu0 0.0
        %1582 = vmatpush.xpose.msra.mxu0 0.0
        %1583 = vmatpush.xpose.msra.mxu0 0.0
        %1584 = vmatpush.xpose.msra.mxu0 0.0
        %1585 = vmatpush.xpose.msra.mxu0 0.0
        %1586 = vmatpush.xpose.msra.mxu0 0.0
        %1587 = vmatpush.xpose.msra.mxu0 0.0
        %1588 = vmatpush.xpose.msra.mxu0 0.0
        %1589 = vmatpush.xpose.msra.mxu0 0.0
        %1590 = vmatpush.xpose.msra.mxu0 0.0
        %1591 = vmatpush.xpose.msra.mxu0 0.0
        %1592 = vmatpush.xpose.msra.mxu0 0.0
        %1593 = vmatpush.xpose.msra.mxu0 0.0
        %1594 = vmatpush.xpose.msra.mxu0 %v1578
        %1595 = vmatpush.xpose.msra.mxu0 %v1576
        %1596 = vmatmul.f32.gmra.mxu0 %v1574
        %v1597 = vpop.f32.mrf.mxu0
        %v1598 = vadd.f32 0.0, %v1597
        %1599 = vdwg.mxu0
        %v1600 = vsel %vm1525, %v1598, -inf
        %1601 = vmax.xlane.f32.xlu0 %v1600
        %v1602 = vpop.xlane.xlu0 %1601
        %v1603 = vsub.f32 %v1598, %v1602
        %v1604 = vmul.f32 %v1603, 1.442695
        %v1605 = vpow.pop %v1604
        %v1606 = vsel %vm1525, %v1605, 0.0
        %1607 = vadd.xlane.f32.xlu0 %v1606
        %v1608 = vpop.xlane.xlu0 %1607
        %v1609 = vrcp.pop %v1608
        %v1610 = vmul.f32 %v1605, %v1609
        %1611 = vrot.lane.b32.xlu0 %v1485, 88
        %v1612 = vpop.permute.xlu0 %1611
        %1613 = vrot.lane.b32.xlu0 %v1488, 88
        %v1614 = vpop.permute.xlu0 %1613
        %v1617 = vsel %vm1525, %v1610, 0
        %v1619 = vsel %vm1545, %v1614, 0
        %1621 = vmatpush.msra.mxu0 0.0
        %1622 = vmatpush.msra.mxu0 0.0
        %1623 = vmatpush.msra.mxu0 0.0
        %1624 = vmatpush.msra.mxu0 0.0
        %1625 = vmatpush.msra.mxu0 0.0
        %1626 = vmatpush.msra.mxu0 0.0
        %1627 = vmatpush.msra.mxu0 0.0
        %1628 = vmatpush.msra.mxu0 0.0
        %1629 = vmatpush.msra.mxu0 0.0
        %1630 = vmatpush.msra.mxu0 0.0
        %1631 = vmatpush.msra.mxu0 0.0
        %1632 = vmatpush.msra.mxu0 0.0
        %1633 = vmatpush.msra.mxu0 0.0
        %1634 = vmatpush.msra.mxu0 0.0
        %1635 = vmatpush.msra.mxu0 %v1619
        %1636 = vmatpush.msra.mxu0 %v1612
        %1637 = vmatmul.f32.gmra.mxu0 %v1617
        %v1638 = vpop.f32.mrf.mxu0
        %v1639 = vadd.f32 0.0, %v1638
        %1640 = vdwg.mxu0
        %v1642 = vsel %vm1028, %v1639, 0
        %1644 = vmatpush.msra.mxu0 0.0
        %1645 = vmatpush.msra.mxu0 0.0
        %1646 = vmatpush.msra.mxu0 0.0
        %1647 = vmatpush.msra.mxu0 0.0
        %1648 = vmatpush.msra.mxu0 0.0
        %1649 = vmatpush.msra.mxu0 0.0
        %1650 = vmatpush.msra.mxu0 0.0
        %1651 = vmatpush.msra.mxu0 0.0
        %1652 = vmatpush.msra.mxu0 0.0
        %1653 = vmatpush.msra.mxu0 0.0
        %1654 = vmatpush.msra.mxu0 0.0
        %1655 = vmatpush.msra.mxu0 0.0
        %1656 = vmatpush.msra.mxu0 0.0
        %1657 = vmatpush.msra.mxu0 0.0
        %1658 = vmatpush.msra.mxu0 0.0
        %1659 = vmatpush.msra.mxu0 %v1491
        %1660 = vmatmul.f32.gmra.mxu0 %v1642
        %v1661 = vpop.f32.mrf.mxu0
        %v1662 = vadd.f32 0.0, %v1661
        %1663 = vdwg.mxu0
        %v1665 = vsel %vm1028, %v1566, 0
        %1667 = vmatpush.msra.mxu0 0.0
        %1668 = vmatpush.msra.mxu0 0.0
        %1669 = vmatpush.msra.mxu0 0.0
        %1670 = vmatpush.msra.mxu0 0.0
        %1671 = vmatpush.msra.mxu0 0.0
        %1672 = vmatpush.msra.mxu0 0.0
        %1673 = vmatpush.msra.mxu0 0.0
        %1674 = vmatpush.msra.mxu0 0.0
        %1675 = vmatpush.msra.mxu0 0.0
        %1676 = vmatpush.msra.mxu0 0.0
        %1677 = vmatpush.msra.mxu0 0.0
        %1678 = vmatpush.msra.mxu0 0.0
        %1679 = vmatpush.msra.mxu0 0.0
        %1680 = vmatpush.msra.mxu0 0.0
        %1681 = vmatpush.msra.mxu0 0.0
        %1682 = vmatpush.msra.mxu0 %v1490
        %1683 = vmatmul.f32.gmra.mxu0 %v1665
        %v1684 = vpop.f32.mrf.mxu0
        %v1685 = vadd.f32 %v1662, %v1684
        %1686 = vdwg.mxu0
        %1687 = vrot.lane.b32.xlu0 %v1495, 112
        %v1688 = vpop.permute.xlu0 %1687
        %1689 = vrot.lane.b32.xlu0 %v1485, 112
        %v1690 = vpop.permute.xlu0 %1689
        %1691 = vrot.lane.b32.xlu0 %v1488, 112
        %v1692 = vpop.permute.xlu0 %1691
        %v1693 = vsel %vm1028, %v1688, 0
        %v1695 = vsel %vm1028, %v1690, 0
        %v1697 = vsel %vm1028, %v1692, 0
        %1699 = vmatpush.xpose.msra.mxu0 0.0
        %1700 = vmatpush.xpose.msra.mxu0 0.0
        %1701 = vmatpush.xpose.msra.mxu0 0.0
        %1702 = vmatpush.xpose.msra.mxu0 0.0
        %1703 = vmatpush.xpose.msra.mxu0 0.0
        %1704 = vmatpush.xpose.msra.mxu0 0.0
        %1705 = vmatpush.xpose.msra.mxu0 0.0
        %1706 = vmatpush.xpose.msra.mxu0 0.0
        %1707 = vmatpush.xpose.msra.mxu0 0.0
        %1708 = vmatpush.xpose.msra.mxu0 0.0
        %1709 = vmatpush.xpose.msra.mxu0 0.0
        %1710 = vmatpush.xpose.msra.mxu0 0.0
        %1711 = vmatpush.xpose.msra.mxu0 0.0
        %1712 = vmatpush.xpose.msra.mxu0 0.0
        %1713 = vmatpush.xpose.msra.mxu0 %v1697
        %1714 = vmatpush.xpose.msra.mxu0 %v1695
        %1715 = vmatmul.f32.gmra.mxu0 %v1693
        %v1716 = vpop.f32.mrf.mxu0
        %v1717 = vadd.f32 0.0, %v1716
        %1718 = vdwg.mxu0
        %v1719 = vsel %vm1525, %v1717, -inf
        %1720 = vmax.xlane.f32.xlu0 %v1719
        %v1721 = vpop.xlane.xlu0 %1720
        %v1722 = vsub.f32 %v1717, %v1721
        %v1723 = vmul.f32 %v1722, 1.442695
        %v1724 = vpow.pop %v1723
        %v1725 = vsel %vm1525, %v1724, 0.0
        %1726 = vadd.xlane.f32.xlu0 %v1725
        %v1727 = vpop.xlane.xlu0 %1726
        %v1728 = vrcp.pop %v1727
        %v1729 = vmul.f32 %v1724, %v1728
        %1730 = vrot.lane.b32.xlu0 %v1485, 80
        %v1731 = vpop.permute.xlu0 %1730
        %1732 = vrot.lane.b32.xlu0 %v1488, 80
        %v1733 = vpop.permute.xlu0 %1732
        %v1736 = vsel %vm1525, %v1729, 0
        %v1738 = vsel %vm1545, %v1733, 0
        %1740 = vmatpush.msra.mxu0 0.0
        %1741 = vmatpush.msra.mxu0 0.0
        %1742 = vmatpush.msra.mxu0 0.0
        %1743 = vmatpush.msra.mxu0 0.0
        %1744 = vmatpush.msra.mxu0 0.0
        %1745 = vmatpush.msra.mxu0 0.0
        %1746 = vmatpush.msra.mxu0 0.0
        %1747 = vmatpush.msra.mxu0 0.0
        %1748 = vmatpush.msra.mxu0 0.0
        %1749 = vmatpush.msra.mxu0 0.0
        %1750 = vmatpush.msra.mxu0 0.0
        %1751 = vmatpush.msra.mxu0 0.0
        %1752 = vmatpush.msra.mxu0 0.0
        %1753 = vmatpush.msra.mxu0 0.0
        %1754 = vmatpush.msra.mxu0 %v1738
        %1755 = vmatpush.msra.mxu0 %v1731
        %1756 = vmatmul.f32.gmra.mxu0 %v1736
        %v1757 = vpop.f32.mrf.mxu0
        %v1758 = vadd.f32 0.0, %v1757
        %1759 = vdwg.mxu0
        %v1761 = vsel %vm1028, %v1758, 0
        %1763 = vmatpush.msra.mxu0 0.0
        %1764 = vmatpush.msra.mxu0 0.0
        %1765 = vmatpush.msra.mxu0 0.0
        %1766 = vmatpush.msra.mxu0 0.0
        %1767 = vmatpush.msra.mxu0 0.0
        %1768 = vmatpush.msra.mxu0 0.0
        %1769 = vmatpush.msra.mxu0 0.0
        %1770 = vmatpush.msra.mxu0 0.0
        %1771 = vmatpush.msra.mxu0 0.0
        %1772 = vmatpush.msra.mxu0 0.0
        %1773 = vmatpush.msra.mxu0 0.0
        %1774 = vmatpush.msra.mxu0 0.0
        %1775 = vmatpush.msra.mxu0 0.0
        %1776 = vmatpush.msra.mxu0 0.0
        %1777 = vmatpush.msra.mxu0 0.0
        %1778 = vmatpush.msra.mxu0 %v1492
        %1779 = vmatmul.f32.gmra.mxu0 %v1761
        %v1780 = vpop.f32.mrf.mxu0
        %v1781 = vadd.f32 0.0, %v1780
        %1782 = vdwg.mxu0
        %v1783 = vadd.f32 %v1685, %v1781
        %1784 = vrot.lane.b32.xlu0 %v1495, 104
        %v1785 = vpop.permute.xlu0 %1784
        %1786 = vrot.lane.b32.xlu0 %v1485, 104
        %v1787 = vpop.permute.xlu0 %1786
        %1788 = vrot.lane.b32.xlu0 %v1488, 104
        %v1789 = vpop.permute.xlu0 %1788
        %v1790 = vsel %vm1028, %v1785, 0
        %v1792 = vsel %vm1028, %v1787, 0
        %v1794 = vsel %vm1028, %v1789, 0
        %1796 = vmatpush.xpose.msra.mxu0 0.0
        %1797 = vmatpush.xpose.msra.mxu0 0.0
        %1798 = vmatpush.xpose.msra.mxu0 0.0
        %1799 = vmatpush.xpose.msra.mxu0 0.0
        %1800 = vmatpush.xpose.msra.mxu0 0.0
        %1801 = vmatpush.xpose.msra.mxu0 0.0
        %1802 = vmatpush.xpose.msra.mxu0 0.0
        %1803 = vmatpush.xpose.msra.mxu0 0.0
        %1804 = vmatpush.xpose.msra.mxu0 0.0
        %1805 = vmatpush.xpose.msra.mxu0 0.0
        %1806 = vmatpush.xpose.msra.mxu0 0.0
        %1807 = vmatpush.xpose.msra.mxu0 0.0
        %1808 = vmatpush.xpose.msra.mxu0 0.0
        %1809 = vmatpush.xpose.msra.mxu0 0.0
        %1810 = vmatpush.xpose.msra.mxu0 %v1794
        %1811 = vmatpush.xpose.msra.mxu0 %v1792
        %1812 = vmatmul.f32.gmra.mxu0 %v1790
        %v1813 = vpop.f32.mrf.mxu0
        %v1814 = vadd.f32 0.0, %v1813
        %1815 = vdwg.mxu0
        %v1816 = vsel %vm1525, %v1814, -inf
        %1817 = vmax.xlane.f32.xlu0 %v1816
        %v1818 = vpop.xlane.xlu0 %1817
        %v1819 = vsub.f32 %v1814, %v1818
        %v1820 = vmul.f32 %v1819, 1.442695
        %v1821 = vpow.pop %v1820
        %v1822 = vsel %vm1525, %v1821, 0.0
        %1823 = vadd.xlane.f32.xlu0 %v1822
        %v1824 = vpop.xlane.xlu0 %1823
        %v1825 = vrcp.pop %v1824
        %v1826 = vmul.f32 %v1821, %v1825
        %1827 = vrot.lane.b32.xlu0 %v1485, 72
        %v1828 = vpop.permute.xlu0 %1827
        %1829 = vrot.lane.b32.xlu0 %v1488, 72
        %v1830 = vpop.permute.xlu0 %1829
        %v1833 = vsel %vm1525, %v1826, 0
        %v1835 = vsel %vm1545, %v1830, 0
        %1837 = vmatpush.msra.mxu0 0.0
        %1838 = vmatpush.msra.mxu0 0.0
        %1839 = vmatpush.msra.mxu0 0.0
        %1840 = vmatpush.msra.mxu0 0.0
        %1841 = vmatpush.msra.mxu0 0.0
        %1842 = vmatpush.msra.mxu0 0.0
        %1843 = vmatpush.msra.mxu0 0.0
        %1844 = vmatpush.msra.mxu0 0.0
        %1845 = vmatpush.msra.mxu0 0.0
        %1846 = vmatpush.msra.mxu0 0.0
        %1847 = vmatpush.msra.mxu0 0.0
        %1848 = vmatpush.msra.mxu0 0.0
        %1849 = vmatpush.msra.mxu0 0.0
        %1850 = vmatpush.msra.mxu0 0.0
        %1851 = vmatpush.msra.mxu0 %v1835
        %1852 = vmatpush.msra.mxu0 %v1828
        %1853 = vmatmul.f32.gmra.mxu0 %v1833
        %v1854 = vpop.f32.mrf.mxu0
        %v1855 = vadd.f32 0.0, %v1854
        %1856 = vdwg.mxu0
        %v1858 = vsel %vm1028, %v1855, 0
        %1860 = vmatpush.msra.mxu0 0.0
        %1861 = vmatpush.msra.mxu0 0.0
        %1862 = vmatpush.msra.mxu0 0.0
        %1863 = vmatpush.msra.mxu0 0.0
        %1864 = vmatpush.msra.mxu0 0.0
        %1865 = vmatpush.msra.mxu0 0.0
        %1866 = vmatpush.msra.mxu0 0.0
        %1867 = vmatpush.msra.mxu0 0.0
        %1868 = vmatpush.msra.mxu0 0.0
        %1869 = vmatpush.msra.mxu0 0.0
        %1870 = vmatpush.msra.mxu0 0.0
        %1871 = vmatpush.msra.mxu0 0.0
        %1872 = vmatpush.msra.mxu0 0.0
        %1873 = vmatpush.msra.mxu0 0.0
        %1874 = vmatpush.msra.mxu0 0.0
        %1875 = vmatpush.msra.mxu0 %v1493
        %1876 = vmatmul.f32.gmra.mxu0 %v1858
        %v1877 = vpop.f32.mrf.mxu0
        %v1878 = vadd.f32 0.0, %v1877
        %1879 = vdwg.mxu0
        %v1880 = vadd.f32 %v1783, %v1878
        %v1882 = vperm.slane %v1494, 0
        %v1884 = vadd.f32 %v1880, %v1882
        %v1885 = vadd.f32 %v1421, %v1884
        %v1886 = vsel %vm995, %v1885, 0.0
        %1887 = vadd.xlane.f32.xlu0 %v1886
        %v1888 = vpop.xlane.xlu0 %1887
        %v1889 = vmul.f32 %v1888, %v1394
        %v1890 = vsub.f32 %v1885, %v1889
        %v1891 = vmul.f32 %v1890, %v1890
        %v1892 = vsel %vm995, %v1891, 0.0
        %1893 = vadd.xlane.f32.xlu0 %v1892
        %v1894 = vpop.xlane.xlu0 %1893
        %v1895 = vmul.f32 %v1894, %v1394
        %v1896 = vadd.f32 %v1895, 1e-05
        %v1897 = vrsqrt.pop %v1896
        %v1898 = vmul.f32 %v1897, %v1896
        %v1899 = vmul.f32 %v1898, %v1897
        %v1900 = vmul.f32 0.5, %v1899
        %v1901 = vsub.f32 1.5, %v1900
        %v1902 = vmul.f32 %v1897, %v1901
        %vm1903 = vweird.f32 %v1896
        %vm1904 = vweird.f32 %v1897
        %vm1905 = vmor %vm1903, %vm1904
        %v1906 = vsel %vm1905, %v1897, %v1902
        %v1907 = vmul.f32 %v1890, %v1906
        %v1908 = vmul.f32 %v1907, %v1415
        %v1909 = vadd.f32 %v1908, %v1419
        %v1910 = vld [vmem:[%s20] sm:$0xff]
        %v1911 = vld [vmem:[%s20 + $0x8] sm:$0xff]
        %v1912 = vld [vmem:[%s20 + $0x10] sm:$0xff]
        %v1913 = vld [vmem:[%s20 + $0x18] sm:$0xff]
        %v1914 = vld [vmem:[#allocation19] sm:$0x1]
        %v1916 = vperm.slane %v1914, 0
        %v1919 = vsel %vm995, %v1909, 0
        %1921 = vmatpush.msra.mxu0 0.0
        %1922 = vmatpush.msra.mxu0 0.0
        %1923 = vmatpush.msra.mxu0 0.0
        %1924 = vmatpush.msra.mxu0 0.0
        %1925 = vmatpush.msra.mxu0 0.0
        %1926 = vmatpush.msra.mxu0 0.0
        %1927 = vmatpush.msra.mxu0 0.0
        %1928 = vmatpush.msra.mxu0 0.0
        %1929 = vmatpush.msra.mxu0 0.0
        %1930 = vmatpush.msra.mxu0 0.0
        %1931 = vmatpush.msra.mxu0 0.0
        %1932 = vmatpush.msra.mxu0 0.0
        %1933 = vmatpush.msra.mxu0 %v1913
        %1934 = vmatpush.msra.mxu0 %v1912
        %1935 = vmatpush.msra.mxu0 %v1911
        %1936 = vmatpush.msra.mxu0 %v1910
        %1937 = vmatmul.f32.gmra.mxu0 %v1919
        %v1938 = vpop.f32.mrf.mxu0
        %v1939 = vadd.f32 %v1916, %v1938
        %1940 = vdwg.mxu0
        %v1941 = vmax.f32 %v1939, 0.0
        %v1942 = vld [vmem:[%s22] sm:$0xff]
        %v1943 = vld [vmem:[%s22 + $0x8] sm:$0xff]
        %v1944 = vld [vmem:[%s22 + $0x10] sm:$0xff]
        %v1945 = vld [vmem:[%s22 + $0x18] sm:$0xff]
        %v1946 = vld [vmem:[%s22 + $0x20] sm:$0xff]
        %v1947 = vld [vmem:[%s22 + $0x28] sm:$0xff]
        %v1948 = vld [vmem:[%s22 + $0x30] sm:$0xff]
        %v1949 = vld [vmem:[%s22 + $0x38] sm:$0xff]
        %v1950 = vld [vmem:[#allocation20] sm:$0x1]
        %v1952 = vperm.slane %v1950, 0
        %vm1954 = vcmask 523264
        %v1956 = vsel %vm1954, %v1941, 0
        %1958 = vmatpush.msra.mxu0 0.0
        %1959 = vmatpush.msra.mxu0 0.0
        %1960 = vmatpush.msra.mxu0 0.0
        %1961 = vmatpush.msra.mxu0 0.0
        %1962 = vmatpush.msra.mxu0 0.0
        %1963 = vmatpush.msra.mxu0 0.0
        %1964 = vmatpush.msra.mxu0 0.0
        %1965 = vmatpush.msra.mxu0 0.0
        %1966 = vmatpush.msra.mxu0 %v1949
        %1967 = vmatpush.msra.mxu0 %v1948
        %1968 = vmatpush.msra.mxu0 %v1947
        %1969 = vmatpush.msra.mxu0 %v1946
        %1970 = vmatpush.msra.mxu0 %v1945
        %1971 = vmatpush.msra.mxu0 %v1944
        %1972 = vmatpush.msra.mxu0 %v1943
        %1973 = vmatpush.msra.mxu0 %v1942
        %1974 = vmatmul.f32.gmra.mxu0 %v1956
        %v1975 = vpop.f32.mrf.mxu0
        %v1976 = vadd.f32 %v1952, %v1975
        %1977 = vdwg.mxu0
        %v1978 = vadd.f32 %v1909, %v1976
        %v1979 = vsel %vm995, %v1978, 0.0
        %1980 = vadd.xlane.f32.xlu0 %v1979
        %v1981 = vpop.xlane.xlu0 %1980
        %v1982 = vmul.f32 %v1981, %v1394
        %v1983 = vsub.f32 %v1978, %v1982
        %v1984 = vmul.f32 %v1983, %v1983
        %v1985 = vsel %vm995, %v1984, 0.0
        %1986 = vadd.xlane.f32.xlu0 %v1985
        %v1987 = vpop.xlane.xlu0 %1986
        %v1988 = vmul.f32 %v1987, %v1394
        %v1989 = vadd.f32 %v1988, 1e-05
        %v1990 = vrsqrt.pop %v1989
        %v1991 = vmul.f32 %v1990, %v1989
        %v1992 = vmul.f32 %v1991, %v1990
        %v1993 = vmul.f32 0.5, %v1992
        %v1994 = vsub.f32 1.5, %v1993
        %v1995 = vmul.f32 %v1990, %v1994
        %vm1996 = vweird.f32 %v1989
        %vm1997 = vweird.f32 %v1990
        %vm1998 = vmor %vm1996, %vm1997
        %v1999 = vsel %vm1998, %v1990, %v1995
        %v2000 = vmul.f32 %v1983, %v1999
        %v2001 = vmul.f32 %v2000, %v1415
        %v2002 = vadd.f32 %v2001, %v1419
        %s2003 = scalar_lea.vmem [#allocation16], 1
        %v2004 = vld [vmem:[%s2003] sm:$0x1]
        %s2005 = scalar_lea.vmem [#allocation17], 1
        %v2006 = vld [vmem:[%s2005] sm:$0x1]
        %s2007 = scalar_lea.vmem %s8, 32
        %v2008 = vld [vmem:[%s2007] sm:$0xff]
        %v2009 = vld [vmem:[%s2007 + $0x8] sm:$0xff]
        %v2010 = vld [vmem:[%s2007 + $0x10] sm:$0xff]
        %v2011 = vld [vmem:[%s2007 + $0x18] sm:$0xff]
        %s2012 = scalar_lea.vmem %s9, 1
        %v2013 = vld [vmem:[%s2012] sm:$0x1]
        %v2015 = vperm.slane %v2013, 0
        %v2018 = vsel %vm995, %v2002, 0
        %2020 = vmatpush.msra.mxu0 0.0
        %2021 = vmatpush.msra.mxu0 0.0
        %2022 = vmatpush.msra.mxu0 0.0
        %2023 = vmatpush.msra.mxu0 0.0
        %2024 = vmatpush.msra.mxu0 0.0
        %2025 = vmatpush.msra.mxu0 0.0
        %2026 = vmatpush.msra.mxu0 0.0
        %2027 = vmatpush.msra.mxu0 0.0
        %2028 = vmatpush.msra.mxu0 0.0
        %2029 = vmatpush.msra.mxu0 0.0
        %2030 = vmatpush.msra.mxu0 0.0
        %2031 = vmatpush.msra.mxu0 0.0
        %2032 = vmatpush.msra.mxu0 %v2011
        %2033 = vmatpush.msra.mxu0 %v2010
        %2034 = vmatpush.msra.mxu0 %v2009
        %2035 = vmatpush.msra.mxu0 %v2008
        %2036 = vmatmul.f32.gmra.mxu0 %v2018
        %v2037 = vpop.f32.mrf.mxu0
        %v2038 = vadd.f32 %v2015, %v2037
        %2039 = vdwg.mxu0
        %s2040 = scalar_lea.vmem %s10, 32
        %v2041 = vld [vmem:[%s2040] sm:$0xff]
        %v2042 = vld [vmem:[%s2040 + $0x8] sm:$0xff]
        %v2043 = vld [vmem:[%s2040 + $0x10] sm:$0xff]
        %v2044 = vld [vmem:[%s2040 + $0x18] sm:$0xff]
        %s2045 = scalar_lea.vmem [#allocation10], 1
        %v2046 = vld [vmem:[%s2045] sm:$0x1]
        %v2047 = vmul.f32 %v2038, 0.35355338
        %2049 = vrot.lane.b32.xlu0 %v2038, 96
        %v2050 = vpop.permute.xlu0 %2049
        %v2052 = vsel %vm1028, %v2047, 0
        %v2054 = vsel %vm1028, %v2050, 0
        %2056 = vmatpush.xpose.msra.mxu0 0.0
        %2057 = vmatpush.xpose.msra.mxu0 0.0
        %2058 = vmatpush.xpose.msra.mxu0 0.0
        %2059 = vmatpush.xpose.msra.mxu0 0.0
        %2060 = vmatpush.xpose.msra.mxu0 0.0
        %2061 = vmatpush.xpose.msra.mxu0 0.0
        %2062 = vmatpush.xpose.msra.mxu0 0.0
        %2063 = vmatpush.xpose.msra.mxu0 0.0
        %2064 = vmatpush.xpose.msra.mxu0 0.0
        %2065 = vmatpush.xpose.msra.mxu0 0.0
        %2066 = vmatpush.xpose.msra.mxu0 0.0
        %2067 = vmatpush.xpose.msra.mxu0 0.0
        %2068 = vmatpush.xpose.msra.mxu0 0.0
        %2069 = vmatpush.xpose.msra.mxu0 0.0
        %2070 = vmatpush.xpose.msra.mxu0 0.0
        %2071 = vmatpush.xpose.msra.mxu0 %v2054
        %2072 = vmatmul.f32.gmra.mxu0 %v2052
        %v2073 = vpop.f32.mrf.mxu0
        %v2074 = vadd.f32 0.0, %v2073
        %2075 = vdwg.mxu0
        %v2076 = vsel %vm1028, %v2074, -inf
        %2077 = vmax.xlane.f32.xlu0 %v2076
        %v2078 = vpop.xlane.xlu0 %2077
        %v2079 = vsub.f32 %v2074, %v2078
        %v2080 = vmul.f32 %v2079, 1.442695
        %v2081 = vpow.pop %v2080
        %v2082 = vsel %vm1028, %v2081, 0.0
        %2083 = vadd.xlane.f32.xlu0 %v2082
        %v2084 = vpop.xlane.xlu0 %2083
        %v2085 = vrcp.pop %v2084
        %v2086 = vmul.f32 %v2081, %v2085
        %2087 = vrot.lane.b32.xlu0 %v2038, 64
        %v2088 = vpop.permute.xlu0 %2087
        %v2091 = vsel %vm1028, %v2086, 0
        %2093 = vmatpush.msra.mxu0 0.0
        %2094 = vmatpush.msra.mxu0 0.0
        %2095 = vmatpush.msra.mxu0 0.0
        %2096 = vmatpush.msra.mxu0 0.0
        %2097 = vmatpush.msra.mxu0 0.0
        %2098 = vmatpush.msra.mxu0 0.0
        %2099 = vmatpush.msra.mxu0 0.0
        %2100 = vmatpush.msra.mxu0 0.0
        %2101 = vmatpush.msra.mxu0 0.0
        %2102 = vmatpush.msra.mxu0 0.0
        %2103 = vmatpush.msra.mxu0 0.0
        %2104 = vmatpush.msra.mxu0 0.0
        %2105 = vmatpush.msra.mxu0 0.0
        %2106 = vmatpush.msra.mxu0 0.0
        %2107 = vmatpush.msra.mxu0 0.0
        %2108 = vmatpush.msra.mxu0 %v2088
        %2109 = vmatmul.f32.gmra.mxu0 %v2091
        %v2110 = vpop.f32.mrf.mxu0
        %v2111 = vadd.f32 0.0, %v2110
        %2112 = vdwg.mxu0
        %2113 = vrot.lane.b32.xlu0 %v2047, 120
        %v2114 = vpop.permute.xlu0 %2113
        %2115 = vrot.lane.b32.xlu0 %v2038, 88
        %v2116 = vpop.permute.xlu0 %2115
        %v2117 = vsel %vm1028, %v2114, 0
        %v2119 = vsel %vm1028, %v2116, 0
        %2121 = vmatpush.xpose.msra.mxu0 0.0
        %2122 = vmatpush.xpose.msra.mxu0 0.0
        %2123 = vmatpush.xpose.msra.mxu0 0.0
        %2124 = vmatpush.xpose.msra.mxu0 0.0
        %2125 = vmatpush.xpose.msra.mxu0 0.0
        %2126 = vmatpush.xpose.msra.mxu0 0.0
        %2127 = vmatpush.xpose.msra.mxu0 0.0
        %2128 = vmatpush.xpose.msra.mxu0 0.0
        %2129 = vmatpush.xpose.msra.mxu0 0.0
        %2130 = vmatpush.xpose.msra.mxu0 0.0
        %2131 = vmatpush.xpose.msra.mxu0 0.0
        %2132 = vmatpush.xpose.msra.mxu0 0.0
        %2133 = vmatpush.xpose.msra.mxu0 0.0
        %2134 = vmatpush.xpose.msra.mxu0 0.0
        %2135 = vmatpush.xpose.msra.mxu0 0.0
        %2136 = vmatpush.xpose.msra.mxu0 %v2119
        %2137 = vmatmul.f32.gmra.mxu0 %v2117
        %v2138 = vpop.f32.mrf.mxu0
        %v2139 = vadd.f32 0.0, %v2138
        %2140 = vdwg.mxu0
        %v2141 = vsel %vm1028, %v2139, -inf
        %2142 = vmax.xlane.f32.xlu0 %v2141
        %v2143 = vpop.xlane.xlu0 %2142
        %v2144 = vsub.f32 %v2139, %v2143
        %v2145 = vmul.f32 %v2144, 1.442695
        %v2146 = vpow.pop %v2145
        %v2147 = vsel %vm1028, %v2146, 0.0
        %2148 = vadd.xlane.f32.xlu0 %v2147
        %v2149 = vpop.xlane.xlu0 %2148
        %v2150 = vrcp.pop %v2149
        %v2151 = vmul.f32 %v2146, %v2150
        %2152 = vrot.lane.b32.xlu0 %v2038, 56
        %v2153 = vpop.permute.xlu0 %2152
        %v2156 = vsel %vm1028, %v2151, 0
        %2158 = vmatpush.msra.mxu0 0.0
        %2159 = vmatpush.msra.mxu0 0.0
        %2160 = vmatpush.msra.mxu0 0.0
        %2161 = vmatpush.msra.mxu0 0.0
        %2162 = vmatpush.msra.mxu0 0.0
        %2163 = vmatpush.msra.mxu0 0.0
        %2164 = vmatpush.msra.mxu0 0.0
        %2165 = vmatpush.msra.mxu0 0.0
        %2166 = vmatpush.msra.mxu0 0.0
        %2167 = vmatpush.msra.mxu0 0.0
        %2168 = vmatpush.msra.mxu0 0.0
        %2169 = vmatpush.msra.mxu0 0.0
        %2170 = vmatpush.msra.mxu0 0.0
        %2171 = vmatpush.msra.mxu0 0.0
        %2172 = vmatpush.msra.mxu0 0.0
        %2173 = vmatpush.msra.mxu0 %v2153
        %2174 = vmatmul.f32.gmra.mxu0 %v2156
        %v2175 = vpop.f32.mrf.mxu0
        %v2176 = vadd.f32 0.0, %v2175
        %2177 = vdwg.mxu0
        %v2179 = vsel %vm1028, %v2176, 0
        %2181 = vmatpush.msra.mxu0 0.0
        %2182 = vmatpush.msra.mxu0 0.0
        %2183 = vmatpush.msra.mxu0 0.0
        %2184 = vmatpush.msra.mxu0 0.0
        %2185 = vmatpush.msra.mxu0 0.0
        %2186 = vmatpush.msra.mxu0 0.0
        %2187 = vmatpush.msra.mxu0 0.0
        %2188 = vmatpush.msra.mxu0 0.0
        %2189 = vmatpush.msra.mxu0 0.0
        %2190 = vmatpush.msra.mxu0 0.0
        %2191 = vmatpush.msra.mxu0 0.0
        %2192 = vmatpush.msra.mxu0 0.0
        %2193 = vmatpush.msra.mxu0 0.0
        %2194 = vmatpush.msra.mxu0 0.0
        %2195 = vmatpush.msra.mxu0 0.0
        %2196 = vmatpush.msra.mxu0 %v2042
        %2197 = vmatmul.f32.gmra.mxu0 %v2179
        %v2198 = vpop.f32.mrf.mxu0
        %v2199 = vadd.f32 0.0, %v2198
        %2200 = vdwg.mxu0
        %v2202 = vsel %vm1028, %v2111, 0
        %2204 = vmatpush.msra.mxu0 0.0
        %2205 = vmatpush.msra.mxu0 0.0
        %2206 = vmatpush.msra.mxu0 0.0
        %2207 = vmatpush.msra.mxu0 0.0
        %2208 = vmatpush.msra.mxu0 0.0
        %2209 = vmatpush.msra.mxu0 0.0
        %2210 = vmatpush.msra.mxu0 0.0
        %2211 = vmatpush.msra.mxu0 0.0
        %2212 = vmatpush.msra.mxu0 0.0
        %2213 = vmatpush.msra.mxu0 0.0
        %2214 = vmatpush.msra.mxu0 0.0
        %2215 = vmatpush.msra.mxu0 0.0
        %2216 = vmatpush.msra.mxu0 0.0
        %2217 = vmatpush.msra.mxu0 0.0
        %2218 = vmatpush.msra.mxu0 0.0
        %2219 = vmatpush.msra.mxu0 %v2041
        %2220 = vmatmul.f32.gmra.mxu0 %v2202
        %v2221 = vpop.f32.mrf.mxu0
        %v2222 = vadd.f32 %v2199, %v2221
        %2223 = vdwg.mxu0
        %2224 = vrot.lane.b32.xlu0 %v2047, 112
        %v2225 = vpop.permute.xlu0 %2224
        %2226 = vrot.lane.b32.xlu0 %v2038, 80
        %v2227 = vpop.permute.xlu0 %2226
        %v2228 = vsel %vm1028, %v2225, 0
        %v2230 = vsel %vm1028, %v2227, 0
        %2232 = vmatpush.xpose.msra.mxu0 0.0
        %2233 = vmatpush.xpose.msra.mxu0 0.0
        %2234 = vmatpush.xpose.msra.mxu0 0.0
        %2235 = vmatpush.xpose.msra.mxu0 0.0
        %2236 = vmatpush.xpose.msra.mxu0 0.0
        %2237 = vmatpush.xpose.msra.mxu0 0.0
        %2238 = vmatpush.xpose.msra.mxu0 0.0
        %2239 = vmatpush.xpose.msra.mxu0 0.0
        %2240 = vmatpush.xpose.msra.mxu0 0.0
        %2241 = vmatpush.xpose.msra.mxu0 0.0
        %2242 = vmatpush.xpose.msra.mxu0 0.0
        %2243 = vmatpush.xpose.msra.mxu0 0.0
        %2244 = vmatpush.xpose.msra.mxu0 0.0
        %2245 = vmatpush.xpose.msra.mxu0 0.0
        %2246 = vmatpush.xpose.msra.mxu0 0.0
        %2247 = vmatpush.xpose.msra.mxu0 %v2230
        %2248 = vmatmul.f32.gmra.mxu0 %v2228
        %v2249 = vpop.f32.mrf.mxu0
        %v2250 = vadd.f32 0.0, %v2249
        %2251 = vdwg.mxu0
        %v2252 = vsel %vm1028, %v2250, -inf
        %2253 = vmax.xlane.f32.xlu0 %v2252
        %v2254 = vpop.xlane.xlu0 %2253
        %v2255 = vsub.f32 %v2250, %v2254
        %v2256 = vmul.f32 %v2255, 1.442695
        %v2257 = vpow.pop %v2256
        %v2258 = vsel %vm1028, %v2257, 0.0
        %2259 = vadd.xlane.f32.xlu0 %v2258
        %v2260 = vpop.xlane.xlu0 %2259
        %v2261 = vrcp.pop %v2260
        %v2262 = vmul.f32 %v2257, %v2261
        %2263 = vrot.lane.b32.xlu0 %v2038, 48
        %v2264 = vpop.permute.xlu0 %2263
        %v2267 = vsel %vm1028, %v2262, 0
        %2269 = vmatpush.msra.mxu0 0.0
        %2270 = vmatpush.msra.mxu0 0.0
        %2271 = vmatpush.msra.mxu0 0.0
        %2272 = vmatpush.msra.mxu0 0.0
        %2273 = vmatpush.msra.mxu0 0.0
        %2274 = vmatpush.msra.mxu0 0.0
        %2275 = vmatpush.msra.mxu0 0.0
        %2276 = vmatpush.msra.mxu0 0.0
        %2277 = vmatpush.msra.mxu0 0.0
        %2278 = vmatpush.msra.mxu0 0.0
        %2279 = vmatpush.msra.mxu0 0.0
        %2280 = vmatpush.msra.mxu0 0.0
        %2281 = vmatpush.msra.mxu0 0.0
        %2282 = vmatpush.msra.mxu0 0.0
        %2283 = vmatpush.msra.mxu0 0.0
        %2284 = vmatpush.msra.mxu0 %v2264
        %2285 = vmatmul.f32.gmra.mxu0 %v2267
        %v2286 = vpop.f32.mrf.mxu0
        %v2287 = vadd.f32 0.0, %v2286
        %2288 = vdwg.mxu0
        %v2290 = vsel %vm1028, %v2287, 0
        %2292 = vmatpush.msra.mxu0 0.0
        %2293 = vmatpush.msra.mxu0 0.0
        %2294 = vmatpush.msra.mxu0 0.0
        %2295 = vmatpush.msra.mxu0 0.0
        %2296 = vmatpush.msra.mxu0 0.0
        %2297 = vmatpush.msra.mxu0 0.0
        %2298 = vmatpush.msra.mxu0 0.0
        %2299 = vmatpush.msra.mxu0 0.0
        %2300 = vmatpush.msra.mxu0 0.0
        %2301 = vmatpush.msra.mxu0 0.0
        %2302 = vmatpush.msra.mxu0 0.0
        %2303 = vmatpush.msra.mxu0 0.0
        %2304 = vmatpush.msra.mxu0 0.0
        %2305 = vmatpush.msra.mxu0 0.0
        %2306 = vmatpush.msra.mxu0 0.0
        %2307 = vmatpush.msra.mxu0 %v2043
        %2308 = vmatmul.f32.gmra.mxu0 %v2290
        %v2309 = vpop.f32.mrf.mxu0
        %v2310 = vadd.f32 0.0, %v2309
        %2311 = vdwg.mxu0
        %v2312 = vadd.f32 %v2222, %v2310
        %2313 = vrot.lane.b32.xlu0 %v2047, 104
        %v2314 = vpop.permute.xlu0 %2313
        %2315 = vrot.lane.b32.xlu0 %v2038, 72
        %v2316 = vpop.permute.xlu0 %2315
        %v2317 = vsel %vm1028, %v2314, 0
        %v2319 = vsel %vm1028, %v2316, 0
        %2321 = vmatpush.xpose.msra.mxu0 0.0
        %2322 = vmatpush.xpose.msra.mxu0 0.0
        %2323 = vmatpush.xpose.msra.mxu0 0.0
        %2324 = vmatpush.xpose.msra.mxu0 0.0
        %2325 = vmatpush.xpose.msra.mxu0 0.0
        %2326 = vmatpush.xpose.msra.mxu0 0.0
        %2327 = vmatpush.xpose.msra.mxu0 0.0
        %2328 = vmatpush.xpose.msra.mxu0 0.0
        %2329 = vmatpush.xpose.msra.mxu0 0.0
        %2330 = vmatpush.xpose.msra.mxu0 0.0
        %2331 = vmatpush.xpose.msra.mxu0 0.0
        %2332 = vmatpush.xpose.msra.mxu0 0.0
        %2333 = vmatpush.xpose.msra.mxu0 0.0
        %2334 = vmatpush.xpose.msra.mxu0 0.0
        %2335 = vmatpush.xpose.msra.mxu0 0.0
        %2336 = vmatpush.xpose.msra.mxu0 %v2319
        %2337 = vmatmul.f32.gmra.mxu0 %v2317
        %v2338 = vpop.f32.mrf.mxu0
        %v2339 = vadd.f32 0.0, %v2338
        %2340 = vdwg.mxu0
        %v2341 = vsel %vm1028, %v2339, -inf
        %2342 = vmax.xlane.f32.xlu0 %v2341
        %v2343 = vpop.xlane.xlu0 %2342
        %v2344 = vsub.f32 %v2339, %v2343
        %v2345 = vmul.f32 %v2344, 1.442695
        %v2346 = vpow.pop %v2345
        %v2347 = vsel %vm1028, %v2346, 0.0
        %2348 = vadd.xlane.f32.xlu0 %v2347
        %v2349 = vpop.xlane.xlu0 %2348
        %v2350 = vrcp.pop %v2349
        %v2351 = vmul.f32 %v2346, %v2350
        %2352 = vrot.lane.b32.xlu0 %v2038, 40
        %v2353 = vpop.permute.xlu0 %2352
        %v2356 = vsel %vm1028, %v2351, 0
        %2358 = vmatpush.msra.mxu0 0.0
        %2359 = vmatpush.msra.mxu0 0.0
        %2360 = vmatpush.msra.mxu0 0.0
        %2361 = vmatpush.msra.mxu0 0.0
        %2362 = vmatpush.msra.mxu0 0.0
        %2363 = vmatpush.msra.mxu0 0.0
        %2364 = vmatpush.msra.mxu0 0.0
        %2365 = vmatpush.msra.mxu0 0.0
        %2366 = vmatpush.msra.mxu0 0.0
        %2367 = vmatpush.msra.mxu0 0.0
        %2368 = vmatpush.msra.mxu0 0.0
        %2369 = vmatpush.msra.mxu0 0.0
        %2370 = vmatpush.msra.mxu0 0.0
        %2371 = vmatpush.msra.mxu0 0.0
        %2372 = vmatpush.msra.mxu0 0.0
        %2373 = vmatpush.msra.mxu0 %v2353
        %2374 = vmatmul.f32.gmra.mxu0 %v2356
        %v2375 = vpop.f32.mrf.mxu0
        %v2376 = vadd.f32 0.0, %v2375
        %2377 = vdwg.mxu0
        %v2379 = vsel %vm1028, %v2376, 0
        %2381 = vmatpush.msra.mxu0 0.0
        %2382 = vmatpush.msra.mxu0 0.0
        %2383 = vmatpush.msra.mxu0 0.0
        %2384 = vmatpush.msra.mxu0 0.0
        %2385 = vmatpush.msra.mxu0 0.0
        %2386 = vmatpush.msra.mxu0 0.0
        %2387 = vmatpush.msra.mxu0 0.0
        %2388 = vmatpush.msra.mxu0 0.0
        %2389 = vmatpush.msra.mxu0 0.0
        %2390 = vmatpush.msra.mxu0 0.0
        %2391 = vmatpush.msra.mxu0 0.0
        %2392 = vmatpush.msra.mxu0 0.0
        %2393 = vmatpush.msra.mxu0 0.0
        %2394 = vmatpush.msra.mxu0 0.0
        %2395 = vmatpush.msra.mxu0 0.0
        %2396 = vmatpush.msra.mxu0 %v2044
        %2397 = vmatmul.f32.gmra.mxu0 %v2379
        %v2398 = vpop.f32.mrf.mxu0
        %v2399 = vadd.f32 0.0, %v2398
        %2400 = vdwg.mxu0
        %v2401 = vadd.f32 %v2312, %v2399
        %v2403 = vperm.slane %v2046, 0
        %v2405 = vadd.f32 %v2401, %v2403
        %v2406 = vadd.f32 %v2002, %v2405
        %v2407 = vsel %vm995, %v2406, 0.0
        %2408 = vadd.xlane.f32.xlu0 %v2407
        %v2409 = vpop.xlane.xlu0 %2408
        %v2410 = vmul.f32 %v2409, %v1394
        %v2411 = vsub.f32 %v2406, %v2410
        %v2412 = vmul.f32 %v2411, %v2411
        %v2413 = vsel %vm995, %v2412, 0.0
        %2414 = vadd.xlane.f32.xlu0 %v2413
        %v2415 = vpop.xlane.xlu0 %2414
        %v2416 = vmul.f32 %v2415, %v1394
        %v2417 = vadd.f32 %v2416, 1e-05
        %v2418 = vrsqrt.pop %v2417
        %v2419 = vmul.f32 %v2418, %v2417
        %v2420 = vmul.f32 %v2419, %v2418
        %v2421 = vmul.f32 0.5, %v2420
        %v2422 = vsub.f32 1.5, %v2421
        %v2423 = vmul.f32 %v2418, %v2422
        %vm2424 = vweird.f32 %v2417
        %vm2425 = vweird.f32 %v2418
        %vm2426 = vmor %vm2424, %vm2425
        %v2427 = vsel %vm2426, %v2418, %v2423
        %v2428 = vmul.f32 %v2411, %v2427
        %v2430 = vperm.slane %v2004, 0
        %v2432 = vmul.f32 %v2428, %v2430
        %v2434 = vperm.slane %v2006, 0
        %v2436 = vadd.f32 %v2432, %v2434
        %s2437 = scalar_lea.vmem %s12, 32
        %v2438 = vld [vmem:[%s2437] sm:$0xff]
        %v2439 = vld [vmem:[%s2437 + $0x8] sm:$0xff]
        %v2440 = vld [vmem:[%s2437 + $0x10] sm:$0xff]
        %v2441 = vld [vmem:[%s2437 + $0x18] sm:$0xff]
        %s2442 = scalar_lea.vmem [#allocation11], 1
        %v2443 = vld [vmem:[%s2442] sm:$0x1]
        %v2445 = vperm.slane %v2443, 0
        %v2448 = vsel %vm995, %v2436, 0
        %2450 = vmatpush.msra.mxu0 0.0
        %2451 = vmatpush.msra.mxu0 0.0
        %2452 = vmatpush.msra.mxu0 0.0
        %2453 = vmatpush.msra.mxu0 0.0
        %2454 = vmatpush.msra.mxu0 0.0
        %2455 = vmatpush.msra.mxu0 0.0
        %2456 = vmatpush.msra.mxu0 0.0
        %2457 = vmatpush.msra.mxu0 0.0
        %2458 = vmatpush.msra.mxu0 0.0
        %2459 = vmatpush.msra.mxu0 0.0
        %2460 = vmatpush.msra.mxu0 0.0
        %2461 = vmatpush.msra.mxu0 0.0
        %2462 = vmatpush.msra.mxu0 %v2441
        %2463 = vmatpush.msra.mxu0 %v2440
        %2464 = vmatpush.msra.mxu0 %v2439
        %2465 = vmatpush.msra.mxu0 %v2438
        %2466 = vmatmul.f32.gmra.mxu0 %v2448
        %v2467 = vpop.f32.mrf.mxu0
        %v2468 = vadd.f32 %v2445, %v2467
        %2469 = vdwg.mxu0
        %s2470 = scalar_lea.vmem %s14, 32
        %v2471 = vld [vmem:[%s2470] sm:$0xff]
        %v2472 = vld [vmem:[%s2470 + $0x8] sm:$0xff]
        %v2473 = vld [vmem:[%s2470 + $0x10] sm:$0xff]
        %v2474 = vld [vmem:[%s2470 + $0x18] sm:$0xff]
        %s2475 = scalar_lea.vmem [#allocation13], 1
        %v2476 = vld [vmem:[%s2475] sm:$0x1]
        %v2478 = vperm.slane %v2476, 0
        %2480 = vmatpush.msra.mxu0 0.0
        %2481 = vmatpush.msra.mxu0 0.0
        %2482 = vmatpush.msra.mxu0 0.0
        %2483 = vmatpush.msra.mxu0 0.0
        %2484 = vmatpush.msra.mxu0 0.0
        %2485 = vmatpush.msra.mxu0 0.0
        %2486 = vmatpush.msra.mxu0 0.0
        %2487 = vmatpush.msra.mxu0 0.0
        %2488 = vmatpush.msra.mxu0 0.0
        %2489 = vmatpush.msra.mxu0 0.0
        %2490 = vmatpush.msra.mxu0 0.0
        %2491 = vmatpush.msra.mxu0 0.0
        %2492 = vmatpush.msra.mxu0 %v2474
        %2493 = vmatpush.msra.mxu0 %v2473
        %2494 = vmatpush.msra.mxu0 %v2472
        %2495 = vmatpush.msra.mxu0 %v2471
        %2496 = vmatmul.f32.gmra.mxu0 %v1462
        %v2497 = vpop.f32.mrf.mxu0
        %v2498 = vadd.f32 %v2478, %v2497
        %2499 = vmatmul.f32.gmra.mxu0 %v1465
        %v2500 = vpop.f32.mrf.mxu0
        %v2501 = vadd.f32 %v2478, %v2500
        %2502 = vdwg.mxu0
        %s2503 = scalar_lea.vmem %s16, 32
        %v2504 = vld [vmem:[%s2503] sm:$0xff]
        %v2505 = vld [vmem:[%s2503 + $0x8] sm:$0xff]
        %v2506 = vld [vmem:[%s2503 + $0x10] sm:$0xff]
        %v2507 = vld [vmem:[%s2503 + $0x18] sm:$0xff]
        %s2508 = scalar_lea.vmem [#allocation14], 1
        %v2509 = vld [vmem:[%s2508] sm:$0x1]
        %v2510 = vmul.f32 %v2468, 0.35355338
        %v2512 = vsel %vm1028, %v2510, 0
        %v2515 = vsel %vm1028, %v2498, 0
        %v2518 = vsel %vm1028, %v2501, 0
        %2520 = vmatpush.xpose.msra.mxu0 0.0
        %2521 = vmatpush.xpose.msra.mxu0 0.0
        %2522 = vmatpush.xpose.msra.mxu0 0.0
        %2523 = vmatpush.xpose.msra.mxu0 0.0
        %2524 = vmatpush.xpose.msra.mxu0 0.0
        %2525 = vmatpush.xpose.msra.mxu0 0.0
        %2526 = vmatpush.xpose.msra.mxu0 0.0
        %2527 = vmatpush.xpose.msra.mxu0 0.0
        %2528 = vmatpush.xpose.msra.mxu0 0.0
        %2529 = vmatpush.xpose.msra.mxu0 0.0
        %2530 = vmatpush.xpose.msra.mxu0 0.0
        %2531 = vmatpush.xpose.msra.mxu0 0.0
        %2532 = vmatpush.xpose.msra.mxu0 0.0
        %2533 = vmatpush.xpose.msra.mxu0 0.0
        %2534 = vmatpush.xpose.msra.mxu0 %v2518
        %2535 = vmatpush.xpose.msra.mxu0 %v2515
        %2536 = vmatmul.f32.gmra.mxu0 %v2512
        %v2537 = vpop.f32.mrf.mxu0
        %v2538 = vadd.f32 0.0, %v2537
        %2539 = vdwg.mxu0
        %v2540 = vsel %vm1525, %v2538, -inf
        %2541 = vmax.xlane.f32.xlu0 %v2540
        %v2542 = vpop.xlane.xlu0 %2541
        %v2543 = vsub.f32 %v2538, %v2542
        %v2544 = vmul.f32 %v2543, 1.442695
        %v2545 = vpow.pop %v2544
        %v2546 = vsel %vm1525, %v2545, 0.0
        %2547 = vadd.xlane.f32.xlu0 %v2546
        %v2548 = vpop.xlane.xlu0 %2547
        %v2549 = vrcp.pop %v2548
        %v2550 = vmul.f32 %v2545, %v2549
        %2551 = vrot.lane.b32.xlu0 %v2498, 96
        %v2552 = vpop.permute.xlu0 %2551
        %2553 = vrot.lane.b32.xlu0 %v2501, 96
        %v2554 = vpop.permute.xlu0 %2553
        %v2557 = vsel %vm1525, %v2550, 0
        %v2559 = vsel %vm1545, %v2554, 0
        %2561 = vmatpush.msra.mxu0 0.0
        %2562 = vmatpush.msra.mxu0 0.0
        %2563 = vmatpush.msra.mxu0 0.0
        %2564 = vmatpush.msra.mxu0 0.0
        %2565 = vmatpush.msra.mxu0 0.0
        %2566 = vmatpush.msra.mxu0 0.0
        %2567 = vmatpush.msra.mxu0 0.0
        %2568 = vmatpush.msra.mxu0 0.0
        %2569 = vmatpush.msra.mxu0 0.0
        %2570 = vmatpush.msra.mxu0 0.0
        %2571 = vmatpush.msra.mxu0 0.0
        %2572 = vmatpush.msra.mxu0 0.0
        %2573 = vmatpush.msra.mxu0 0.0
        %2574 = vmatpush.msra.mxu0 0.0
        %2575 = vmatpush.msra.mxu0 %v2559
        %2576 = vmatpush.msra.mxu0 %v2552
        %2577 = vmatmul.f32.gmra.mxu0 %v2557
        %v2578 = vpop.f32.mrf.mxu0
        %v2579 = vadd.f32 0.0, %v2578
        %2580 = vdwg.mxu0
        %2581 = vrot.lane.b32.xlu0 %v2510, 120
        %v2582 = vpop.permute.xlu0 %2581
        %2583 = vrot.lane.b32.xlu0 %v2498, 120
        %v2584 = vpop.permute.xlu0 %2583
        %2585 = vrot.lane.b32.xlu0 %v2501, 120
        %v2586 = vpop.permute.xlu0 %2585
        %v2587 = vsel %vm1028, %v2582, 0
        %v2589 = vsel %vm1028, %v2584, 0
        %v2591 = vsel %vm1028, %v2586, 0
        %2593 = vmatpush.xpose.msra.mxu0 0.0
        %2594 = vmatpush.xpose.msra.mxu0 0.0
        %2595 = vmatpush.xpose.msra.mxu0 0.0
        %2596 = vmatpush.xpose.msra.mxu0 0.0
        %2597 = vmatpush.xpose.msra.mxu0 0.0
        %2598 = vmatpush.xpose.msra.mxu0 0.0
        %2599 = vmatpush.xpose.msra.mxu0 0.0
        %2600 = vmatpush.xpose.msra.mxu0 0.0
        %2601 = vmatpush.xpose.msra.mxu0 0.0
        %2602 = vmatpush.xpose.msra.mxu0 0.0
        %2603 = vmatpush.xpose.msra.mxu0 0.0
        %2604 = vmatpush.xpose.msra.mxu0 0.0
        %2605 = vmatpush.xpose.msra.mxu0 0.0
        %2606 = vmatpush.xpose.msra.mxu0 0.0
        %2607 = vmatpush.xpose.msra.mxu0 %v2591
        %2608 = vmatpush.xpose.msra.mxu0 %v2589
        %2609 = vmatmul.f32.gmra.mxu0 %v2587
        %v2610 = vpop.f32.mrf.mxu0
        %v2611 = vadd.f32 0.0, %v2610
        %2612 = vdwg.mxu0
        %v2613 = vsel %vm1525, %v2611, -inf
        %2614 = vmax.xlane.f32.xlu0 %v2613
        %v2615 = vpop.xlane.xlu0 %2614
        %v2616 = vsub.f32 %v2611, %v2615
        %v2617 = vmul.f32 %v2616, 1.442695
        %v2618 = vpow.pop %v2617
        %v2619 = vsel %vm1525, %v2618, 0.0
        %2620 = vadd.xlane.f32.xlu0 %v2619
        %v2621 = vpop.xlane.xlu0 %2620
        %v2622 = vrcp.pop %v2621
        %v2623 = vmul.f32 %v2618, %v2622
        %2624 = vrot.lane.b32.xlu0 %v2498, 88
        %v2625 = vpop.permute.xlu0 %2624
        %2626 = vrot.lane.b32.xlu0 %v2501, 88
        %v2627 = vpop.permute.xlu0 %2626
        %v2630 = vsel %vm1525, %v2623, 0
        %v2632 = vsel %vm1545, %v2627, 0
        %2634 = vmatpush.msra.mxu0 0.0
        %2635 = vmatpush.msra.mxu0 0.0
        %2636 = vmatpush.msra.mxu0 0.0
        %2637 = vmatpush.msra.mxu0 0.0
        %2638 = vmatpush.msra.mxu0 0.0
        %2639 = vmatpush.msra.mxu0 0.0
        %2640 = vmatpush.msra.mxu0 0.0
        %2641 = vmatpush.msra.mxu0 0.0
        %2642 = vmatpush.msra.mxu0 0.0
        %2643 = vmatpush.msra.mxu0 0.0
        %2644 = vmatpush.msra.mxu0 0.0
        %2645 = vmatpush.msra.mxu0 0.0
        %2646 = vmatpush.msra.mxu0 0.0
        %2647 = vmatpush.msra.mxu0 0.0
        %2648 = vmatpush.msra.mxu0 %v2632
        %2649 = vmatpush.msra.mxu0 %v2625
        %2650 = vmatmul.f32.gmra.mxu0 %v2630
        %v2651 = vpop.f32.mrf.mxu0
        %v2652 = vadd.f32 0.0, %v2651
        %2653 = vdwg.mxu0
        %v2655 = vsel %vm1028, %v2652, 0
        %2657 = vmatpush.msra.mxu0 0.0
        %2658 = vmatpush.msra.mxu0 0.0
        %2659 = vmatpush.msra.mxu0 0.0
        %2660 = vmatpush.msra.mxu0 0.0
        %2661 = vmatpush.msra.mxu0 0.0
        %2662 = vmatpush.msra.mxu0 0.0
        %2663 = vmatpush.msra.mxu0 0.0
        %2664 = vmatpush.msra.mxu0 0.0
        %2665 = vmatpush.msra.mxu0 0.0
        %2666 = vmatpush.msra.mxu0 0.0
        %2667 = vmatpush.msra.mxu0 0.0
        %2668 = vmatpush.msra.mxu0 0.0
        %2669 = vmatpush.msra.mxu0 0.0
        %2670 = vmatpush.msra.mxu0 0.0
        %2671 = vmatpush.msra.mxu0 0.0
        %2672 = vmatpush.msra.mxu0 %v2505
        %2673 = vmatmul.f32.gmra.mxu0 %v2655
        %v2674 = vpop.f32.mrf.mxu0
        %v2675 = vadd.f32 0.0, %v2674
        %2676 = vdwg.mxu0
        %v2678 = vsel %vm1028, %v2579, 0
        %2680 = vmatpush.msra.mxu0 0.0
        %2681 = vmatpush.msra.mxu0 0.0
        %2682 = vmatpush.msra.mxu0 0.0
        %2683 = vmatpush.msra.mxu0 0.0
        %2684 = vmatpush.msra.mxu0 0.0
        %2685 = vmatpush.msra.mxu0 0.0
        %2686 = vmatpush.msra.mxu0 0.0
        %2687 = vmatpush.msra.mxu0 0.0
        %2688 = vmatpush.msra.mxu0 0.0
        %2689 = vmatpush.msra.mxu0 0.0
        %2690 = vmatpush.msra.mxu0 0.0
        %2691 = vmatpush.msra.mxu0 0.0
        %2692 = vmatpush.msra.mxu0 0.0
        %2693 = vmatpush.msra.mxu0 0.0
        %2694 = vmatpush.msra.mxu0 0.0
        %2695 = vmatpush.msra.mxu0 %v2504
        %2696 = vmatmul.f32.gmra.mxu0 %v2678
        %v2697 = vpop.f32.mrf.mxu0
        %v2698 = vadd.f32 %v2675, %v2697
        %2699 = vdwg.mxu0
        %2700 = vrot.lane.b32.xlu0 %v2510, 112
        %v2701 = vpop.permute.xlu0 %2700
        %2702 = vrot.lane.b32.xlu0 %v2498, 112
        %v2703 = vpop.permute.xlu0 %2702
        %2704 = vrot.lane.b32.xlu0 %v2501, 112
        %v2705 = vpop.permute.xlu0 %2704
        %v2706 = vsel %vm1028, %v2701, 0
        %v2708 = vsel %vm1028, %v2703, 0
        %v2710 = vsel %vm1028, %v2705, 0
        %2712 = vmatpush.xpose.msra.mxu0 0.0
        %2713 = vmatpush.xpose.msra.mxu0 0.0
        %2714 = vmatpush.xpose.msra.mxu0 0.0
        %2715 = vmatpush.xpose.msra.mxu0 0.0
        %2716 = vmatpush.xpose.msra.mxu0 0.0
        %2717 = vmatpush.xpose.msra.mxu0 0.0
        %2718 = vmatpush.xpose.msra.mxu0 0.0
        %2719 = vmatpush.xpose.msra.mxu0 0.0
        %2720 = vmatpush.xpose.msra.mxu0 0.0
        %2721 = vmatpush.xpose.msra.mxu0 0.0
        %2722 = vmatpush.xpose.msra.mxu0 0.0
        %2723 = vmatpush.xpose.msra.mxu0 0.0
        %2724 = vmatpush.xpose.msra.mxu0 0.0
        %2725 = vmatpush.xpose.msra.mxu0 0.0
        %2726 = vmatpush.xpose.msra.mxu0 %v2710
        %2727 = vmatpush.xpose.msra.mxu0 %v2708
        %2728 = vmatmul.f32.gmra.mxu0 %v2706
        %v2729 = vpop.f32.mrf.mxu0
        %v2730 = vadd.f32 0.0, %v2729
        %2731 = vdwg.mxu0
        %v2732 = vsel %vm1525, %v2730, -inf
        %2733 = vmax.xlane.f32.xlu0 %v2732
        %v2734 = vpop.xlane.xlu0 %2733
        %v2735 = vsub.f32 %v2730, %v2734
        %v2736 = vmul.f32 %v2735, 1.442695
        %v2737 = vpow.pop %v2736
        %v2738 = vsel %vm1525, %v2737, 0.0
        %2739 = vadd.xlane.f32.xlu0 %v2738
        %v2740 = vpop.xlane.xlu0 %2739
        %v2741 = vrcp.pop %v2740
        %v2742 = vmul.f32 %v2737, %v2741
        %2743 = vrot.lane.b32.xlu0 %v2498, 80
        %v2744 = vpop.permute.xlu0 %2743
        %2745 = vrot.lane.b32.xlu0 %v2501, 80
        %v2746 = vpop.permute.xlu0 %2745
        %v2749 = vsel %vm1525, %v2742, 0
        %v2751 = vsel %vm1545, %v2746, 0
        %2753 = vmatpush.msra.mxu0 0.0
        %2754 = vmatpush.msra.mxu0 0.0
        %2755 = vmatpush.msra.mxu0 0.0
        %2756 = vmatpush.msra.mxu0 0.0
        %2757 = vmatpush.msra.mxu0 0.0
        %2758 = vmatpush.msra.mxu0 0.0
        %2759 = vmatpush.msra.mxu0 0.0
        %2760 = vmatpush.msra.mxu0 0.0
        %2761 = vmatpush.msra.mxu0 0.0
        %2762 = vmatpush.msra.mxu0 0.0
        %2763 = vmatpush.msra.mxu0 0.0
        %2764 = vmatpush.msra.mxu0 0.0
        %2765 = vmatpush.msra.mxu0 0.0
        %2766 = vmatpush.msra.mxu0 0.0
        %2767 = vmatpush.msra.mxu0 %v2751
        %2768 = vmatpush.msra.mxu0 %v2744
        %2769 = vmatmul.f32.gmra.mxu0 %v2749
        %v2770 = vpop.f32.mrf.mxu0
        %v2771 = vadd.f32 0.0, %v2770
        %2772 = vdwg.mxu0
        %v2774 = vsel %vm1028, %v2771, 0
        %2776 = vmatpush.msra.mxu0 0.0
        %2777 = vmatpush.msra.mxu0 0.0
        %2778 = vmatpush.msra.mxu0 0.0
        %2779 = vmatpush.msra.mxu0 0.0
        %2780 = vmatpush.msra.mxu0 0.0
        %2781 = vmatpush.msra.mxu0 0.0
        %2782 = vmatpush.msra.mxu0 0.0
        %2783 = vmatpush.msra.mxu0 0.0
        %2784 = vmatpush.msra.mxu0 0.0
        %2785 = vmatpush.msra.mxu0 0.0
        %2786 = vmatpush.msra.mxu0 0.0
        %2787 = vmatpush.msra.mxu0 0.0
        %2788 = vmatpush.msra.mxu0 0.0
        %2789 = vmatpush.msra.mxu0 0.0
        %2790 = vmatpush.msra.mxu0 0.0
        %2791 = vmatpush.msra.mxu0 %v2506
        %2792 = vmatmul.f32.gmra.mxu0 %v2774
        %v2793 = vpop.f32.mrf.mxu0
        %v2794 = vadd.f32 0.0, %v2793
        %2795 = vdwg.mxu0
        %v2796 = vadd.f32 %v2698, %v2794
        %2797 = vrot.lane.b32.xlu0 %v2510, 104
        %v2798 = vpop.permute.xlu0 %2797
        %2799 = vrot.lane.b32.xlu0 %v2498, 104
        %v2800 = vpop.permute.xlu0 %2799
        %2801 = vrot.lane.b32.xlu0 %v2501, 104
        %v2802 = vpop.permute.xlu0 %2801
        %v2803 = vsel %vm1028, %v2798, 0
        %v2805 = vsel %vm1028, %v2800, 0
        %v2807 = vsel %vm1028, %v2802, 0
        %2809 = vmatpush.xpose.msra.mxu0 0.0
        %2810 = vmatpush.xpose.msra.mxu0 0.0
        %2811 = vmatpush.xpose.msra.mxu0 0.0
        %2812 = vmatpush.xpose.msra.mxu0 0.0
        %2813 = vmatpush.xpose.msra.mxu0 0.0
        %2814 = vmatpush.xpose.msra.mxu0 0.0
        %2815 = vmatpush.xpose.msra.mxu0 0.0
        %2816 = vmatpush.xpose.msra.mxu0 0.0
        %2817 = vmatpush.xpose.msra.mxu0 0.0
        %2818 = vmatpush.xpose.msra.mxu0 0.0
        %2819 = vmatpush.xpose.msra.mxu0 0.0
        %2820 = vmatpush.xpose.msra.mxu0 0.0
        %2821 = vmatpush.xpose.msra.mxu0 0.0
        %2822 = vmatpush.xpose.msra.mxu0 0.0
        %2823 = vmatpush.xpose.msra.mxu0 %v2807
        %2824 = vmatpush.xpose.msra.mxu0 %v2805
        %2825 = vmatmul.f32.gmra.mxu0 %v2803
        %v2826 = vpop.f32.mrf.mxu0
        %v2827 = vadd.f32 0.0, %v2826
        %2828 = vdwg.mxu0
        %v2829 = vsel %vm1525, %v2827, -inf
        %2830 = vmax.xlane.f32.xlu0 %v2829
        %v2831 = vpop.xlane.xlu0 %2830
        %v2832 = vsub.f32 %v2827, %v2831
        %v2833 = vmul.f32 %v2832, 1.442695
        %v2834 = vpow.pop %v2833
        %v2835 = vsel %vm1525, %v2834, 0.0
        %2836 = vadd.xlane.f32.xlu0 %v2835
        %v2837 = vpop.xlane.xlu0 %2836
        %v2838 = vrcp.pop %v2837
        %v2839 = vmul.f32 %v2834, %v2838
        %2840 = vrot.lane.b32.xlu0 %v2498, 72
        %v2841 = vpop.permute.xlu0 %2840
        %2842 = vrot.lane.b32.xlu0 %v2501, 72
        %v2843 = vpop.permute.xlu0 %2842
        %v2846 = vsel %vm1525, %v2839, 0
        %v2848 = vsel %vm1545, %v2843, 0
        %2850 = vmatpush.msra.mxu0 0.0
        %2851 = vmatpush.msra.mxu0 0.0
        %2852 = vmatpush.msra.mxu0 0.0
        %2853 = vmatpush.msra.mxu0 0.0
        %2854 = vmatpush.msra.mxu0 0.0
        %2855 = vmatpush.msra.mxu0 0.0
        %2856 = vmatpush.msra.mxu0 0.0
        %2857 = vmatpush.msra.mxu0 0.0
        %2858 = vmatpush.msra.mxu0 0.0
        %2859 = vmatpush.msra.mxu0 0.0
        %2860 = vmatpush.msra.mxu0 0.0
        %2861 = vmatpush.msra.mxu0 0.0
        %2862 = vmatpush.msra.mxu0 0.0
        %2863 = vmatpush.msra.mxu0 0.0
        %2864 = vmatpush.msra.mxu0 %v2848
        %2865 = vmatpush.msra.mxu0 %v2841
        %2866 = vmatmul.f32.gmra.mxu0 %v2846
        %v2867 = vpop.f32.mrf.mxu0
        %v2868 = vadd.f32 0.0, %v2867
        %2869 = vdwg.mxu0
        %v2871 = vsel %vm1028, %v2868, 0
        %2873 = vmatpush.msra.mxu0 0.0
        %2874 = vmatpush.msra.mxu0 0.0
        %2875 = vmatpush.msra.mxu0 0.0
        %2876 = vmatpush.msra.mxu0 0.0
        %2877 = vmatpush.msra.mxu0 0.0
        %2878 = vmatpush.msra.mxu0 0.0
        %2879 = vmatpush.msra.mxu0 0.0
        %2880 = vmatpush.msra.mxu0 0.0
        %2881 = vmatpush.msra.mxu0 0.0
        %2882 = vmatpush.msra.mxu0 0.0
        %2883 = vmatpush.msra.mxu0 0.0
        %2884 = vmatpush.msra.mxu0 0.0
        %2885 = vmatpush.msra.mxu0 0.0
        %2886 = vmatpush.msra.mxu0 0.0
        %2887 = vmatpush.msra.mxu0 0.0
        %2888 = vmatpush.msra.mxu0 %v2507
        %2889 = vmatmul.f32.gmra.mxu0 %v2871
        %v2890 = vpop.f32.mrf.mxu0
        %v2891 = vadd.f32 0.0, %v2890
        %2892 = vdwg.mxu0
        %v2893 = vadd.f32 %v2796, %v2891
        %v2895 = vperm.slane %v2509, 0
        %v2897 = vadd.f32 %v2893, %v2895
        %v2898 = vadd.f32 %v2436, %v2897
        %v2899 = vsel %vm995, %v2898, 0.0
        %2900 = vadd.xlane.f32.xlu0 %v2899
        %v2901 = vpop.xlane.xlu0 %2900
        %v2902 = vmul.f32 %v2901, %v1394
        %v2903 = vsub.f32 %v2898, %v2902
        %v2904 = vmul.f32 %v2903, %v2903
        %v2905 = vsel %vm995, %v2904, 0.0
        %2906 = vadd.xlane.f32.xlu0 %v2905
        %v2907 = vpop.xlane.xlu0 %2906
        %v2908 = vmul.f32 %v2907, %v1394
        %v2909 = vadd.f32 %v2908, 1e-05
        %v2910 = vrsqrt.pop %v2909
        %v2911 = vmul.f32 %v2910, %v2909
        %v2912 = vmul.f32 %v2911, %v2910
        %v2913 = vmul.f32 0.5, %v2912
        %v2914 = vsub.f32 1.5, %v2913
        %v2915 = vmul.f32 %v2910, %v2914
        %vm2916 = vweird.f32 %v2909
        %vm2917 = vweird.f32 %v2910
        %vm2918 = vmor %vm2916, %vm2917
        %v2919 = vsel %vm2918, %v2910, %v2915
        %v2920 = vmul.f32 %v2903, %v2919
        %v2921 = vmul.f32 %v2920, %v2430
        %v2922 = vadd.f32 %v2921, %v2434
        %s2923 = scalar_lea.vmem %s20, 32
        %v2924 = vld [vmem:[%s2923] sm:$0xff]
        %v2925 = vld [vmem:[%s2923 + $0x8] sm:$0xff]
        %v2926 = vld [vmem:[%s2923 + $0x10] sm:$0xff]
        %v2927 = vld [vmem:[%s2923 + $0x18] sm:$0xff]
        %s2928 = scalar_lea.vmem [#allocation19], 1
        %v2929 = vld [vmem:[%s2928] sm:$0x1]
        %v2931 = vperm.slane %v2929, 0
        %v2934 = vsel %vm995, %v2922, 0
        %2936 = vmatpush.msra.mxu0 0.0
        %2937 = vmatpush.msra.mxu0 0.0
        %2938 = vmatpush.msra.mxu0 0.0
        %2939 = vmatpush.msra.mxu0 0.0
        %2940 = vmatpush.msra.mxu0 0.0
        %2941 = vmatpush.msra.mxu0 0.0
        %2942 = vmatpush.msra.mxu0 0.0
        %2943 = vmatpush.msra.mxu0 0.0
        %2944 = vmatpush.msra.mxu0 0.0
        %2945 = vmatpush.msra.mxu0 0.0
        %2946 = vmatpush.msra.mxu0 0.0
        %2947 = vmatpush.msra.mxu0 0.0
        %2948 = vmatpush.msra.mxu0 %v2927
        %2949 = vmatpush.msra.mxu0 %v2926
        %2950 = vmatpush.msra.mxu0 %v2925
        %2951 = vmatpush.msra.mxu0 %v2924
        %2952 = vmatmul.f32.gmra.mxu0 %v2934
        %v2953 = vpop.f32.mrf.mxu0
        %v2954 = vadd.f32 %v2931, %v2953
        %2955 = vdwg.mxu0
        %v2956 = vmax.f32 %v2954, 0.0
        %s2957 = scalar_lea.vmem %s22, 64
        %v2958 = vld [vmem:[%s2957] sm:$0xff]
        %v2959 = vld [vmem:[%s2957 + $0x8] sm:$0xff]
        %v2960 = vld [vmem:[%s2957 + $0x10] sm:$0xff]
        %v2961 = vld [vmem:[%s2957 + $0x18] sm:$0xff]
        %v2962 = vld [vmem:[%s2957 + $0x20] sm:$0xff]
        %v2963 = vld [vmem:[%s2957 + $0x28] sm:$0xff]
        %v2964 = vld [vmem:[%s2957 + $0x30] sm:$0xff]
        %v2965 = vld [vmem:[%s2957 + $0x38] sm:$0xff]
        %s2966 = scalar_lea.vmem [#allocation20], 1
        %v2967 = vld [vmem:[%s2966] sm:$0x1]
        %v2969 = vperm.slane %v2967, 0
        %v2972 = vsel %vm1954, %v2956, 0
        %2974 = vmatpush.msra.mxu0 0.0
        %2975 = vmatpush.msra.mxu0 0.0
        %2976 = vmatpush.msra.mxu0 0.0
        %2977 = vmatpush.msra.mxu0 0.0
        %2978 = vmatpush.msra.mxu0 0.0
        %2979 = vmatpush.msra.mxu0 0.0
        %2980 = vmatpush.msra.mxu0 0.0
        %2981 = vmatpush.msra.mxu0 0.0
        %2982 = vmatpush.msra.mxu0 %v2965
        %2983 = vmatpush.msra.mxu0 %v2964
        %2984 = vmatpush.msra.mxu0 %v2963
        %2985 = vmatpush.msra.mxu0 %v2962
        %2986 = vmatpush.msra.mxu0 %v2961
        %2987 = vmatpush.msra.mxu0 %v2960
        %2988 = vmatpush.msra.mxu0 %v2959
        %2989 = vmatpush.msra.mxu0 %v2958
        %2990 = vmatmul.f32.gmra.mxu0 %v2972
        %v2991 = vpop.f32.mrf.mxu0
        %v2992 = vadd.f32 %v2969, %v2991
        %2993 = vdwg.mxu0
        %v2994 = vadd.f32 %v2922, %v2992
        %v2995 = vsel %vm995, %v2994, 0.0
        %2996 = vadd.xlane.f32.xlu0 %v2995
        %v2997 = vpop.xlane.xlu0 %2996
        %v2998 = vmul.f32 %v2997, %v1394
        %v2999 = vsub.f32 %v2994, %v2998
        %v3000 = vmul.f32 %v2999, %v2999
        %v3001 = vsel %vm995, %v3000, 0.0
        %3002 = vadd.xlane.f32.xlu0 %v3001
        %v3003 = vpop.xlane.xlu0 %3002
        %v3004 = vmul.f32 %v3003, %v1394
        %v3005 = vadd.f32 %v3004, 1e-05
        %v3006 = vrsqrt.pop %v3005
        %v3007 = vmul.f32 %v3006, %v3005
        %v3008 = vmul.f32 %v3007, %v3006
        %v3009 = vmul.f32 0.5, %v3008
        %v3010 = vsub.f32 1.5, %v3009
        %v3011 = vmul.f32 %v3006, %v3010
        %vm3012 = vweird.f32 %v3005
        %vm3013 = vweird.f32 %v3006
        %vm3014 = vmor %vm3012, %vm3013
        %v3015 = vsel %vm3014, %v3006, %v3011
        %v3016 = vmul.f32 %v2999, %v3015
        %v3017 = vmul.f32 %v3016, %v2430
        %v3018 = vadd.f32 %v3017, %v2434
        %v3019 = vmul.f32 %v3018, %v3018
        %v3020 = vsel %vm995, %v3019, 0.0
        %3021 = vadd.xlane.f32.xlu0 %v3020
        %v3022 = vpop.xlane.xlu0 %3021
        %v3023 = vrsqrt.pop %v3022
        %v3024 = vmul.f32 %v3023, %v3022
        %v3025 = vmul.f32 %v3024, %v3023
        %v3026 = vmul.f32 0.5, %v3025
        %v3027 = vsub.f32 1.5, %v3026
        %v3028 = vmul.f32 %v3023, %v3027
        %v3029 = vmul.f32 %v3022, %v3028
        %vm3030 = vcmp.eq.f32.partialorder %v3022, inf
        %v3031 = vsel %vm3030, %v3022, %v3029
        %vm3032 = vcmp.eq.f32.partialorder %v3022, 0.0
        %v3033 = vand.u32 %v3022, 2147483648
        %v3034 = vsel %vm3032, %v3033, %v3031
        %v3035 = vrot.slane %v3034, 4
        %v3036 = vmax.f32 %v3034, %v3035
        %v3037 = vrot.slane %v3036, 2
        %v3038 = vmax.f32 %v3036, %v3037
        %v3039 = vrot.slane %v3038, 1
        %v3040 = vmax.f32 %v3038, %v3039
        %v3041 = vsub.f32 %v3034, %v3040
        %v3042 = vmul.f32 %v3041, 1.442695
        %v3043 = vpow.pop %v3042
        %v3044 = vrot.slane %v3043, 4
        %v3045 = vadd.f32 %v3043, %v3044
        %v3046 = vrot.slane %v3045, 2
        %v3047 = vadd.f32 %v3045, %v3046
        %v3048 = vrot.slane %v3047, 1
        %v3049 = vadd.f32 %v3047, %v3048
        %v3050 = vrcp.pop %v3049
        %v3051 = vmul.f32 %v3043, %v3050
        %v3052 = vmul.f32 %v3018, %v3051
        %v3053 = vsel %vm995, %v3052, 0.0
        %v3054 = vrot.slane %v3053, 4
        %v3055 = vadd.f32 %v3053, %v3054
        %v3056 = vrot.slane %v3055, 2
        %v3057 = vadd.f32 %v3055, %v3056
        %v3058 = vrot.slane %v3057, 1
        %v3059 = vadd.f32 %v3057, %v3058
        %v3060 = vld [vmem:[%s4] sm:$0xff]
        %v3061 = vld [vmem:[%s4 + $0x8] sm:$0xff]
        %v3062 = vld [vmem:[%s4 + $0x10] sm:$0xff]
        %v3063 = vld [vmem:[%s4 + $0x18] sm:$0xff]
        %v3064 = vld [vmem:[%s4 + $0x20] sm:$0xff]
        %v3065 = vld [vmem:[%s4 + $0x28] sm:$0xff]
        %v3066 = vld [vmem:[%s4 + $0x30] sm:$0xff]
        %v3067 = vld [vmem:[%s4 + $0x38] sm:$0xff]
        %v3068 = vld [vmem:[%s5] sm:$0x3]
        %v3070 = vperm.slane %v3068, 0
        %v3071 = vperm.slane %v3068, 1
        %v3075 = vsel %vm995, %v3059, 0
        %3077 = vmatpush.msra.mxu0 0.0
        %3078 = vmatpush.msra.mxu0 0.0
        %3079 = vmatpush.msra.mxu0 0.0
        %3080 = vmatpush.msra.mxu0 0.0
        %3081 = vmatpush.msra.mxu0 0.0
        %3082 = vmatpush.msra.mxu0 0.0
        %3083 = vmatpush.msra.mxu0 0.0
        %3084 = vmatpush.msra.mxu0 0.0
        %3085 = vmatpush.msra.mxu0 0.0
        %3086 = vmatpush.msra.mxu0 0.0
        %3087 = vmatpush.msra.mxu0 0.0
        %3088 = vmatpush.msra.mxu0 0.0
        %3089 = vmatpush.msra.mxu0 %v3066
        %3090 = vmatpush.msra.mxu0 %v3064
        %3091 = vmatpush.msra.mxu0 %v3062
        %3092 = vmatpush.msra.mxu0 %v3060
        %3093 = vmatmul.f32.gmra.mxu0 %v3075
        %v3094 = vpop.f32.mrf.mxu0
        %v3095 = vadd.f32 %v3070, %v3094
        %3096 = vdwg.mxu0
        %3097 = vmatpush.msra.mxu0 0.0
        %3098 = vmatpush.msra.mxu0 0.0
        %3099 = vmatpush.msra.mxu0 0.0
        %3100 = vmatpush.msra.mxu0 0.0
        %3101 = vmatpush.msra.mxu0 0.0
        %3102 = vmatpush.msra.mxu0 0.0
        %3103 = vmatpush.msra.mxu0 0.0
        %3104 = vmatpush.msra.mxu0 0.0
        %3105 = vmatpush.msra.mxu0 0.0
        %3106 = vmatpush.msra.mxu0 0.0
        %3107 = vmatpush.msra.mxu0 0.0
        %3108 = vmatpush.msra.mxu0 0.0
        %3109 = vmatpush.msra.mxu0 %v3067
        %3110 = vmatpush.msra.mxu0 %v3065
        %3111 = vmatpush.msra.mxu0 %v3063
        %3112 = vmatpush.msra.mxu0 %v3061
        %3113 = vmatmul.f32.gmra.mxu0 %v3075
        %v3114 = vpop.f32.mrf.mxu0
        %v3115 = vadd.f32 %v3071, %v3114
        %3116 = vdwg.mxu0
        %v3117 = vmax.f32 %v3095, 0.0
        %v3118 = vmax.f32 %v3115, 0.0
        %v3119 = vld [vmem:[%s6] sm:$0xff]
        %v3120 = vld [vmem:[%s6 + $0x8] sm:$0xff]
        %v3121 = vld [vmem:[%s6 + $0x10] sm:$0xff]
        %v3122 = vld [vmem:[%s6 + $0x18] sm:$0xff]
        %v3123 = vld [vmem:[%s6 + $0x20] sm:$0xff]
        %v3124 = vld [vmem:[%s6 + $0x28] sm:$0xff]
        %v3125 = vld [vmem:[%s6 + $0x30] sm:$0xff]
        %v3126 = vld [vmem:[%s6 + $0x38] sm:$0xff]
        %v3127 = vld [vmem:[%s6 + $0x40] sm:$0xff]
        %v3128 = vld [vmem:[%s6 + $0x48] sm:$0xff]
        %v3129 = vld [vmem:[%s6 + $0x50] sm:$0xff]
        %v3130 = vld [vmem:[%s6 + $0x58] sm:$0xff]
        %v3131 = vld [vmem:[%s6 + $0x60] sm:$0xff]
        %v3132 = vld [vmem:[%s6 + $0x68] sm:$0xff]
        %v3133 = vld [vmem:[%s6 + $0x70] sm:$0xff]
        %v3134 = vld [vmem:[%s6 + $0x78] sm:$0xff]
        %v3135 = vld [vmem:[%s6 + $0x80] sm:$0xff]
        %v3136 = vld [vmem:[%s6 + $0x88] sm:$0xff]
        %v3137 = vld [vmem:[%s6 + $0x90] sm:$0xff]
        %v3138 = vld [vmem:[%s6 + $0x98] sm:$0xff]
        %v3139 = vld [vmem:[%s6 + $0xa0] sm:$0xff]
        %v3140 = vld [vmem:[%s6 + $0xa8] sm:$0xff]
        %v3141 = vld [vmem:[%s6 + $0xb0] sm:$0xff]
        %v3142 = vld [vmem:[%s6 + $0xb8] sm:$0xff]
        %v3143 = vld [vmem:[%s6 + $0xc0] sm:$0xff]
        %v3144 = vld [vmem:[%s6 + $0xc8] sm:$0xff]
        %v3145 = vld [vmem:[%s6 + $0xd0] sm:$0xff]
        %v3146 = vld [vmem:[%s6 + $0xd8] sm:$0xff]
        %v3147 = vld [vmem:[%s6 + $0xe0] sm:$0xff]
        %v3148 = vld [vmem:[%s6 + $0xe8] sm:$0xff]
        %v3149 = vld [vmem:[%s6 + $0xf0] sm:$0xff]
        %v3150 = vld [vmem:[%s6 + $0xf8] sm:$0xff]
        %v3151 = vld [vmem:[#allocation8] sm:$0x1]
        %3152 = vmatpush.msra.mxu0 %v3134
        %3153 = vmatpush.msra.mxu0 %v3133
        %3154 = vmatpush.msra.mxu0 %v3132
        %3155 = vmatpush.msra.mxu0 %v3131
        %3156 = vmatpush.msra.mxu0 %v3130
        %3157 = vmatpush.msra.mxu0 %v3129
        %3158 = vmatpush.msra.mxu0 %v3128
        %3159 = vmatpush.msra.mxu0 %v3127
        %3160 = vmatpush.msra.mxu0 %v3126
        %3161 = vmatpush.msra.mxu0 %v3125
        %3162 = vmatpush.msra.mxu0 %v3124
        %3163 = vmatpush.msra.mxu0 %v3123
        %3164 = vmatpush.msra.mxu0 %v3122
        %3165 = vmatpush.msra.mxu0 %v3121
        %3166 = vmatpush.msra.mxu0 %v3120
        %3167 = vmatpush.msra.mxu0 %v3119
        %3168 = vmatmul.f32.gmra.mxu0 %v3117
        %v3169 = vpop.f32.mrf.mxu0
        %v3170 = vadd.f32 %v3151, %v3169
        %3171 = vdwg.mxu0
        %3172 = vmatpush.msra.mxu0 %v3150
        %3173 = vmatpush.msra.mxu0 %v3149
        %3174 = vmatpush.msra.mxu0 %v3148
        %3175 = vmatpush.msra.mxu0 %v3147
        %3176 = vmatpush.msra.mxu0 %v3146
        %3177 = vmatpush.msra.mxu0 %v3145
        %3178 = vmatpush.msra.mxu0 %v3144
        %3179 = vmatpush.msra.mxu0 %v3143
        %3180 = vmatpush.msra.mxu0 %v3142
        %3181 = vmatpush.msra.mxu0 %v3141
        %3182 = vmatpush.msra.mxu0 %v3140
        %3183 = vmatpush.msra.mxu0 %v3139
        %3184 = vmatpush.msra.mxu0 %v3138
        %3185 = vmatpush.msra.mxu0 %v3137
        %3186 = vmatpush.msra.mxu0 %v3136
        %3187 = vmatpush.msra.mxu0 %v3135
        %3188 = vmatmul.f32.gmra.mxu0 %v3118
        %v3189 = vpop.f32.mrf.mxu0
        %v3190 = vadd.f32 %v3170, %v3189
        %3191 = vdwg.mxu0
        %vm3192 = vcmask 8192
        %3193 = vst.msk [vmem:[%s946] sm:$0x1] %vm3192, %v3190
        %s3194 = sand.u32 %s569, 1
        %s3195 = scalar_lea.sflag [#allocation4], %s3194
        %s3196 = sand.u32 %s569, 1
        %s3197 = scalar_lea.vmem [#allocation22], %s3196
        // Predicated region
        $region165: #{decoder_forward.1} parent=115 // pred_check
          %p3198 = pneg %p579
        $region166: #{decoder_forward.1} parent=115 // pred_check_branch
          %3200 = sbr.rel (%p3198) target = $region168
        $region167: #{decoder_forward.1} parent=115 // pred_region
          %3202 = vsyncadd %s3195, 0
          %s3203 = scalar_lea.hbm %s24, %s47
          %s3205 = sshll.u32 %s3197, 4
          %s3206 = int_to_ptr.vmem [resolvable:$true] %s3205
          %s3207 = sshll.u32 %s3203, 4
          %s3208 = int_to_ptr.hbm [resolvable:$true] %s3207
          %3210 = dma.vmem_to_hbm [thread:$0]  %s3206, 16, %s3208, %s3195
        $region168: #{decoder_forward.1} parent=115 // pred_fallthru
          _
      $region116: #{decoder_forward.1} parent=5 // pred_fallthru
        _
      %p3211 = scmp.le.s32.totalorder 2, %s42
      // Predicated region
      $region169: #{decoder_forward.1} parent=5 // pred_check
        %p3212 = pneg %p3211
      $region170: #{decoder_forward.1} parent=5 // pred_check_branch
        %3214 = sbr.rel (%p3212) target = $region172
      $region171: #{decoder_forward.1} parent=5 // pred_region
        %s3215 = ssub.s32 %s42, 2
        // Predicated region
        $region173: #{decoder_forward.1} parent=171 // pred_check
          %p3216 = pneg %p585
        $region174: #{decoder_forward.1} parent=171 // pred_check_branch
          %3218 = sbr.rel (%p3216) target = $region176
        $region175: #{decoder_forward.1} parent=171 // pred_region
          %s3219 = sand.u32 %s570, 1
          %s3220 = scalar_lea.sflag [#allocation4], %s3219
          %s3221 = sand.u32 %s570, 1
          %s3222 = scalar_lea.vmem [#allocation22], %s3221
          %3224 = dma.done %s3220, 16
        $region176: #{decoder_forward.1} parent=171 // pred_fallthru
          _
      $region172: #{decoder_forward.1} parent=5 // pred_fallthru
        _
    $region6: #{decoder_forward.1} parent=1 // loop_footer
      %s46 = sadd.s32 1, %s42
    $region7: #{decoder_forward.1} parent=1 // loop_footer_branch
      %41 = sbr.rel target = $region3
    $region8: #{decoder_forward.1} parent=1 // loop_exit
      _
    %3225 = vsyncpa [#allocation3], 1
    %s3226 = scalar_lea.sflag [#allocation3], 1
    %3227 = vsyncpa %s3226, 1
    %3228 = vsyncpa [#allocation6], 1
    %3229 = vsyncpa [#allocation9], 1
    %3230 = vsyncpa [#allocation12], 1
    %3231 = vsyncpa [#allocation15], 1
    %3232 = vsyncpa [#allocation18], 1
    %3233 = vsyncpa [#allocation21], 1
    %3234 = vsyncpa [#allocation4], 1
    %s3235 = scalar_lea.sflag [#allocation4], 1
    %3236 = vsyncpa %s3235, 1

</llo_original>
